<compile_context>
chip_gen: v5e
topology: v5e:2x2
jax: 0.10.0
libtpu: 0.0.40
codegen_flags: <defaults>
</compile_context>

<pallas_src>
import functools

import jax
import jax.numpy as jnp
from jax.experimental import pallas as pl
from jax.experimental.pallas import tpu as pltpu

LANE = 128       # TPU lane width; feature / hidden / edge dims padded to multiples of this
NODE_PAD = 256   # node count padded to a multiple of this (keeps every tile choice legal)


def _round_up(x, m):
    return (x + m - 1) // m * m


def _pad2(a, rows, cols):
    return jnp.pad(a, ((0, rows - a.shape[0]), (0, cols - a.shape[1])))


def _pick_tile(dim, candidates):
    for t in candidates:
        if dim % t == 0:
            return t
    return dim   # fallback: a single block (dim is always (8,128)-aligned here)


# ---------------------------------------------------------------------------
# Pallas kernels
# ---------------------------------------------------------------------------
def neigh_proj_kernel(x_ref, w_ref, out_ref):
    """Pneigh = X @ Wneigh (bf16 out, streamed into the dominant N^2 matmul)."""
    out_ref[...] = jnp.dot(
        x_ref[...].astype(jnp.float32), w_ref[...],
        preferred_element_type=jnp.float32).astype(out_ref.dtype)


def aggregate_kernel(a_ref, pneigh_ref, x_ref, wself_ref, b_ref, invdeg_ref,
                     out_ref, acc_ref, *, apply_relu):
    """out = X @ Wself + b + inv_deg * (A01 @ Pneigh); K-reduction over grid axis 2.

    A is stored as 0/1 int8 (half the HBM bytes of bf16 A_norm) and cast to bf16 in
    VMEM for the MXU; the exact f32 per-row 1/deg scale is applied in the epilogue.
    The small-K self matmul is fused here so Pself never round-trips HBM.
    """
    k = pl.program_id(2)

    @pl.when(k == 0)
    def _():
        acc_ref[...] = jnp.zeros_like(acc_ref)

    acc_ref[...] += jnp.dot(a_ref[...].astype(jnp.bfloat16), pneigh_ref[...],
                            preferred_element_type=jnp.float32)

    @pl.when(k == pl.num_programs(2) - 1)
    def _():
        self_term = jnp.dot(x_ref[...].astype(jnp.float32), wself_ref[...],
                            preferred_element_type=jnp.float32) + b_ref[...]
        out = self_term + invdeg_ref[...] * acc_ref[...]
        if apply_relu:
            out = jnp.maximum(out, 0.0)
        out_ref[...] = out.astype(out_ref.dtype)


def edge_score_kernel(hsrc_ref, hdst_ref, out_ref):
    """DotPredictor: score[e] = sum_d hsrc[d, e] * hdst[d, e] (edges on the lane axis)."""
    out_ref[...] = jnp.sum(hsrc_ref[...] * hdst_ref[...], axis=0, keepdims=True)


# ---------------------------------------------------------------------------
# Wrappers
# ---------------------------------------------------------------------------
def sage_layer(adj_i8, inv_deg, x, w_self, w_neigh, bias, *, apply_relu, out_dtype):
    """One SAGEConv('mean') layer on padded operands.
    adj_i8:  [N_pad, N_pad] int8 0/1 adjacency (row = dst, col = src).
    inv_deg: [N_pad, 1] f32 per-row 1/in_deg.
    x:       [N_pad, F_pad] (f32 or bf16).  Returns [N_pad, H_pad] in `out_dtype`."""
    n_pad, f_pad = x.shape
    h_pad = w_self.shape[1]

    # --- neighbor projection (reassociation: A @ (X @ Wneigh) keeps N^2 matmul lane-dense)
    tm_p = _pick_tile(n_pad, (512, 256))
    pneigh = pl.pallas_call(
        neigh_proj_kernel,
        grid=(n_pad // tm_p,),
        in_specs=[
            pl.BlockSpec((tm_p, f_pad), lambda i: (i, 0)),
            pl.BlockSpec((f_pad, h_pad), lambda i: (0, 0)),
        ],
        out_specs=pl.BlockSpec((tm_p, h_pad), lambda i: (i, 0)),
        out_shape=jax.ShapeDtypeStruct((n_pad, h_pad), jnp.bfloat16),
        compiler_params=pltpu.CompilerParams(dimension_semantics=("parallel",)),
    )(x, w_neigh)

    # --- aggregation: the dominant N^2 matmul, tiled + pipelined, fused epilogue ---
    tm = _pick_tile(n_pad, (1024, 512, 256))
    tn = h_pad if h_pad <= 512 else _pick_tile(h_pad, (512, 256, 128))
    tk = _pick_tile(n_pad, (4096, 2048, 1024, 512, 256))
    grid = (n_pad // tm, h_pad // tn, n_pad // tk)

    return pl.pallas_call(
        functools.partial(aggregate_kernel, apply_relu=apply_relu),
        grid=grid,
        in_specs=[
            pl.BlockSpec((tm, tk), lambda i, j, k: (i, k)),     # A (int8 0/1)
            pl.BlockSpec((tk, tn), lambda i, j, k: (k, j)),     # X @ Wneigh (bf16)
            pl.BlockSpec((tm, f_pad), lambda i, j, k: (i, 0)),  # X rows (self term)
            pl.BlockSpec((f_pad, tn), lambda i, j, k: (0, j)),  # Wself (resident)
            pl.BlockSpec((1, tn), lambda i, j, k: (0, j)),      # bias
            pl.BlockSpec((tm, 1), lambda i, j, k: (i, 0)),      # inv_deg
        ],
        out_specs=pl.BlockSpec((tm, tn), lambda i, j, k: (i, j)),
        out_shape=jax.ShapeDtypeStruct((n_pad, h_pad), out_dtype),
        scratch_shapes=[pltpu.VMEM((tm, tn), jnp.float32)],
        compiler_params=pltpu.CompilerParams(
            dimension_semantics=("parallel", "parallel", "arbitrary"),
            vmem_limit_bytes=48 * 1024 * 1024),
    )(adj_i8, pneigh, x, w_self, bias.reshape(1, -1), inv_deg)


def dot_predictor(h_nodes, src, dst):
    """score[e] = <h[src_e], h[dst_e]>, edges padded to a multiple of 128 lanes."""
    e = src.shape[0]
    h_dim = h_nodes.shape[1]
    e_pad = _round_up(max(e, 1), LANE)
    te = _pick_tile(e_pad, (2048, 1024, 512, 256, 128))

    # TODO(synk): for very large E, gather the h rows in-kernel via
    # PrefetchScalarGridSpec(num_scalar_prefetch=2) + manual DMA gather instead of
    # materializing the gathered/transposed operands here.
    src_p = jnp.pad(src, (0, e_pad - e))
    dst_p = jnp.pad(dst, (0, e_pad - e))
    hs_t = h_nodes[src_p].T   # [H_pad, E_pad] -- edges on the lane axis
    hd_t = h_nodes[dst_p].T

    scores = pl.pallas_call(
        edge_score_kernel,
        grid=(e_pad // te,),
        in_specs=[
            pl.BlockSpec((h_dim, te), lambda i: (0, i)),
            pl.BlockSpec((h_dim, te), lambda i: (0, i)),
        ],
        out_specs=pl.BlockSpec((1, te), lambda i: (0, i)),
        out_shape=jax.ShapeDtypeStruct((1, e_pad), jnp.float32),
        compiler_params=pltpu.CompilerParams(dimension_semantics=("parallel",)),
    )(hs_t, hd_t)
    return scores[0, :e]


def link_prediction_model(adj_i8, inv_deg, features, params, src, dst):
    n_pad = adj_i8.shape[0]
    _, f = features.shape
    h = params["w_self1"].shape[1]
    f_pad = _round_up(f, LANE)
    h_pad = _round_up(h, LANE)

    # Zero-pad to lane/tile-aligned shapes; padded rows get bias/ReLU but never leak
    # into real outputs (padded adjacency columns are zero, edges index real nodes only).
    x = _pad2(features, n_pad, f_pad)
    w_self1 = _pad2(params["w_self1"], f_pad, h_pad)
    w_neigh1 = _pad2(params["w_neigh1"], f_pad, h_pad)
    b1 = jnp.pad(params["b1"], (0, h_pad - h))
    w_self2 = _pad2(params["w_self2"], h_pad, h_pad)
    w_neigh2 = _pad2(params["w_neigh2"], h_pad, h_pad)
    b2 = jnp.pad(params["b2"], (0, h_pad - h))

    h1 = sage_layer(adj_i8, inv_deg, x, w_self1, w_neigh1, b1,
                    apply_relu=True, out_dtype=jnp.bfloat16)
    h2 = sage_layer(adj_i8, inv_deg, h1, w_self2, w_neigh2, b2,
                    apply_relu=False, out_dtype=jnp.float32)
    return dot_predictor(h2, src, dst)


# ---------------------------------------------------------------------------
# Pure-JAX reference (for tolerance check)
# ---------------------------------------------------------------------------
def link_prediction_reference(a_norm, features, params, src, dst):
    h1 = jnp.maximum(
        features @ params["w_self1"]
        + (a_norm @ features) @ params["w_neigh1"] + params["b1"], 0.0)
    h2 = (h1 @ params["w_self2"]
          + (a_norm @ h1) @ params["w_neigh2"] + params["b2"])
    return jnp.sum(h2[src] * h2[dst], axis=1)


# ---------------------------------------------------------------------------
# Deterministic setup + run
# ---------------------------------------------------------------------------
def make_params(key, in_feats, h_feats):
    ks = jax.random.split(key, 6)
    scale1 = 1.0 / jnp.sqrt(in_feats)
    scale2 = 1.0 / jnp.sqrt(h_feats)
    return {
        "w_self1": jax.random.normal(ks[0], (in_feats, h_feats), jnp.float32) * scale1,
        "w_neigh1": jax.random.normal(ks[1], (in_feats, h_feats), jnp.float32) * scale1,
        "b1": jax.random.normal(ks[2], (h_feats,), jnp.float32) * 0.1,
        "w_self2": jax.random.normal(ks[3], (h_feats, h_feats), jnp.float32) * scale2,
        "w_neigh2": jax.random.normal(ks[4], (h_feats, h_feats), jnp.float32) * scale2,
        "b2": jax.random.normal(ks[5], (h_feats,), jnp.float32) * 0.1,
    }


def make_edges(num_nodes, num_edges, key):
    # Deterministic synthetic directed graph: ring + random extra edges.
    ring_src = jnp.arange(num_nodes, dtype=jnp.int32)
    ring_dst = (ring_src + 1) % num_nodes
    k1, k2 = jax.random.split(key)
    extra = num_edges - num_nodes
    ex_src = jax.random.randint(k1, (extra,), 0, num_nodes, dtype=jnp.int32)
    ex_dst = jax.random.randint(k2, (extra,), 0, num_nodes, dtype=jnp.int32)
    return (jnp.concatenate([ring_src, ex_src]),
            jnp.concatenate([ring_dst, ex_dst]))


def build_graph_arrays(src, dst, n_pad):
    # 0/1 int8 adjacency (never materializes an f32 N^2 matrix) + exact f32 1/deg.
    # Note: .at[dst, src].set(1) dedups parallel edges (differs from DGL multigraphs).
    adj = jnp.zeros((n_pad, n_pad), jnp.int8).at[dst, src].set(jnp.int8(1))
    deg = jnp.sum(adj, axis=1, dtype=jnp.int32)
    inv_deg = (1.0 / jnp.maximum(deg, 1).astype(jnp.float32)).reshape(-1, 1)
    return adj, inv_deg


if __name__ == "__main__":
    N = 16          # nodes
    E = 32          # edges
    IN_FEATS = 8
    H_FEATS = 32

    key = jax.random.PRNGKey(0)
    k_feat, k_param, k_graph = jax.random.split(key, 3)

    features = jax.random.normal(k_feat, (N, IN_FEATS), jnp.float32)
    params = make_params(k_param, IN_FEATS, H_FEATS)
    src, dst = make_edges(N, E, k_graph)

    n_pad = _round_up(N, NODE_PAD)
    adj, inv_deg = build_graph_arrays(src, dst, n_pad)

    scores = jax.jit(link_prediction_model)(adj, inv_deg, features, params, src, dst)
    jax.block_until_ready(scores)

    assert scores.shape == (E,)
    assert scores.dtype == jnp.float32

    a_norm = adj[:N, :N].astype(jnp.float32) * inv_deg[:N]
    ref = link_prediction_reference(a_norm, features, params, src, dst)
    rel_err = jnp.linalg.norm(scores - ref) / jnp.maximum(jnp.linalg.norm(ref), 1e-6)
    assert float(rel_err) < 0.1, f"relative error too large: {float(rel_err)}"

    print("KERNEL_OK")
</pallas_src>

<mosaic_0001>
module attributes {stable_mosaic.version = 11 : i64} {
  func.func @aggregate_kernel(%arg0: i32, %arg1: i32, %arg2: i32, %arg3: memref<256x256xi8, #tpu.memory_space<vmem>>, %arg4: memref<256x128xbf16, #tpu.memory_space<vmem>>, %arg5: memref<256x128xf32, #tpu.memory_space<vmem>>, %arg6: memref<128x128xf32, #tpu.memory_space<vmem>>, %arg7: memref<1x128xf32, #tpu.memory_space<vmem>>, %arg8: memref<256x1xf32, #tpu.memory_space<vmem>>, %arg9: memref<256x128xbf16, #tpu.memory_space<vmem>>, %arg10: memref<256x128xf32, #tpu.memory_space<vmem>>) attributes {dimension_semantics = [#tpu.dimension_semantics<parallel>, #tpu.dimension_semantics<parallel>, #tpu.dimension_semantics<arbitrary>], iteration_bounds = array<i64: 1, 1, 1>, scalar_prefetch = 0 : i64, scratch_operands = 1 : i64, tpu.core_type = #tpu.core_type<tc>, window_params = [{transform_indices = @transform_0, window_bounds = array<i64: 256, 256>}, {transform_indices = @transform_1, window_bounds = array<i64: 256, 128>}, {transform_indices = @transform_2, window_bounds = array<i64: 256, 128>}, {transform_indices = @transform_3, window_bounds = array<i64: 128, 128>}, {transform_indices = @transform_4, window_bounds = array<i64: 1, 128>}, {transform_indices = @transform_5, window_bounds = array<i64: 256, 1>}, {transform_indices = @transform_6, window_bounds = array<i64: 256, 128>}]} {
    %c0_i32 = arith.constant 0 : i32
    %0 = arith.cmpi eq, %arg2, %c0_i32 : i32
    %1 = arith.extui %0 : i1 to i32
    %c0_i32_0 = arith.constant 0 : i32
    %2 = arith.cmpi ne, %1, %c0_i32_0 : i32
    scf.if %2 {
      %cst_10 = arith.constant 0.000000e+00 : f32
      %13 = vector.broadcast %cst_10 : f32 to vector<256x128xf32>
      %c0_11 = arith.constant 0 : index
      %c0_12 = arith.constant 0 : index
      %14 = vector.load %arg10[%c0_11, %c0_12] : memref<256x128xf32, #tpu.memory_space<vmem>>, vector<256x128xf32>
      tpu.vector_store %arg10[%c0_11, %c0_12], %13 {strides = array<i32>} : memref<256x128xf32, #tpu.memory_space<vmem>>, vector<256x128xf32>,
    } else {
    }
    %c0 = arith.constant 0 : index
    %c0_1 = arith.constant 0 : index
    %3 = vector.load %arg10[%c0, %c0_1] : memref<256x128xf32, #tpu.memory_space<vmem>>, vector<256x128xf32>
    %c0_2 = arith.constant 0 : index
    %c0_3 = arith.constant 0 : index
    %4 = vector.load %arg3[%c0_2, %c0_3] : memref<256x256xi8, #tpu.memory_space<vmem>>, vector<256x256xi8>
    %5 = arith.sitofp %4 : vector<256x256xi8> to vector<256x256xbf16>
    %c0_4 = arith.constant 0 : index
    %c0_5 = arith.constant 0 : index
    %6 = vector.load %arg4[%c0_4, %c0_5] : memref<256x128xbf16, #tpu.memory_space<vmem>>, vector<256x128xbf16>
    %cst = arith.constant dense<0.000000e+00> : vector<256x128xf32>
    %7 = tpu.matmul %5, %6, %cst {dimension_numbers = #tpu.dot_dimension_numbers<[1], [0], [0], [1], [0, 0, 1, 1], [], []>} : vector<256x256xbf16>, vector<256x128xbf16>, vector<256x128xf32> -> vector<256x128xf32>
    %8 = arith.addf %3, %7 : vector<256x128xf32>
    %c0_6 = arith.constant 0 : index
    %c0_7 = arith.constant 0 : index
    %9 = vector.load %arg10[%c0_6, %c0_7] : memref<256x128xf32, #tpu.memory_space<vmem>>, vector<256x128xf32>
    tpu.vector_store %arg10[%c0_6, %c0_7], %8 {strides = array<i32>} : memref<256x128xf32, #tpu.memory_space<vmem>>, vector<256x128xf32>,
    %c0_i32_8 = arith.constant 0 : i32
    %10 = arith.cmpi eq, %arg2, %c0_i32_8 : i32
    %11 = arith.extui %10 : i1 to i32
    %c0_i32_9 = arith.constant 0 : i32
    %12 = arith.cmpi ne, %11, %c0_i32_9 : i32
    scf.if %12 {
      %c0_10 = arith.constant 0 : index
      %c0_11 = arith.constant 0 : index
      %13 = vector.load %arg5[%c0_10, %c0_11] : memref<256x128xf32, #tpu.memory_space<vmem>>, vector<256x128xf32>
      %c0_12 = arith.constant 0 : index
      %c0_13 = arith.constant 0 : index
      %14 = vector.load %arg6[%c0_12, %c0_13] : memref<128x128xf32, #tpu.memory_space<vmem>>, vector<128x128xf32>
      %cst_14 = arith.constant dense<0.000000e+00> : vector<256x128xf32>
      %15 = tpu.matmul %13, %14, %cst_14 {dimension_numbers = #tpu.dot_dimension_numbers<[1], [0], [0], [1], [0, 0, 1, 1], [], []>} : vector<256x128xf32>, vector<128x128xf32>, vector<256x128xf32> -> vector<256x128xf32>
      %c0_15 = arith.constant 0 : index
      %c0_16 = arith.constant 0 : index
      %16 = vector.load %arg7[%c0_15, %c0_16] : memref<1x128xf32, #tpu.memory_space<vmem>>, vector<1x128xf32>
      %17 = vector.broadcast %16 : vector<1x128xf32> to vector<256x128xf32>
      %18 = arith.addf %15, %17 : vector<256x128xf32>
      %c0_17 = arith.constant 0 : index
      %c0_18 = arith.constant 0 : index
      %19 = vector.load %arg8[%c0_17, %c0_18] : memref<256x1xf32, #tpu.memory_space<vmem>>, vector<256x1xf32>
      %c0_19 = arith.constant 0 : index
      %c0_20 = arith.constant 0 : index
      %20 = vector.load %arg10[%c0_19, %c0_20] : memref<256x128xf32, #tpu.memory_space<vmem>>, vector<256x128xf32>
      %21 = vector.broadcast %19 : vector<256x1xf32> to vector<256x128xf32>
      %22 = arith.mulf %21, %20 : vector<256x128xf32>
      %23 = arith.addf %18, %22 : vector<256x128xf32>
      %cst_21 = arith.constant 0.000000e+00 : f32
      %24 = vector.broadcast %cst_21 : f32 to vector<256x128xf32>
      %25 = arith.maximumf %23, %24 : vector<256x128xf32>
      %26 = arith.truncf %25 : vector<256x128xf32> to vector<256x128xbf16>
      %c0_22 = arith.constant 0 : index
      %c0_23 = arith.constant 0 : index
      %27 = vector.load %arg9[%c0_22, %c0_23] : memref<256x128xbf16, #tpu.memory_space<vmem>>, vector<256x128xbf16>
      tpu.vector_store %arg9[%c0_22, %c0_23], %26 {strides = array<i32>} : memref<256x128xbf16, #tpu.memory_space<vmem>>, vector<256x128xbf16>,
    } else {
    }
    return
  }
  func.func @transform_0(%arg0: i32, %arg1: i32, %arg2: i32) -> (i32, i32) {
    %c0_i32 = arith.constant 0 : i32
    return %arg0, %arg2 : i32, i32
  }
  func.func @transform_1(%arg0: i32, %arg1: i32, %arg2: i32) -> (i32, i32) {
    %c0_i32 = arith.constant 0 : i32
    return %arg2, %arg1 : i32, i32
  }
  func.func @transform_2(%arg0: i32, %arg1: i32, %arg2: i32) -> (i32, i32) {
    %c0_i32 = arith.constant 0 : i32
    %c0_i32_0 = arith.constant 0 : i32
    return %arg0, %c0_i32 : i32, i32
  }
  func.func @transform_3(%arg0: i32, %arg1: i32, %arg2: i32) -> (i32, i32) {
    %c0_i32 = arith.constant 0 : i32
    %c0_i32_0 = arith.constant 0 : i32
    return %c0_i32, %arg1 : i32, i32
  }
  func.func @transform_4(%arg0: i32, %arg1: i32, %arg2: i32) -> (i32, i32) {
    %c0_i32 = arith.constant 0 : i32
    %c0_i32_0 = arith.constant 0 : i32
    return %c0_i32, %arg1 : i32, i32
  }
  func.func @transform_5(%arg0: i32, %arg1: i32, %arg2: i32) -> (i32, i32) {
    %c0_i32 = arith.constant 0 : i32
    %c0_i32_0 = arith.constant 0 : i32
    return %arg0, %c0_i32 : i32, i32
  }
  func.func @transform_6(%arg0: i32, %arg1: i32, %arg2: i32) -> (i32, i32) {
    %c0_i32 = arith.constant 0 : i32
    return %arg0, %arg1 : i32, i32
  }
}

module attributes {stable_mosaic.version = 11 : i64} {
  func.func @neigh_proj_kernel(%arg0: i32, %arg1: memref<256x128xf32, #tpu.memory_space<vmem>>, %arg2: memref<128x128xf32, #tpu.memory_space<vmem>>, %arg3: memref<256x128xbf16, #tpu.memory_space<vmem>>) attributes {dimension_semantics = [#tpu.dimension_semantics<parallel>], iteration_bounds = array<i64: 1>, scalar_prefetch = 0 : i64, scratch_operands = 0 : i64, tpu.core_type = #tpu.core_type<tc>, window_params = [{transform_indices = @transform_0, window_bounds = array<i64: 256, 128>}, {pipeline_mode = #tpu.pipeline_mode<synchronous>, transform_indices = @transform_1, window_bounds = array<i64: 128, 128>}, {transform_indices = @transform_2, window_bounds = array<i64: 256, 128>}]} {
    %c0 = arith.constant 0 : index
    %c0_0 = arith.constant 0 : index
    %0 = vector.load %arg1[%c0, %c0_0] : memref<256x128xf32, #tpu.memory_space<vmem>>, vector<256x128xf32>
    %c0_1 = arith.constant 0 : index
    %c0_2 = arith.constant 0 : index
    %1 = vector.load %arg2[%c0_1, %c0_2] : memref<128x128xf32, #tpu.memory_space<vmem>>, vector<128x128xf32>
    %cst = arith.constant dense<0.000000e+00> : vector<256x128xf32>
    %2 = tpu.matmul %0, %1, %cst {dimension_numbers = #tpu.dot_dimension_numbers<[1], [0], [0], [1], [0, 0, 1, 1], [], []>} : vector<256x128xf32>, vector<128x128xf32>, vector<256x128xf32> -> vector<256x128xf32>
    %3 = arith.truncf %2 : vector<256x128xf32> to vector<256x128xbf16>
    %c0_3 = arith.constant 0 : index
    %c0_4 = arith.constant 0 : index
    %4 = vector.load %arg3[%c0_3, %c0_4] : memref<256x128xbf16, #tpu.memory_space<vmem>>, vector<256x128xbf16>
    tpu.vector_store %arg3[%c0_3, %c0_4], %3 {strides = array<i32>} : memref<256x128xbf16, #tpu.memory_space<vmem>>, vector<256x128xbf16>,
    return
  }
  func.func @transform_0(%arg0: i32) -> (i32, i32) {
    %c0_i32 = arith.constant 0 : i32
    %c0_i32_0 = arith.constant 0 : i32
    return %arg0, %c0_i32 : i32, i32
  }
  func.func @transform_1(%arg0: i32) -> (i32, i32) {
    %c0_i32 = arith.constant 0 : i32
    %c0_i32_0 = arith.constant 0 : i32
    %c0_i32_1 = arith.constant 0 : i32
    return %c0_i32, %c0_i32_0 : i32, i32
  }
  func.func @transform_2(%arg0: i32) -> (i32, i32) {
    %c0_i32 = arith.constant 0 : i32
    %c0_i32_0 = arith.constant 0 : i32
    return %arg0, %c0_i32 : i32, i32
  }
}

module attributes {stable_mosaic.version = 11 : i64} {
  func.func @neigh_proj_kernel(%arg0: i32, %arg1: memref<256x128xbf16, #tpu.memory_space<vmem>>, %arg2: memref<128x128xf32, #tpu.memory_space<vmem>>, %arg3: memref<256x128xbf16, #tpu.memory_space<vmem>>) attributes {dimension_semantics = [#tpu.dimension_semantics<parallel>], iteration_bounds = array<i64: 1>, scalar_prefetch = 0 : i64, scratch_operands = 0 : i64, tpu.core_type = #tpu.core_type<tc>, window_params = [{transform_indices = @transform_0, window_bounds = array<i64: 256, 128>}, {pipeline_mode = #tpu.pipeline_mode<synchronous>, transform_indices = @transform_1, window_bounds = array<i64: 128, 128>}, {transform_indices = @transform_2, window_bounds = array<i64: 256, 128>}]} {
    %c0 = arith.constant 0 : index
    %c0_0 = arith.constant 0 : index
    %0 = vector.load %arg1[%c0, %c0_0] : memref<256x128xbf16, #tpu.memory_space<vmem>>, vector<256x128xbf16>
    %1 = arith.extf %0 : vector<256x128xbf16> to vector<256x128xf32>
    %c0_1 = arith.constant 0 : index
    %c0_2 = arith.constant 0 : index
    %2 = vector.load %arg2[%c0_1, %c0_2] : memref<128x128xf32, #tpu.memory_space<vmem>>, vector<128x128xf32>
    %cst = arith.constant dense<0.000000e+00> : vector<256x128xf32>
    %3 = tpu.matmul %1, %2, %cst {dimension_numbers = #tpu.dot_dimension_numbers<[1], [0], [0], [1], [0, 0, 1, 1], [], []>} : vector<256x128xf32>, vector<128x128xf32>, vector<256x128xf32> -> vector<256x128xf32>
    %4 = arith.truncf %3 : vector<256x128xf32> to vector<256x128xbf16>
    %c0_3 = arith.constant 0 : index
    %c0_4 = arith.constant 0 : index
    %5 = vector.load %arg3[%c0_3, %c0_4] : memref<256x128xbf16, #tpu.memory_space<vmem>>, vector<256x128xbf16>
    tpu.vector_store %arg3[%c0_3, %c0_4], %4 {strides = array<i32>} : memref<256x128xbf16, #tpu.memory_space<vmem>>, vector<256x128xbf16>,
    return
  }
  func.func @transform_0(%arg0: i32) -> (i32, i32) {
    %c0_i32 = arith.constant 0 : i32
    %c0_i32_0 = arith.constant 0 : i32
    return %arg0, %c0_i32 : i32, i32
  }
  func.func @transform_1(%arg0: i32) -> (i32, i32) {
    %c0_i32 = arith.constant 0 : i32
    %c0_i32_0 = arith.constant 0 : i32
    %c0_i32_1 = arith.constant 0 : i32
    return %c0_i32, %c0_i32_0 : i32, i32
  }
  func.func @transform_2(%arg0: i32) -> (i32, i32) {
    %c0_i32 = arith.constant 0 : i32
    %c0_i32_0 = arith.constant 0 : i32
    return %arg0, %c0_i32 : i32, i32
  }
}

module attributes {stable_mosaic.version = 11 : i64} {
  func.func @aggregate_kernel(%arg0: i32, %arg1: i32, %arg2: i32, %arg3: memref<256x256xi8, #tpu.memory_space<vmem>>, %arg4: memref<256x128xbf16, #tpu.memory_space<vmem>>, %arg5: memref<256x128xbf16, #tpu.memory_space<vmem>>, %arg6: memref<128x128xf32, #tpu.memory_space<vmem>>, %arg7: memref<1x128xf32, #tpu.memory_space<vmem>>, %arg8: memref<256x1xf32, #tpu.memory_space<vmem>>, %arg9: memref<256x128xf32, #tpu.memory_space<vmem>>, %arg10: memref<256x128xf32, #tpu.memory_space<vmem>>) attributes {dimension_semantics = [#tpu.dimension_semantics<parallel>, #tpu.dimension_semantics<parallel>, #tpu.dimension_semantics<arbitrary>], iteration_bounds = array<i64: 1, 1, 1>, scalar_prefetch = 0 : i64, scratch_operands = 1 : i64, tpu.core_type = #tpu.core_type<tc>, window_params = [{transform_indices = @transform_0, window_bounds = array<i64: 256, 256>}, {transform_indices = @transform_1, window_bounds = array<i64: 256, 128>}, {transform_indices = @transform_2, window_bounds = array<i64: 256, 128>}, {transform_indices = @transform_3, window_bounds = array<i64: 128, 128>}, {transform_indices = @transform_4, window_bounds = array<i64: 1, 128>}, {transform_indices = @transform_5, window_bounds = array<i64: 256, 1>}, {transform_indices = @transform_6, window_bounds = array<i64: 256, 128>}]} {
    %c0_i32 = arith.constant 0 : i32
    %0 = arith.cmpi eq, %arg2, %c0_i32 : i32
    %1 = arith.extui %0 : i1 to i32
    %c0_i32_0 = arith.constant 0 : i32
    %2 = arith.cmpi ne, %1, %c0_i32_0 : i32
    scf.if %2 {
      %cst_10 = arith.constant 0.000000e+00 : f32
      %13 = vector.broadcast %cst_10 : f32 to vector<256x128xf32>
      %c0_11 = arith.constant 0 : index
      %c0_12 = arith.constant 0 : index
      %14 = vector.load %arg10[%c0_11, %c0_12] : memref<256x128xf32, #tpu.memory_space<vmem>>, vector<256x128xf32>
      tpu.vector_store %arg10[%c0_11, %c0_12], %13 {strides = array<i32>} : memref<256x128xf32, #tpu.memory_space<vmem>>, vector<256x128xf32>,
    } else {
    }
    %c0 = arith.constant 0 : index
    %c0_1 = arith.constant 0 : index
    %3 = vector.load %arg10[%c0, %c0_1] : memref<256x128xf32, #tpu.memory_space<vmem>>, vector<256x128xf32>
    %c0_2 = arith.constant 0 : index
    %c0_3 = arith.constant 0 : index
    %4 = vector.load %arg3[%c0_2, %c0_3] : memref<256x256xi8, #tpu.memory_space<vmem>>, vector<256x256xi8>
    %5 = arith.sitofp %4 : vector<256x256xi8> to vector<256x256xbf16>
    %c0_4 = arith.constant 0 : index
    %c0_5 = arith.constant 0 : index
    %6 = vector.load %arg4[%c0_4, %c0_5] : memref<256x128xbf16, #tpu.memory_space<vmem>>, vector<256x128xbf16>
    %cst = arith.constant dense<0.000000e+00> : vector<256x128xf32>
    %7 = tpu.matmul %5, %6, %cst {dimension_numbers = #tpu.dot_dimension_numbers<[1], [0], [0], [1], [0, 0, 1, 1], [], []>} : vector<256x256xbf16>, vector<256x128xbf16>, vector<256x128xf32> -> vector<256x128xf32>
    %8 = arith.addf %3, %7 : vector<256x128xf32>
    %c0_6 = arith.constant 0 : index
    %c0_7 = arith.constant 0 : index
    %9 = vector.load %arg10[%c0_6, %c0_7] : memref<256x128xf32, #tpu.memory_space<vmem>>, vector<256x128xf32>
    tpu.vector_store %arg10[%c0_6, %c0_7], %8 {strides = array<i32>} : memref<256x128xf32, #tpu.memory_space<vmem>>, vector<256x128xf32>,
    %c0_i32_8 = arith.constant 0 : i32
    %10 = arith.cmpi eq, %arg2, %c0_i32_8 : i32
    %11 = arith.extui %10 : i1 to i32
    %c0_i32_9 = arith.constant 0 : i32
    %12 = arith.cmpi ne, %11, %c0_i32_9 : i32
    scf.if %12 {
      %c0_10 = arith.constant 0 : index
      %c0_11 = arith.constant 0 : index
      %13 = vector.load %arg5[%c0_10, %c0_11] : memref<256x128xbf16, #tpu.memory_space<vmem>>, vector<256x128xbf16>
      %14 = arith.extf %13 : vector<256x128xbf16> to vector<256x128xf32>
      %c0_12 = arith.constant 0 : index
      %c0_13 = arith.constant 0 : index
      %15 = vector.load %arg6[%c0_12, %c0_13] : memref<128x128xf32, #tpu.memory_space<vmem>>, vector<128x128xf32>
      %cst_14 = arith.constant dense<0.000000e+00> : vector<256x128xf32>
      %16 = tpu.matmul %14, %15, %cst_14 {dimension_numbers = #tpu.dot_dimension_numbers<[1], [0], [0], [1], [0, 0, 1, 1], [], []>} : vector<256x128xf32>, vector<128x128xf32>, vector<256x128xf32> -> vector<256x128xf32>
      %c0_15 = arith.constant 0 : index
      %c0_16 = arith.constant 0 : index
      %17 = vector.load %arg7[%c0_15, %c0_16] : memref<1x128xf32, #tpu.memory_space<vmem>>, vector<1x128xf32>
      %18 = vector.broadcast %17 : vector<1x128xf32> to vector<256x128xf32>
      %19 = arith.addf %16, %18 : vector<256x128xf32>
      %c0_17 = arith.constant 0 : index
      %c0_18 = arith.constant 0 : index
      %20 = vector.load %arg8[%c0_17, %c0_18] : memref<256x1xf32, #tpu.memory_space<vmem>>, vector<256x1xf32>
      %c0_19 = arith.constant 0 : index
      %c0_20 = arith.constant 0 : index
      %21 = vector.load %arg10[%c0_19, %c0_20] : memref<256x128xf32, #tpu.memory_space<vmem>>, vector<256x128xf32>
      %22 = vector.broadcast %20 : vector<256x1xf32> to vector<256x128xf32>
      %23 = arith.mulf %22, %21 : vector<256x128xf32>
      %24 = arith.addf %19, %23 : vector<256x128xf32>
      %c0_21 = arith.constant 0 : index
      %c0_22 = arith.constant 0 : index
      %25 = vector.load %arg9[%c0_21, %c0_22] : memref<256x128xf32, #tpu.memory_space<vmem>>, vector<256x128xf32>
      tpu.vector_store %arg9[%c0_21, %c0_22], %24 {strides = array<i32>} : memref<256x128xf32, #tpu.memory_space<vmem>>, vector<256x128xf32>,
    } else {
    }
    return
  }
  func.func @transform_0(%arg0: i32, %arg1: i32, %arg2: i32) -> (i32, i32) {
    %c0_i32 = arith.constant 0 : i32
    return %arg0, %arg2 : i32, i32
  }
  func.func @transform_1(%arg0: i32, %arg1: i32, %arg2: i32) -> (i32, i32) {
    %c0_i32 = arith.constant 0 : i32
    return %arg2, %arg1 : i32, i32
  }
  func.func @transform_2(%arg0: i32, %arg1: i32, %arg2: i32) -> (i32, i32) {
    %c0_i32 = arith.constant 0 : i32
    %c0_i32_0 = arith.constant 0 : i32
    return %arg0, %c0_i32 : i32, i32
  }
  func.func @transform_3(%arg0: i32, %arg1: i32, %arg2: i32) -> (i32, i32) {
    %c0_i32 = arith.constant 0 : i32
    %c0_i32_0 = arith.constant 0 : i32
    return %c0_i32, %arg1 : i32, i32
  }
  func.func @transform_4(%arg0: i32, %arg1: i32, %arg2: i32) -> (i32, i32) {
    %c0_i32 = arith.constant 0 : i32
    %c0_i32_0 = arith.constant 0 : i32
    return %c0_i32, %arg1 : i32, i32
  }
  func.func @transform_5(%arg0: i32, %arg1: i32, %arg2: i32) -> (i32, i32) {
    %c0_i32 = arith.constant 0 : i32
    %c0_i32_0 = arith.constant 0 : i32
    return %arg0, %c0_i32 : i32, i32
  }
  func.func @transform_6(%arg0: i32, %arg1: i32, %arg2: i32) -> (i32, i32) {
    %c0_i32 = arith.constant 0 : i32
    return %arg0, %arg1 : i32, i32
  }
}

module attributes {stable_mosaic.version = 11 : i64} {
  func.func @edge_score_kernel(%arg0: i32, %arg1: memref<128x128xf32, #tpu.memory_space<vmem>>, %arg2: memref<128x128xf32, #tpu.memory_space<vmem>>, %arg3: memref<1x128xf32, #tpu.memory_space<vmem>>) attributes {dimension_semantics = [#tpu.dimension_semantics<parallel>], iteration_bounds = array<i64: 1>, scalar_prefetch = 0 : i64, scratch_operands = 0 : i64, tpu.core_type = #tpu.core_type<tc>, window_params = [{transform_indices = @transform_0, window_bounds = array<i64: 128, 128>}, {transform_indices = @transform_1, window_bounds = array<i64: 128, 128>}, {transform_indices = @transform_2, window_bounds = array<i64: 1, 128>}]} {
    %c0 = arith.constant 0 : index
    %c0_0 = arith.constant 0 : index
    %0 = vector.load %arg1[%c0, %c0_0] : memref<128x128xf32, #tpu.memory_space<vmem>>, vector<128x128xf32>
    %c0_1 = arith.constant 0 : index
    %c0_2 = arith.constant 0 : index
    %1 = vector.load %arg2[%c0_1, %c0_2] : memref<128x128xf32, #tpu.memory_space<vmem>>, vector<128x128xf32>
    %2 = arith.mulf %0, %1 : vector<128x128xf32>
    %cst = arith.constant dense<0.000000e+00> : vector<128xf32>
    %3 = vector.multi_reduction <add>, %2, %cst [0] : vector<128x128xf32> to vector<128xf32>
    %4 = vector.shape_cast %3 : vector<128xf32> to vector<1x128xf32>
    %c0_3 = arith.constant 0 : index
    %c0_4 = arith.constant 0 : index
    %5 = vector.load %arg3[%c0_3, %c0_4] : memref<1x128xf32, #tpu.memory_space<vmem>>, vector<1x128xf32>
    tpu.vector_store %arg3[%c0_3, %c0_4], %4 {strides = array<i32>} : memref<1x128xf32, #tpu.memory_space<vmem>>, vector<1x128xf32>,
    return
  }
  func.func @transform_0(%arg0: i32) -> (i32, i32) {
    %c0_i32 = arith.constant 0 : i32
    %c0_i32_0 = arith.constant 0 : i32
    return %c0_i32, %arg0 : i32, i32
  }
  func.func @transform_1(%arg0: i32) -> (i32, i32) {
    %c0_i32 = arith.constant 0 : i32
    %c0_i32_0 = arith.constant 0 : i32
    return %c0_i32, %arg0 : i32, i32
  }
  func.func @transform_2(%arg0: i32) -> (i32, i32) {
    %c0_i32 = arith.constant 0 : i32
    %c0_i32_0 = arith.constant 0 : i32
    return %c0_i32, %arg0 : i32, i32
  }
}

</mosaic_0001>

<llo_original>
// kernel: link_prediction_model.5
$region0: #{link_prediction_model.5}
  #allocation0 [shape = 'u32[]', space=smem, size = 0x4, offset = 0x4, fixed_abs, tag = 'smem constant byte address 0x4 - core index']
  #allocation1 [shape = 'u32[72,128]{1,0:T(1,128)}', space=vmem, size = 0x9000, scoped, tag = 'internal scratch']
  %s0 = inlined_call_operand.vmem [shape: f32[256,128], index: 0, kind: input, shape index: {}]
  %s1 = inlined_call_operand.vmem [shape: f32[128,128], index: 1, kind: input, shape index: {}]
  %s2 = inlined_call_operand.vmem [shape: bf16[256,128], index: 2, kind: output, shape index: {}]
  %s3 = sld [smem:[#allocation0]]
  $region18: #{link_prediction_model.5} parent=0
    _
  %s5 = ssub.s32 1, %s3
  %s6 = scalar_select 0, %s5, %s3
  // Predicated region
  $region2: #{link_prediction_model.5} parent=0 // pred_check
    _
  $region3: #{link_prediction_model.5} parent=0 // pred_check_branch
    %8 = sbr.rel (0) target = $region5
  $region4: #{link_prediction_model.5} parent=0 // pred_region
    _
  $region5: #{link_prediction_model.5} parent=0 // pred_fallthru
    _
  // Predicated region
  $region6: #{link_prediction_model.5} parent=0 // pred_check
    _
  $region7: #{link_prediction_model.5} parent=0 // pred_check_branch
    %10 = sbr.rel (0) target = $region9
  $region8: #{link_prediction_model.5} parent=0 // pred_region
    _
  $region9: #{link_prediction_model.5} parent=0 // pred_fallthru
    _
  %v11 = vld [vmem:[%s0] sm:$0xff]
  %v12 = vld [vmem:[%s0 + $0x8] sm:$0xff]
  %v13 = vld [vmem:[%s0 + $0x10] sm:$0xff]
  %v14 = vld [vmem:[%s0 + $0x18] sm:$0xff]
  %v15 = vld [vmem:[%s0 + $0x20] sm:$0xff]
  %v16 = vld [vmem:[%s0 + $0x28] sm:$0xff]
  %v17 = vld [vmem:[%s0 + $0x30] sm:$0xff]
  %v18 = vld [vmem:[%s0 + $0x38] sm:$0xff]
  %v19 = vld [vmem:[%s0 + $0x40] sm:$0xff]
  %v20 = vld [vmem:[%s0 + $0x48] sm:$0xff]
  %v21 = vld [vmem:[%s0 + $0x50] sm:$0xff]
  %v22 = vld [vmem:[%s0 + $0x58] sm:$0xff]
  %v23 = vld [vmem:[%s0 + $0x60] sm:$0xff]
  %v24 = vld [vmem:[%s0 + $0x68] sm:$0xff]
  %v25 = vld [vmem:[%s0 + $0x70] sm:$0xff]
  %v26 = vld [vmem:[%s0 + $0x78] sm:$0xff]
  %v27 = vld [vmem:[%s0 + $0x80] sm:$0xff]
  %v28 = vld [vmem:[%s0 + $0x88] sm:$0xff]
  %v29 = vld [vmem:[%s0 + $0x90] sm:$0xff]
  %v30 = vld [vmem:[%s0 + $0x98] sm:$0xff]
  %v31 = vld [vmem:[%s0 + $0xa0] sm:$0xff]
  %v32 = vld [vmem:[%s0 + $0xa8] sm:$0xff]
  %v33 = vld [vmem:[%s0 + $0xb0] sm:$0xff]
  %v34 = vld [vmem:[%s0 + $0xb8] sm:$0xff]
  %v35 = vld [vmem:[%s0 + $0xc0] sm:$0xff]
  %v36 = vld [vmem:[%s0 + $0xc8] sm:$0xff]
  %v37 = vld [vmem:[%s0 + $0xd0] sm:$0xff]
  %v38 = vld [vmem:[%s0 + $0xd8] sm:$0xff]
  %v39 = vld [vmem:[%s0 + $0xe0] sm:$0xff]
  %v40 = vld [vmem:[%s0 + $0xe8] sm:$0xff]
  %v41 = vld [vmem:[%s0 + $0xf0] sm:$0xff]
  %v42 = vld [vmem:[%s0 + $0xf8] sm:$0xff]
  %v43 = vld [vmem:[%s1] sm:$0xff]
  %v44 = vld [vmem:[%s1 + $0x8] sm:$0xff]
  %v45 = vld [vmem:[%s1 + $0x10] sm:$0xff]
  %v46 = vld [vmem:[%s1 + $0x18] sm:$0xff]
  %v47 = vld [vmem:[%s1 + $0x20] sm:$0xff]
  %v48 = vld [vmem:[%s1 + $0x28] sm:$0xff]
  %v49 = vld [vmem:[%s1 + $0x30] sm:$0xff]
  %v50 = vld [vmem:[%s1 + $0x38] sm:$0xff]
  %v51 = vld [vmem:[%s1 + $0x40] sm:$0xff]
  %v52 = vld [vmem:[%s1 + $0x48] sm:$0xff]
  %v53 = vld [vmem:[%s1 + $0x50] sm:$0xff]
  %v54 = vld [vmem:[%s1 + $0x58] sm:$0xff]
  %v55 = vld [vmem:[%s1 + $0x60] sm:$0xff]
  %v56 = vld [vmem:[%s1 + $0x68] sm:$0xff]
  %v57 = vld [vmem:[%s1 + $0x70] sm:$0xff]
  %v58 = vld [vmem:[%s1 + $0x78] sm:$0xff]
  %59 = vmatpush.msra.mxu0 %v58
  %60 = vmatpush.msra.mxu0 %v57
  %61 = vmatpush.msra.mxu0 %v56
  %62 = vmatpush.msra.mxu0 %v55
  %63 = vmatpush.msra.mxu0 %v54
  %64 = vmatpush.msra.mxu0 %v53
  %65 = vmatpush.msra.mxu0 %v52
  %66 = vmatpush.msra.mxu0 %v51
  %67 = vmatpush.msra.mxu0 %v50
  %68 = vmatpush.msra.mxu0 %v49
  %69 = vmatpush.msra.mxu0 %v48
  %70 = vmatpush.msra.mxu0 %v47
  %71 = vmatpush.msra.mxu0 %v46
  %72 = vmatpush.msra.mxu0 %v45
  %73 = vmatpush.msra.mxu0 %v44
  %74 = vmatpush.msra.mxu0 %v43
  %75 = vmatmul.f32.gmra.mxu0 %v11
  %v76 = vpop.f32.mrf.mxu0
  %v77 = vadd.f32 0.0, %v76
  %78 = vmatmul.f32.gmra.mxu0 %v12
  %v79 = vpop.f32.mrf.mxu0
  %v80 = vadd.f32 0.0, %v79
  %81 = vmatmul.f32.gmra.mxu0 %v13
  %v82 = vpop.f32.mrf.mxu0
  %v83 = vadd.f32 0.0, %v82
  %84 = vmatmul.f32.gmra.mxu0 %v14
  %v85 = vpop.f32.mrf.mxu0
  %v86 = vadd.f32 0.0, %v85
  %87 = vmatmul.f32.gmra.mxu0 %v15
  %v88 = vpop.f32.mrf.mxu0
  %v89 = vadd.f32 0.0, %v88
  %90 = vmatmul.f32.gmra.mxu0 %v16
  %v91 = vpop.f32.mrf.mxu0
  %v92 = vadd.f32 0.0, %v91
  %93 = vmatmul.f32.gmra.mxu0 %v17
  %v94 = vpop.f32.mrf.mxu0
  %v95 = vadd.f32 0.0, %v94
  %96 = vmatmul.f32.gmra.mxu0 %v18
  %v97 = vpop.f32.mrf.mxu0
  %v98 = vadd.f32 0.0, %v97
  %99 = vmatmul.f32.gmra.mxu0 %v19
  %v100 = vpop.f32.mrf.mxu0
  %v101 = vadd.f32 0.0, %v100
  %102 = vmatmul.f32.gmra.mxu0 %v20
  %v103 = vpop.f32.mrf.mxu0
  %v104 = vadd.f32 0.0, %v103
  %105 = vmatmul.f32.gmra.mxu0 %v21
  %v106 = vpop.f32.mrf.mxu0
  %v107 = vadd.f32 0.0, %v106
  %108 = vmatmul.f32.gmra.mxu0 %v22
  %v109 = vpop.f32.mrf.mxu0
  %v110 = vadd.f32 0.0, %v109
  %111 = vmatmul.f32.gmra.mxu0 %v23
  %v112 = vpop.f32.mrf.mxu0
  %v113 = vadd.f32 0.0, %v112
  %114 = vmatmul.f32.gmra.mxu0 %v24
  %v115 = vpop.f32.mrf.mxu0
  %v116 = vadd.f32 0.0, %v115
  %117 = vmatmul.f32.gmra.mxu0 %v25
  %v118 = vpop.f32.mrf.mxu0
  %v119 = vadd.f32 0.0, %v118
  %120 = vmatmul.f32.gmra.mxu0 %v26
  %v121 = vpop.f32.mrf.mxu0
  %v122 = vadd.f32 0.0, %v121
  %123 = vmatmul.f32.gmra.mxu0 %v27
  %v124 = vpop.f32.mrf.mxu0
  %v125 = vadd.f32 0.0, %v124
  %126 = vmatmul.f32.gmra.mxu0 %v28
  %v127 = vpop.f32.mrf.mxu0
  %v128 = vadd.f32 0.0, %v127
  %129 = vmatmul.f32.gmra.mxu0 %v29
  %v130 = vpop.f32.mrf.mxu0
  %v131 = vadd.f32 0.0, %v130
  %132 = vmatmul.f32.gmra.mxu0 %v30
  %v133 = vpop.f32.mrf.mxu0
  %v134 = vadd.f32 0.0, %v133
  %135 = vmatmul.f32.gmra.mxu0 %v31
  %v136 = vpop.f32.mrf.mxu0
  %v137 = vadd.f32 0.0, %v136
  %138 = vmatmul.f32.gmra.mxu0 %v32
  %v139 = vpop.f32.mrf.mxu0
  %v140 = vadd.f32 0.0, %v139
  %141 = vmatmul.f32.gmra.mxu0 %v33
  %v142 = vpop.f32.mrf.mxu0
  %v143 = vadd.f32 0.0, %v142
  %144 = vmatmul.f32.gmra.mxu0 %v34
  %v145 = vpop.f32.mrf.mxu0
  %v146 = vadd.f32 0.0, %v145
  %147 = vmatmul.f32.gmra.mxu0 %v35
  %v148 = vpop.f32.mrf.mxu0
  %v149 = vadd.f32 0.0, %v148
  %150 = vmatmul.f32.gmra.mxu0 %v36
  %v151 = vpop.f32.mrf.mxu0
  %v152 = vadd.f32 0.0, %v151
  %153 = vmatmul.f32.gmra.mxu0 %v37
  %v154 = vpop.f32.mrf.mxu0
  %v155 = vadd.f32 0.0, %v154
  %156 = vmatmul.f32.gmra.mxu0 %v38
  %v157 = vpop.f32.mrf.mxu0
  %v158 = vadd.f32 0.0, %v157
  %159 = vmatmul.f32.gmra.mxu0 %v39
  %v160 = vpop.f32.mrf.mxu0
  %v161 = vadd.f32 0.0, %v160
  %162 = vmatmul.f32.gmra.mxu0 %v40
  %v163 = vpop.f32.mrf.mxu0
  %v164 = vadd.f32 0.0, %v163
  %165 = vmatmul.f32.gmra.mxu0 %v41
  %v166 = vpop.f32.mrf.mxu0
  %v167 = vadd.f32 0.0, %v166
  %168 = vmatmul.f32.gmra.mxu0 %v42
  %v169 = vpop.f32.mrf.mxu0
  %v170 = vadd.f32 0.0, %v169
  %171 = vdwg.mxu0
  %v172 = vpack.c.bf16 %v77, %v77
  %v173 = vpack.c.bf16 %v80, %v80
  %v174 = vpack.c.bf16 %v83, %v83
  %v175 = vpack.c.bf16 %v86, %v86
  %v176 = vpack.c.bf16 %v89, %v89
  %v177 = vpack.c.bf16 %v92, %v92
  %v178 = vpack.c.bf16 %v95, %v95
  %v179 = vpack.c.bf16 %v98, %v98
  %v180 = vpack.c.bf16 %v101, %v101
  %v181 = vpack.c.bf16 %v104, %v104
  %v182 = vpack.c.bf16 %v107, %v107
  %v183 = vpack.c.bf16 %v110, %v110
  %v184 = vpack.c.bf16 %v113, %v113
  %v185 = vpack.c.bf16 %v116, %v116
  %v186 = vpack.c.bf16 %v119, %v119
  %v187 = vpack.c.bf16 %v122, %v122
  %v188 = vpack.c.bf16 %v125, %v125
  %v189 = vpack.c.bf16 %v128, %v128
  %v190 = vpack.c.bf16 %v131, %v131
  %v191 = vpack.c.bf16 %v134, %v134
  %v192 = vpack.c.bf16 %v137, %v137
  %v193 = vpack.c.bf16 %v140, %v140
  %v194 = vpack.c.bf16 %v143, %v143
  %v195 = vpack.c.bf16 %v146, %v146
  %v196 = vpack.c.bf16 %v149, %v149
  %v197 = vpack.c.bf16 %v152, %v152
  %v198 = vpack.c.bf16 %v155, %v155
  %v199 = vpack.c.bf16 %v158, %v158
  %v200 = vpack.c.bf16 %v161, %v161
  %v201 = vpack.c.bf16 %v164, %v164
  %v202 = vpack.c.bf16 %v167, %v167
  %v203 = vpack.c.bf16 %v170, %v170
  %204 = vst [vmem:[%s2] sm:$0xf] %v172
  %205 = vst [vmem:[%s2 + $0x4] sm:$0xf] %v173
  %206 = vst [vmem:[%s2 + $0x8] sm:$0xf] %v174
  %207 = vst [vmem:[%s2 + $0xc] sm:$0xf] %v175
  %208 = vst [vmem:[%s2 + $0x10] sm:$0xf] %v176
  %209 = vst [vmem:[%s2 + $0x14] sm:$0xf] %v177
  %210 = vst [vmem:[%s2 + $0x18] sm:$0xf] %v178
  %211 = vst [vmem:[%s2 + $0x1c] sm:$0xf] %v179
  %212 = vst [vmem:[%s2 + $0x20] sm:$0xf] %v180
  %213 = vst [vmem:[%s2 + $0x24] sm:$0xf] %v181
  %214 = vst [vmem:[%s2 + $0x28] sm:$0xf] %v182
  %215 = vst [vmem:[%s2 + $0x2c] sm:$0xf] %v183
  %216 = vst [vmem:[%s2 + $0x30] sm:$0xf] %v184
  %217 = vst [vmem:[%s2 + $0x34] sm:$0xf] %v185
  %218 = vst [vmem:[%s2 + $0x38] sm:$0xf] %v186
  %219 = vst [vmem:[%s2 + $0x3c] sm:$0xf] %v187
  %220 = vst [vmem:[%s2 + $0x40] sm:$0xf] %v188
  %221 = vst [vmem:[%s2 + $0x44] sm:$0xf] %v189
  %222 = vst [vmem:[%s2 + $0x48] sm:$0xf] %v190
  %223 = vst [vmem:[%s2 + $0x4c] sm:$0xf] %v191
  %224 = vst [vmem:[%s2 + $0x50] sm:$0xf] %v192
  %225 = vst [vmem:[%s2 + $0x54] sm:$0xf] %v193
  %226 = vst [vmem:[%s2 + $0x58] sm:$0xf] %v194
  %227 = vst [vmem:[%s2 + $0x5c] sm:$0xf] %v195
  %228 = vst [vmem:[%s2 + $0x60] sm:$0xf] %v196
  %229 = vst [vmem:[%s2 + $0x64] sm:$0xf] %v197
  %230 = vst [vmem:[%s2 + $0x68] sm:$0xf] %v198
  %231 = vst [vmem:[%s2 + $0x6c] sm:$0xf] %v199
  %232 = vst [vmem:[%s2 + $0x70] sm:$0xf] %v200
  %233 = vst [vmem:[%s2 + $0x74] sm:$0xf] %v201
  %234 = vst [vmem:[%s2 + $0x78] sm:$0xf] %v202
  %235 = vst [vmem:[%s2 + $0x7c] sm:$0xf] %v203
  // Predicated region
  $region10: #{link_prediction_model.5} parent=0 // pred_check
    _
  $region11: #{link_prediction_model.5} parent=0 // pred_check_branch
    %237 = sbr.rel (0) target = $region13
  $region12: #{link_prediction_model.5} parent=0 // pred_region
    _
  $region13: #{link_prediction_model.5} parent=0 // pred_fallthru
    _
  // Predicated region
  $region14: #{link_prediction_model.5} parent=0 // pred_check
    _
  $region15: #{link_prediction_model.5} parent=0 // pred_check_branch
    %239 = sbr.rel (0) target = $region17
  $region16: #{link_prediction_model.5} parent=0 // pred_region
    _
  $region17: #{link_prediction_model.5} parent=0 // pred_fallthru
    _

// kernel: link_prediction_model.7
$region0: #{link_prediction_model.7}
  #allocation0 [shape = 'u32[]', space=smem, size = 0x4, offset = 0x4, fixed_abs, tag = 'smem constant byte address 0x4 - core index']
  #allocation1 [shape = 'u32[72,128]{1,0:T(1,128)}', space=vmem, size = 0x9000, scoped, tag = 'internal scratch']
  %s0 = inlined_call_operand.vmem [shape: bf16[256,128], index: 0, kind: input, shape index: {}]
  %s1 = inlined_call_operand.vmem [shape: f32[128,128], index: 1, kind: input, shape index: {}]
  %s2 = inlined_call_operand.vmem [shape: bf16[256,128], index: 2, kind: output, shape index: {}]
  %s3 = sld [smem:[#allocation0]]
  $region18: #{link_prediction_model.7} parent=0
    _
  %s5 = ssub.s32 1, %s3
  %s6 = scalar_select 0, %s5, %s3
  // Predicated region
  $region2: #{link_prediction_model.7} parent=0 // pred_check
    _
  $region3: #{link_prediction_model.7} parent=0 // pred_check_branch
    %8 = sbr.rel (0) target = $region5
  $region4: #{link_prediction_model.7} parent=0 // pred_region
    _
  $region5: #{link_prediction_model.7} parent=0 // pred_fallthru
    _
  // Predicated region
  $region6: #{link_prediction_model.7} parent=0 // pred_check
    _
  $region7: #{link_prediction_model.7} parent=0 // pred_check_branch
    %10 = sbr.rel (0) target = $region9
  $region8: #{link_prediction_model.7} parent=0 // pred_region
    _
  $region9: #{link_prediction_model.7} parent=0 // pred_fallthru
    _
  %v11 = vld [vmem:[%s0] sm:$0xf]
  %v12 = vld [vmem:[%s0 + $0x4] sm:$0xf]
  %v13 = vld [vmem:[%s0 + $0x8] sm:$0xf]
  %v14 = vld [vmem:[%s0 + $0xc] sm:$0xf]
  %v15 = vld [vmem:[%s0 + $0x10] sm:$0xf]
  %v16 = vld [vmem:[%s0 + $0x14] sm:$0xf]
  %v17 = vld [vmem:[%s0 + $0x18] sm:$0xf]
  %v18 = vld [vmem:[%s0 + $0x1c] sm:$0xf]
  %v19 = vld [vmem:[%s0 + $0x20] sm:$0xf]
  %v20 = vld [vmem:[%s0 + $0x24] sm:$0xf]
  %v21 = vld [vmem:[%s0 + $0x28] sm:$0xf]
  %v22 = vld [vmem:[%s0 + $0x2c] sm:$0xf]
  %v23 = vld [vmem:[%s0 + $0x30] sm:$0xf]
  %v24 = vld [vmem:[%s0 + $0x34] sm:$0xf]
  %v25 = vld [vmem:[%s0 + $0x38] sm:$0xf]
  %v26 = vld [vmem:[%s0 + $0x3c] sm:$0xf]
  %v27 = vld [vmem:[%s0 + $0x40] sm:$0xf]
  %v28 = vld [vmem:[%s0 + $0x44] sm:$0xf]
  %v29 = vld [vmem:[%s0 + $0x48] sm:$0xf]
  %v30 = vld [vmem:[%s0 + $0x4c] sm:$0xf]
  %v31 = vld [vmem:[%s0 + $0x50] sm:$0xf]
  %v32 = vld [vmem:[%s0 + $0x54] sm:$0xf]
  %v33 = vld [vmem:[%s0 + $0x58] sm:$0xf]
  %v34 = vld [vmem:[%s0 + $0x5c] sm:$0xf]
  %v35 = vld [vmem:[%s0 + $0x60] sm:$0xf]
  %v36 = vld [vmem:[%s0 + $0x64] sm:$0xf]
  %v37 = vld [vmem:[%s0 + $0x68] sm:$0xf]
  %v38 = vld [vmem:[%s0 + $0x6c] sm:$0xf]
  %v39 = vld [vmem:[%s0 + $0x70] sm:$0xf]
  %v40 = vld [vmem:[%s0 + $0x74] sm:$0xf]
  %v41 = vld [vmem:[%s0 + $0x78] sm:$0xf]
  %v42 = vld [vmem:[%s0 + $0x7c] sm:$0xf]
  %v43 = vunpack.c.l.bf16 %v11
  %v44 = vunpack.c.l.bf16 %v12
  %v45 = vunpack.c.l.bf16 %v13
  %v46 = vunpack.c.l.bf16 %v14
  %v47 = vunpack.c.l.bf16 %v15
  %v48 = vunpack.c.l.bf16 %v16
  %v49 = vunpack.c.l.bf16 %v17
  %v50 = vunpack.c.l.bf16 %v18
  %v51 = vunpack.c.l.bf16 %v19
  %v52 = vunpack.c.l.bf16 %v20
  %v53 = vunpack.c.l.bf16 %v21
  %v54 = vunpack.c.l.bf16 %v22
  %v55 = vunpack.c.l.bf16 %v23
  %v56 = vunpack.c.l.bf16 %v24
  %v57 = vunpack.c.l.bf16 %v25
  %v58 = vunpack.c.l.bf16 %v26
  %v59 = vunpack.c.l.bf16 %v27
  %v60 = vunpack.c.l.bf16 %v28
  %v61 = vunpack.c.l.bf16 %v29
  %v62 = vunpack.c.l.bf16 %v30
  %v63 = vunpack.c.l.bf16 %v31
  %v64 = vunpack.c.l.bf16 %v32
  %v65 = vunpack.c.l.bf16 %v33
  %v66 = vunpack.c.l.bf16 %v34
  %v67 = vunpack.c.l.bf16 %v35
  %v68 = vunpack.c.l.bf16 %v36
  %v69 = vunpack.c.l.bf16 %v37
  %v70 = vunpack.c.l.bf16 %v38
  %v71 = vunpack.c.l.bf16 %v39
  %v72 = vunpack.c.l.bf16 %v40
  %v73 = vunpack.c.l.bf16 %v41
  %v74 = vunpack.c.l.bf16 %v42
  %v75 = vld [vmem:[%s1] sm:$0xff]
  %v76 = vld [vmem:[%s1 + $0x8] sm:$0xff]
  %v77 = vld [vmem:[%s1 + $0x10] sm:$0xff]
  %v78 = vld [vmem:[%s1 + $0x18] sm:$0xff]
  %v79 = vld [vmem:[%s1 + $0x20] sm:$0xff]
  %v80 = vld [vmem:[%s1 + $0x28] sm:$0xff]
  %v81 = vld [vmem:[%s1 + $0x30] sm:$0xff]
  %v82 = vld [vmem:[%s1 + $0x38] sm:$0xff]
  %v83 = vld [vmem:[%s1 + $0x40] sm:$0xff]
  %v84 = vld [vmem:[%s1 + $0x48] sm:$0xff]
  %v85 = vld [vmem:[%s1 + $0x50] sm:$0xff]
  %v86 = vld [vmem:[%s1 + $0x58] sm:$0xff]
  %v87 = vld [vmem:[%s1 + $0x60] sm:$0xff]
  %v88 = vld [vmem:[%s1 + $0x68] sm:$0xff]
  %v89 = vld [vmem:[%s1 + $0x70] sm:$0xff]
  %v90 = vld [vmem:[%s1 + $0x78] sm:$0xff]
  %91 = vmatpush.msra.mxu0 %v90
  %92 = vmatpush.msra.mxu0 %v89
  %93 = vmatpush.msra.mxu0 %v88
  %94 = vmatpush.msra.mxu0 %v87
  %95 = vmatpush.msra.mxu0 %v86
  %96 = vmatpush.msra.mxu0 %v85
  %97 = vmatpush.msra.mxu0 %v84
  %98 = vmatpush.msra.mxu0 %v83
  %99 = vmatpush.msra.mxu0 %v82
  %100 = vmatpush.msra.mxu0 %v81
  %101 = vmatpush.msra.mxu0 %v80
  %102 = vmatpush.msra.mxu0 %v79
  %103 = vmatpush.msra.mxu0 %v78
  %104 = vmatpush.msra.mxu0 %v77
  %105 = vmatpush.msra.mxu0 %v76
  %106 = vmatpush.msra.mxu0 %v75
  %107 = vmatmul.f32.gmra.mxu0 %v43
  %v108 = vpop.f32.mrf.mxu0
  %v109 = vadd.f32 0.0, %v108
  %110 = vmatmul.f32.gmra.mxu0 %v44
  %v111 = vpop.f32.mrf.mxu0
  %v112 = vadd.f32 0.0, %v111
  %113 = vmatmul.f32.gmra.mxu0 %v45
  %v114 = vpop.f32.mrf.mxu0
  %v115 = vadd.f32 0.0, %v114
  %116 = vmatmul.f32.gmra.mxu0 %v46
  %v117 = vpop.f32.mrf.mxu0
  %v118 = vadd.f32 0.0, %v117
  %119 = vmatmul.f32.gmra.mxu0 %v47
  %v120 = vpop.f32.mrf.mxu0
  %v121 = vadd.f32 0.0, %v120
  %122 = vmatmul.f32.gmra.mxu0 %v48
  %v123 = vpop.f32.mrf.mxu0
  %v124 = vadd.f32 0.0, %v123
  %125 = vmatmul.f32.gmra.mxu0 %v49
  %v126 = vpop.f32.mrf.mxu0
  %v127 = vadd.f32 0.0, %v126
  %128 = vmatmul.f32.gmra.mxu0 %v50
  %v129 = vpop.f32.mrf.mxu0
  %v130 = vadd.f32 0.0, %v129
  %131 = vmatmul.f32.gmra.mxu0 %v51
  %v132 = vpop.f32.mrf.mxu0
  %v133 = vadd.f32 0.0, %v132
  %134 = vmatmul.f32.gmra.mxu0 %v52
  %v135 = vpop.f32.mrf.mxu0
  %v136 = vadd.f32 0.0, %v135
  %137 = vmatmul.f32.gmra.mxu0 %v53
  %v138 = vpop.f32.mrf.mxu0
  %v139 = vadd.f32 0.0, %v138
  %140 = vmatmul.f32.gmra.mxu0 %v54
  %v141 = vpop.f32.mrf.mxu0
  %v142 = vadd.f32 0.0, %v141
  %143 = vmatmul.f32.gmra.mxu0 %v55
  %v144 = vpop.f32.mrf.mxu0
  %v145 = vadd.f32 0.0, %v144
  %146 = vmatmul.f32.gmra.mxu0 %v56
  %v147 = vpop.f32.mrf.mxu0
  %v148 = vadd.f32 0.0, %v147
  %149 = vmatmul.f32.gmra.mxu0 %v57
  %v150 = vpop.f32.mrf.mxu0
  %v151 = vadd.f32 0.0, %v150
  %152 = vmatmul.f32.gmra.mxu0 %v58
  %v153 = vpop.f32.mrf.mxu0
  %v154 = vadd.f32 0.0, %v153
  %155 = vmatmul.f32.gmra.mxu0 %v59
  %v156 = vpop.f32.mrf.mxu0
  %v157 = vadd.f32 0.0, %v156
  %158 = vmatmul.f32.gmra.mxu0 %v60
  %v159 = vpop.f32.mrf.mxu0
  %v160 = vadd.f32 0.0, %v159
  %161 = vmatmul.f32.gmra.mxu0 %v61
  %v162 = vpop.f32.mrf.mxu0
  %v163 = vadd.f32 0.0, %v162
  %164 = vmatmul.f32.gmra.mxu0 %v62
  %v165 = vpop.f32.mrf.mxu0
  %v166 = vadd.f32 0.0, %v165
  %167 = vmatmul.f32.gmra.mxu0 %v63
  %v168 = vpop.f32.mrf.mxu0
  %v169 = vadd.f32 0.0, %v168
  %170 = vmatmul.f32.gmra.mxu0 %v64
  %v171 = vpop.f32.mrf.mxu0
  %v172 = vadd.f32 0.0, %v171
  %173 = vmatmul.f32.gmra.mxu0 %v65
  %v174 = vpop.f32.mrf.mxu0
  %v175 = vadd.f32 0.0, %v174
  %176 = vmatmul.f32.gmra.mxu0 %v66
  %v177 = vpop.f32.mrf.mxu0
  %v178 = vadd.f32 0.0, %v177
  %179 = vmatmul.f32.gmra.mxu0 %v67
  %v180 = vpop.f32.mrf.mxu0
  %v181 = vadd.f32 0.0, %v180
  %182 = vmatmul.f32.gmra.mxu0 %v68
  %v183 = vpop.f32.mrf.mxu0
  %v184 = vadd.f32 0.0, %v183
  %185 = vmatmul.f32.gmra.mxu0 %v69
  %v186 = vpop.f32.mrf.mxu0
  %v187 = vadd.f32 0.0, %v186
  %188 = vmatmul.f32.gmra.mxu0 %v70
  %v189 = vpop.f32.mrf.mxu0
  %v190 = vadd.f32 0.0, %v189
  %191 = vmatmul.f32.gmra.mxu0 %v71
  %v192 = vpop.f32.mrf.mxu0
  %v193 = vadd.f32 0.0, %v192
  %194 = vmatmul.f32.gmra.mxu0 %v72
  %v195 = vpop.f32.mrf.mxu0
  %v196 = vadd.f32 0.0, %v195
  %197 = vmatmul.f32.gmra.mxu0 %v73
  %v198 = vpop.f32.mrf.mxu0
  %v199 = vadd.f32 0.0, %v198
  %200 = vmatmul.f32.gmra.mxu0 %v74
  %v201 = vpop.f32.mrf.mxu0
  %v202 = vadd.f32 0.0, %v201
  %203 = vdwg.mxu0
  %v204 = vpack.c.bf16 %v109, %v109
  %v205 = vpack.c.bf16 %v112, %v112
  %v206 = vpack.c.bf16 %v115, %v115
  %v207 = vpack.c.bf16 %v118, %v118
  %v208 = vpack.c.bf16 %v121, %v121
  %v209 = vpack.c.bf16 %v124, %v124
  %v210 = vpack.c.bf16 %v127, %v127
  %v211 = vpack.c.bf16 %v130, %v130
  %v212 = vpack.c.bf16 %v133, %v133
  %v213 = vpack.c.bf16 %v136, %v136
  %v214 = vpack.c.bf16 %v139, %v139
  %v215 = vpack.c.bf16 %v142, %v142
  %v216 = vpack.c.bf16 %v145, %v145
  %v217 = vpack.c.bf16 %v148, %v148
  %v218 = vpack.c.bf16 %v151, %v151
  %v219 = vpack.c.bf16 %v154, %v154
  %v220 = vpack.c.bf16 %v157, %v157
  %v221 = vpack.c.bf16 %v160, %v160
  %v222 = vpack.c.bf16 %v163, %v163
  %v223 = vpack.c.bf16 %v166, %v166
  %v224 = vpack.c.bf16 %v169, %v169
  %v225 = vpack.c.bf16 %v172, %v172
  %v226 = vpack.c.bf16 %v175, %v175
  %v227 = vpack.c.bf16 %v178, %v178
  %v228 = vpack.c.bf16 %v181, %v181
  %v229 = vpack.c.bf16 %v184, %v184
  %v230 = vpack.c.bf16 %v187, %v187
  %v231 = vpack.c.bf16 %v190, %v190
  %v232 = vpack.c.bf16 %v193, %v193
  %v233 = vpack.c.bf16 %v196, %v196
  %v234 = vpack.c.bf16 %v199, %v199
  %v235 = vpack.c.bf16 %v202, %v202
  %236 = vst [vmem:[%s2] sm:$0xf] %v204
  %237 = vst [vmem:[%s2 + $0x4] sm:$0xf] %v205
  %238 = vst [vmem:[%s2 + $0x8] sm:$0xf] %v206
  %239 = vst [vmem:[%s2 + $0xc] sm:$0xf] %v207
  %240 = vst [vmem:[%s2 + $0x10] sm:$0xf] %v208
  %241 = vst [vmem:[%s2 + $0x14] sm:$0xf] %v209
  %242 = vst [vmem:[%s2 + $0x18] sm:$0xf] %v210
  %243 = vst [vmem:[%s2 + $0x1c] sm:$0xf] %v211
  %244 = vst [vmem:[%s2 + $0x20] sm:$0xf] %v212
  %245 = vst [vmem:[%s2 + $0x24] sm:$0xf] %v213
  %246 = vst [vmem:[%s2 + $0x28] sm:$0xf] %v214
  %247 = vst [vmem:[%s2 + $0x2c] sm:$0xf] %v215
  %248 = vst [vmem:[%s2 + $0x30] sm:$0xf] %v216
  %249 = vst [vmem:[%s2 + $0x34] sm:$0xf] %v217
  %250 = vst [vmem:[%s2 + $0x38] sm:$0xf] %v218
  %251 = vst [vmem:[%s2 + $0x3c] sm:$0xf] %v219
  %252 = vst [vmem:[%s2 + $0x40] sm:$0xf] %v220
  %253 = vst [vmem:[%s2 + $0x44] sm:$0xf] %v221
  %254 = vst [vmem:[%s2 + $0x48] sm:$0xf] %v222
  %255 = vst [vmem:[%s2 + $0x4c] sm:$0xf] %v223
  %256 = vst [vmem:[%s2 + $0x50] sm:$0xf] %v224
  %257 = vst [vmem:[%s2 + $0x54] sm:$0xf] %v225
  %258 = vst [vmem:[%s2 + $0x58] sm:$0xf] %v226
  %259 = vst [vmem:[%s2 + $0x5c] sm:$0xf] %v227
  %260 = vst [vmem:[%s2 + $0x60] sm:$0xf] %v228
  %261 = vst [vmem:[%s2 + $0x64] sm:$0xf] %v229
  %262 = vst [vmem:[%s2 + $0x68] sm:$0xf] %v230
  %263 = vst [vmem:[%s2 + $0x6c] sm:$0xf] %v231
  %264 = vst [vmem:[%s2 + $0x70] sm:$0xf] %v232
  %265 = vst [vmem:[%s2 + $0x74] sm:$0xf] %v233
  %266 = vst [vmem:[%s2 + $0x78] sm:$0xf] %v234
  %267 = vst [vmem:[%s2 + $0x7c] sm:$0xf] %v235
  // Predicated region
  $region10: #{link_prediction_model.7} parent=0 // pred_check
    _
  $region11: #{link_prediction_model.7} parent=0 // pred_check_branch
    %269 = sbr.rel (0) target = $region13
  $region12: #{link_prediction_model.7} parent=0 // pred_region
    _
  $region13: #{link_prediction_model.7} parent=0 // pred_fallthru
    _
  // Predicated region
  $region14: #{link_prediction_model.7} parent=0 // pred_check
    _
  $region15: #{link_prediction_model.7} parent=0 // pred_check_branch
    %271 = sbr.rel (0) target = $region17
  $region16: #{link_prediction_model.7} parent=0 // pred_region
    _
  $region17: #{link_prediction_model.7} parent=0 // pred_fallthru
    _

// kernel: link_prediction_model.6
$region0: #{link_prediction_model.6}
  #allocation0 [shape = 'u32[]', space=smem, size = 0x4, offset = 0x4, fixed_abs, tag = 'smem constant byte address 0x4 - core index']
  #allocation1 [shape = 'u32[72,128]{1,0:T(1,128)}', space=vmem, size = 0x9000, scoped, tag = 'internal scratch']
  #allocation2 [shape = 'f32[256,128]{1,0:T(8,128)}', space=vmem, size = 0x20000, scoped, tag = 'scratch operand']
  %s0 = inlined_call_operand.vmem [shape: s8[256,256], index: 0, kind: input, shape index: {}]
  %s1 = inlined_call_operand.vmem [shape: bf16[256,128], index: 1, kind: input, shape index: {}]
  %s2 = inlined_call_operand.vmem [shape: f32[256,128], index: 2, kind: input, shape index: {}]
  %s3 = inlined_call_operand.vmem [shape: f32[128,128], index: 3, kind: input, shape index: {}]
  %s4 = inlined_call_operand.vmem [shape: f32[1,128], index: 4, kind: input, shape index: {}]
  %s5 = inlined_call_operand.vmem [shape: f32[256,1], index: 5, kind: input, shape index: {}]
  %s6 = inlined_call_operand.vmem [shape: bf16[256,128], index: 6, kind: output, shape index: {}]
  %s7 = sld [smem:[#allocation0]]
  $region42: #{link_prediction_model.6} parent=0
    _
  %s9 = ssub.s32 1, %s7
  %s10 = scalar_select 0, %s9, %s7
  // Predicated region
  $region2: #{link_prediction_model.6} parent=0 // pred_check
    _
  $region3: #{link_prediction_model.6} parent=0 // pred_check_branch
    %12 = sbr.rel (0) target = $region5
  $region4: #{link_prediction_model.6} parent=0 // pred_region
    _
  $region5: #{link_prediction_model.6} parent=0 // pred_fallthru
    _
  // Predicated region
  $region6: #{link_prediction_model.6} parent=0 // pred_check
    _
  $region7: #{link_prediction_model.6} parent=0 // pred_check_branch
    %14 = sbr.rel (0) target = $region9
  $region8: #{link_prediction_model.6} parent=0 // pred_region
    _
  $region9: #{link_prediction_model.6} parent=0 // pred_fallthru
    _
  // Predicated region
  $region10: #{link_prediction_model.6} parent=0 // pred_check
    _
  $region11: #{link_prediction_model.6} parent=0 // pred_check_branch
    %16 = sbr.rel (0) target = $region13
  $region12: #{link_prediction_model.6} parent=0 // pred_region
    _
  $region13: #{link_prediction_model.6} parent=0 // pred_fallthru
    _
  // Predicated region
  $region14: #{link_prediction_model.6} parent=0 // pred_check
    _
  $region15: #{link_prediction_model.6} parent=0 // pred_check_branch
    %18 = sbr.rel (0) target = $region17
  $region16: #{link_prediction_model.6} parent=0 // pred_region
    _
  $region17: #{link_prediction_model.6} parent=0 // pred_fallthru
    _
  // Predicated region
  $region18: #{link_prediction_model.6} parent=0 // pred_check
    _
  $region19: #{link_prediction_model.6} parent=0 // pred_check_branch
    %20 = sbr.rel (0) target = $region21
  $region20: #{link_prediction_model.6} parent=0 // pred_region
    _
  $region21: #{link_prediction_model.6} parent=0 // pred_fallthru
    _
  // Predicated region
  $region22: #{link_prediction_model.6} parent=0 // pred_check
    _
  $region23: #{link_prediction_model.6} parent=0 // pred_check_branch
    %22 = sbr.rel (0) target = $region25
  $region24: #{link_prediction_model.6} parent=0 // pred_region
    _
  $region25: #{link_prediction_model.6} parent=0 // pred_fallthru
    _
  %p23 = scmp.eq.s32.totalorder 0, 0
  // Predicated region
  $region26: #{link_prediction_model.6} parent=0 // pred_check
    %p24 = pneg %p23
  $region27: #{link_prediction_model.6} parent=0 // pred_check_branch
    %26 = sbr.rel (%p24) target = $region29
  $region28: #{link_prediction_model.6} parent=0 // pred_region
    %27 = vst [vmem:[#allocation2] sm:$0xff] 0.0
    %28 = vst [vmem:[#allocation2 + $0x8] sm:$0xff] 0.0
    %29 = vst [vmem:[#allocation2 + $0x10] sm:$0xff] 0.0
    %30 = vst [vmem:[#allocation2 + $0x18] sm:$0xff] 0.0
    %31 = vst [vmem:[#allocation2 + $0x20] sm:$0xff] 0.0
    %32 = vst [vmem:[#allocation2 + $0x28] sm:$0xff] 0.0
    %33 = vst [vmem:[#allocation2 + $0x30] sm:$0xff] 0.0
    %34 = vst [vmem:[#allocation2 + $0x38] sm:$0xff] 0.0
    %35 = vst [vmem:[#allocation2 + $0x40] sm:$0xff] 0.0
    %36 = vst [vmem:[#allocation2 + $0x48] sm:$0xff] 0.0
    %37 = vst [vmem:[#allocation2 + $0x50] sm:$0xff] 0.0
    %38 = vst [vmem:[#allocation2 + $0x58] sm:$0xff] 0.0
    %39 = vst [vmem:[#allocation2 + $0x60] sm:$0xff] 0.0
    %40 = vst [vmem:[#allocation2 + $0x68] sm:$0xff] 0.0
    %41 = vst [vmem:[#allocation2 + $0x70] sm:$0xff] 0.0
    %42 = vst [vmem:[#allocation2 + $0x78] sm:$0xff] 0.0
    %43 = vst [vmem:[#allocation2 + $0x80] sm:$0xff] 0.0
    %44 = vst [vmem:[#allocation2 + $0x88] sm:$0xff] 0.0
    %45 = vst [vmem:[#allocation2 + $0x90] sm:$0xff] 0.0
    %46 = vst [vmem:[#allocation2 + $0x98] sm:$0xff] 0.0
    %47 = vst [vmem:[#allocation2 + $0xa0] sm:$0xff] 0.0
    %48 = vst [vmem:[#allocation2 + $0xa8] sm:$0xff] 0.0
    %49 = vst [vmem:[#allocation2 + $0xb0] sm:$0xff] 0.0
    %50 = vst [vmem:[#allocation2 + $0xb8] sm:$0xff] 0.0
    %51 = vst [vmem:[#allocation2 + $0xc0] sm:$0xff] 0.0
    %52 = vst [vmem:[#allocation2 + $0xc8] sm:$0xff] 0.0
    %53 = vst [vmem:[#allocation2 + $0xd0] sm:$0xff] 0.0
    %54 = vst [vmem:[#allocation2 + $0xd8] sm:$0xff] 0.0
    %55 = vst [vmem:[#allocation2 + $0xe0] sm:$0xff] 0.0
    %56 = vst [vmem:[#allocation2 + $0xe8] sm:$0xff] 0.0
    %57 = vst [vmem:[#allocation2 + $0xf0] sm:$0xff] 0.0
    %58 = vst [vmem:[#allocation2 + $0xf8] sm:$0xff] 0.0
  $region29: #{link_prediction_model.6} parent=0 // pred_fallthru
    _
  %v59 = vld [vmem:[#allocation2] sm:$0xff]
  %v60 = vld [vmem:[#allocation2 + $0x8] sm:$0xff]
  %v61 = vld [vmem:[#allocation2 + $0x10] sm:$0xff]
  %v62 = vld [vmem:[#allocation2 + $0x18] sm:$0xff]
  %v63 = vld [vmem:[#allocation2 + $0x20] sm:$0xff]
  %v64 = vld [vmem:[#allocation2 + $0x28] sm:$0xff]
  %v65 = vld [vmem:[#allocation2 + $0x30] sm:$0xff]
  %v66 = vld [vmem:[#allocation2 + $0x38] sm:$0xff]
  %v67 = vld [vmem:[#allocation2 + $0x40] sm:$0xff]
  %v68 = vld [vmem:[#allocation2 + $0x48] sm:$0xff]
  %v69 = vld [vmem:[#allocation2 + $0x50] sm:$0xff]
  %v70 = vld [vmem:[#allocation2 + $0x58] sm:$0xff]
  %v71 = vld [vmem:[#allocation2 + $0x60] sm:$0xff]
  %v72 = vld [vmem:[#allocation2 + $0x68] sm:$0xff]
  %v73 = vld [vmem:[#allocation2 + $0x70] sm:$0xff]
  %v74 = vld [vmem:[#allocation2 + $0x78] sm:$0xff]
  %v75 = vld [vmem:[#allocation2 + $0x80] sm:$0xff]
  %v76 = vld [vmem:[#allocation2 + $0x88] sm:$0xff]
  %v77 = vld [vmem:[#allocation2 + $0x90] sm:$0xff]
  %v78 = vld [vmem:[#allocation2 + $0x98] sm:$0xff]
  %v79 = vld [vmem:[#allocation2 + $0xa0] sm:$0xff]
  %v80 = vld [vmem:[#allocation2 + $0xa8] sm:$0xff]
  %v81 = vld [vmem:[#allocation2 + $0xb0] sm:$0xff]
  %v82 = vld [vmem:[#allocation2 + $0xb8] sm:$0xff]
  %v83 = vld [vmem:[#allocation2 + $0xc0] sm:$0xff]
  %v84 = vld [vmem:[#allocation2 + $0xc8] sm:$0xff]
  %v85 = vld [vmem:[#allocation2 + $0xd0] sm:$0xff]
  %v86 = vld [vmem:[#allocation2 + $0xd8] sm:$0xff]
  %v87 = vld [vmem:[#allocation2 + $0xe0] sm:$0xff]
  %v88 = vld [vmem:[#allocation2 + $0xe8] sm:$0xff]
  %v89 = vld [vmem:[#allocation2 + $0xf0] sm:$0xff]
  %v90 = vld [vmem:[#allocation2 + $0xf8] sm:$0xff]
  %v91 = vld [vmem:[%s0] sm:$0xff]
  %v92 = vld [vmem:[%s0 + $0x8] sm:$0xff]
  %v93 = vld [vmem:[%s0 + $0x10] sm:$0xff]
  %v94 = vld [vmem:[%s0 + $0x18] sm:$0xff]
  %v95 = vld [vmem:[%s0 + $0x20] sm:$0xff]
  %v96 = vld [vmem:[%s0 + $0x28] sm:$0xff]
  %v97 = vld [vmem:[%s0 + $0x30] sm:$0xff]
  %v98 = vld [vmem:[%s0 + $0x38] sm:$0xff]
  %v99 = vld [vmem:[%s0 + $0x40] sm:$0xff]
  %v100 = vld [vmem:[%s0 + $0x48] sm:$0xff]
  %v101 = vld [vmem:[%s0 + $0x50] sm:$0xff]
  %v102 = vld [vmem:[%s0 + $0x58] sm:$0xff]
  %v103 = vld [vmem:[%s0 + $0x60] sm:$0xff]
  %v104 = vld [vmem:[%s0 + $0x68] sm:$0xff]
  %v105 = vld [vmem:[%s0 + $0x70] sm:$0xff]
  %v106 = vld [vmem:[%s0 + $0x78] sm:$0xff]
  %v107 = vunpack.c.0.s8 %v91
  %v108 = vunpack.c.0.s8 %v92
  %v109 = vunpack.c.1.s8 %v91
  %v110 = vunpack.c.1.s8 %v92
  %v111 = vunpack.c.2.s8 %v91
  %v112 = vunpack.c.2.s8 %v92
  %v113 = vunpack.c.3.s8 %v91
  %v114 = vunpack.c.3.s8 %v92
  %v115 = vunpack.c.0.s8 %v93
  %v116 = vunpack.c.0.s8 %v94
  %v117 = vunpack.c.1.s8 %v93
  %v118 = vunpack.c.1.s8 %v94
  %v119 = vunpack.c.2.s8 %v93
  %v120 = vunpack.c.2.s8 %v94
  %v121 = vunpack.c.3.s8 %v93
  %v122 = vunpack.c.3.s8 %v94
  %v123 = vunpack.c.0.s8 %v95
  %v124 = vunpack.c.0.s8 %v96
  %v125 = vunpack.c.1.s8 %v95
  %v126 = vunpack.c.1.s8 %v96
  %v127 = vunpack.c.2.s8 %v95
  %v128 = vunpack.c.2.s8 %v96
  %v129 = vunpack.c.3.s8 %v95
  %v130 = vunpack.c.3.s8 %v96
  %v131 = vunpack.c.0.s8 %v97
  %v132 = vunpack.c.0.s8 %v98
  %v133 = vunpack.c.1.s8 %v97
  %v134 = vunpack.c.1.s8 %v98
  %v135 = vunpack.c.2.s8 %v97
  %v136 = vunpack.c.2.s8 %v98
  %v137 = vunpack.c.3.s8 %v97
  %v138 = vunpack.c.3.s8 %v98
  %v139 = vunpack.c.0.s8 %v99
  %v140 = vunpack.c.0.s8 %v100
  %v141 = vunpack.c.1.s8 %v99
  %v142 = vunpack.c.1.s8 %v100
  %v143 = vunpack.c.2.s8 %v99
  %v144 = vunpack.c.2.s8 %v100
  %v145 = vunpack.c.3.s8 %v99
  %v146 = vunpack.c.3.s8 %v100
  %v147 = vunpack.c.0.s8 %v101
  %v148 = vunpack.c.0.s8 %v102
  %v149 = vunpack.c.1.s8 %v101
  %v150 = vunpack.c.1.s8 %v102
  %v151 = vunpack.c.2.s8 %v101
  %v152 = vunpack.c.2.s8 %v102
  %v153 = vunpack.c.3.s8 %v101
  %v154 = vunpack.c.3.s8 %v102
  %v155 = vunpack.c.0.s8 %v103
  %v156 = vunpack.c.0.s8 %v104
  %v157 = vunpack.c.1.s8 %v103
  %v158 = vunpack.c.1.s8 %v104
  %v159 = vunpack.c.2.s8 %v103
  %v160 = vunpack.c.2.s8 %v104
  %v161 = vunpack.c.3.s8 %v103
  %v162 = vunpack.c.3.s8 %v104
  %v163 = vunpack.c.0.s8 %v105
  %v164 = vunpack.c.0.s8 %v106
  %v165 = vunpack.c.1.s8 %v105
  %v166 = vunpack.c.1.s8 %v106
  %v167 = vunpack.c.2.s8 %v105
  %v168 = vunpack.c.2.s8 %v106
  %v169 = vunpack.c.3.s8 %v105
  %v170 = vunpack.c.3.s8 %v106
  %v171 = vcvt.s32.f32 %v107
  %v172 = vcvt.s32.f32 %v108
  %v173 = vcvt.s32.f32 %v109
  %v174 = vcvt.s32.f32 %v110
  %v175 = vcvt.s32.f32 %v111
  %v176 = vcvt.s32.f32 %v112
  %v177 = vcvt.s32.f32 %v113
  %v178 = vcvt.s32.f32 %v114
  %v179 = vcvt.s32.f32 %v115
  %v180 = vcvt.s32.f32 %v116
  %v181 = vcvt.s32.f32 %v117
  %v182 = vcvt.s32.f32 %v118
  %v183 = vcvt.s32.f32 %v119
  %v184 = vcvt.s32.f32 %v120
  %v185 = vcvt.s32.f32 %v121
  %v186 = vcvt.s32.f32 %v122
  %v187 = vcvt.s32.f32 %v123
  %v188 = vcvt.s32.f32 %v124
  %v189 = vcvt.s32.f32 %v125
  %v190 = vcvt.s32.f32 %v126
  %v191 = vcvt.s32.f32 %v127
  %v192 = vcvt.s32.f32 %v128
  %v193 = vcvt.s32.f32 %v129
  %v194 = vcvt.s32.f32 %v130
  %v195 = vcvt.s32.f32 %v131
  %v196 = vcvt.s32.f32 %v132
  %v197 = vcvt.s32.f32 %v133
  %v198 = vcvt.s32.f32 %v134
  %v199 = vcvt.s32.f32 %v135
  %v200 = vcvt.s32.f32 %v136
  %v201 = vcvt.s32.f32 %v137
  %v202 = vcvt.s32.f32 %v138
  %v203 = vcvt.s32.f32 %v139
  %v204 = vcvt.s32.f32 %v140
  %v205 = vcvt.s32.f32 %v141
  %v206 = vcvt.s32.f32 %v142
  %v207 = vcvt.s32.f32 %v143
  %v208 = vcvt.s32.f32 %v144
  %v209 = vcvt.s32.f32 %v145
  %v210 = vcvt.s32.f32 %v146
  %v211 = vcvt.s32.f32 %v147
  %v212 = vcvt.s32.f32 %v148
  %v213 = vcvt.s32.f32 %v149
  %v214 = vcvt.s32.f32 %v150
  %v215 = vcvt.s32.f32 %v151
  %v216 = vcvt.s32.f32 %v152
  %v217 = vcvt.s32.f32 %v153
  %v218 = vcvt.s32.f32 %v154
  %v219 = vcvt.s32.f32 %v155
  %v220 = vcvt.s32.f32 %v156
  %v221 = vcvt.s32.f32 %v157
  %v222 = vcvt.s32.f32 %v158
  %v223 = vcvt.s32.f32 %v159
  %v224 = vcvt.s32.f32 %v160
  %v225 = vcvt.s32.f32 %v161
  %v226 = vcvt.s32.f32 %v162
  %v227 = vcvt.s32.f32 %v163
  %v228 = vcvt.s32.f32 %v164
  %v229 = vcvt.s32.f32 %v165
  %v230 = vcvt.s32.f32 %v166
  %v231 = vcvt.s32.f32 %v167
  %v232 = vcvt.s32.f32 %v168
  %v233 = vcvt.s32.f32 %v169
  %v234 = vcvt.s32.f32 %v170
  %v235 = vpack.c.bf16 %v173, %v171
  %v236 = vpack.c.bf16 %v174, %v172
  %v237 = vpack.c.bf16 %v177, %v175
  %v238 = vpack.c.bf16 %v178, %v176
  %v239 = vpack.c.bf16 %v181, %v179
  %v240 = vpack.c.bf16 %v182, %v180
  %v241 = vpack.c.bf16 %v185, %v183
  %v242 = vpack.c.bf16 %v186, %v184
  %v243 = vpack.c.bf16 %v189, %v187
  %v244 = vpack.c.bf16 %v190, %v188
  %v245 = vpack.c.bf16 %v193, %v191
  %v246 = vpack.c.bf16 %v194, %v192
  %v247 = vpack.c.bf16 %v197, %v195
  %v248 = vpack.c.bf16 %v198, %v196
  %v249 = vpack.c.bf16 %v201, %v199
  %v250 = vpack.c.bf16 %v202, %v200
  %v251 = vpack.c.bf16 %v205, %v203
  %v252 = vpack.c.bf16 %v206, %v204
  %v253 = vpack.c.bf16 %v209, %v207
  %v254 = vpack.c.bf16 %v210, %v208
  %v255 = vpack.c.bf16 %v213, %v211
  %v256 = vpack.c.bf16 %v214, %v212
  %v257 = vpack.c.bf16 %v217, %v215
  %v258 = vpack.c.bf16 %v218, %v216
  %v259 = vpack.c.bf16 %v221, %v219
  %v260 = vpack.c.bf16 %v222, %v220
  %v261 = vpack.c.bf16 %v225, %v223
  %v262 = vpack.c.bf16 %v226, %v224
  %v263 = vpack.c.bf16 %v229, %v227
  %v264 = vpack.c.bf16 %v230, %v228
  %v265 = vpack.c.bf16 %v233, %v231
  %v266 = vpack.c.bf16 %v234, %v232
  %v267 = vld [vmem:[%s1] sm:$0xf]
  %v268 = vld [vmem:[%s1 + $0x4] sm:$0xf]
  %v269 = vld [vmem:[%s1 + $0x8] sm:$0xf]
  %v270 = vld [vmem:[%s1 + $0xc] sm:$0xf]
  %v271 = vld [vmem:[%s1 + $0x10] sm:$0xf]
  %v272 = vld [vmem:[%s1 + $0x14] sm:$0xf]
  %v273 = vld [vmem:[%s1 + $0x18] sm:$0xf]
  %v274 = vld [vmem:[%s1 + $0x1c] sm:$0xf]
  %v275 = vld [vmem:[%s1 + $0x20] sm:$0xf]
  %v276 = vld [vmem:[%s1 + $0x24] sm:$0xf]
  %v277 = vld [vmem:[%s1 + $0x28] sm:$0xf]
  %v278 = vld [vmem:[%s1 + $0x2c] sm:$0xf]
  %v279 = vld [vmem:[%s1 + $0x30] sm:$0xf]
  %v280 = vld [vmem:[%s1 + $0x34] sm:$0xf]
  %v281 = vld [vmem:[%s1 + $0x38] sm:$0xf]
  %v282 = vld [vmem:[%s1 + $0x3c] sm:$0xf]
  %v283 = vld [vmem:[%s1 + $0x40] sm:$0xf]
  %v284 = vld [vmem:[%s1 + $0x44] sm:$0xf]
  %v285 = vld [vmem:[%s1 + $0x48] sm:$0xf]
  %v286 = vld [vmem:[%s1 + $0x4c] sm:$0xf]
  %v287 = vld [vmem:[%s1 + $0x50] sm:$0xf]
  %v288 = vld [vmem:[%s1 + $0x54] sm:$0xf]
  %v289 = vld [vmem:[%s1 + $0x58] sm:$0xf]
  %v290 = vld [vmem:[%s1 + $0x5c] sm:$0xf]
  %v291 = vld [vmem:[%s1 + $0x60] sm:$0xf]
  %v292 = vld [vmem:[%s1 + $0x64] sm:$0xf]
  %v293 = vld [vmem:[%s1 + $0x68] sm:$0xf]
  %v294 = vld [vmem:[%s1 + $0x6c] sm:$0xf]
  %v295 = vld [vmem:[%s1 + $0x70] sm:$0xf]
  %v296 = vld [vmem:[%s1 + $0x74] sm:$0xf]
  %v297 = vld [vmem:[%s1 + $0x78] sm:$0xf]
  %v298 = vld [vmem:[%s1 + $0x7c] sm:$0xf]
  %v331 = vunpack.c.l.b16 %v267
  %v332 = vunpack.c.l.b16 %v268
  %v333 = vunpack.c.l.b16 %v269
  %v334 = vunpack.c.l.b16 %v270
  %v335 = vunpack.c.l.b16 %v271
  %v336 = vunpack.c.l.b16 %v272
  %v337 = vunpack.c.l.b16 %v273
  %v338 = vunpack.c.l.b16 %v274
  %v339 = vunpack.c.l.b16 %v275
  %v340 = vunpack.c.l.b16 %v276
  %v341 = vunpack.c.l.b16 %v277
  %v342 = vunpack.c.l.b16 %v278
  %v343 = vunpack.c.l.b16 %v279
  %v344 = vunpack.c.l.b16 %v280
  %v345 = vunpack.c.l.b16 %v281
  %v346 = vunpack.c.l.b16 %v282
  %v347 = vunpack.c.l.b16 %v283
  %v348 = vunpack.c.l.b16 %v284
  %v349 = vunpack.c.l.b16 %v285
  %v350 = vunpack.c.l.b16 %v286
  %v351 = vunpack.c.l.b16 %v287
  %v352 = vunpack.c.l.b16 %v288
  %v353 = vunpack.c.l.b16 %v289
  %v354 = vunpack.c.l.b16 %v290
  %v355 = vunpack.c.l.b16 %v291
  %v356 = vunpack.c.l.b16 %v292
  %v357 = vunpack.c.l.b16 %v293
  %v358 = vunpack.c.l.b16 %v294
  %v359 = vunpack.c.l.b16 %v295
  %v360 = vunpack.c.l.b16 %v296
  %v361 = vunpack.c.l.b16 %v297
  %v362 = vunpack.c.l.b16 %v298
  %v363 = vpack.c.b16 %v332, %v331
  %v364 = vpack.c.b16 %v334, %v333
  %v365 = vpack.c.b16 %v336, %v335
  %v366 = vpack.c.b16 %v338, %v337
  %v367 = vpack.c.b16 %v340, %v339
  %v368 = vpack.c.b16 %v342, %v341
  %v369 = vpack.c.b16 %v344, %v343
  %v370 = vpack.c.b16 %v346, %v345
  %v371 = vpack.c.b16 %v348, %v347
  %v372 = vpack.c.b16 %v350, %v349
  %v373 = vpack.c.b16 %v352, %v351
  %v374 = vpack.c.b16 %v354, %v353
  %v375 = vpack.c.b16 %v356, %v355
  %v376 = vpack.c.b16 %v358, %v357
  %v377 = vpack.c.b16 %v360, %v359
  %v378 = vpack.c.b16 %v362, %v361
  %395 = vmatpush.bf16.msra.mxu0 %v370
  %396 = vmatpush.bf16.msra.mxu0 %v369
  %397 = vmatpush.bf16.msra.mxu0 %v368
  %398 = vmatpush.bf16.msra.mxu0 %v367
  %399 = vmatpush.bf16.msra.mxu0 %v366
  %400 = vmatpush.bf16.msra.mxu0 %v365
  %401 = vmatpush.bf16.msra.mxu0 %v364
  %402 = vmatpush.bf16.msra.mxu0 %v363
  %403 = vmatmul.bf16.gmra.mxu0 %v235
  %v404 = vpop.f32.mrf.mxu0
  %v405 = vadd.f32 0.0, %v404
  %v406 = vpop.f32.mrf.mxu0
  %v407 = vadd.f32 0.0, %v406
  %408 = vmatmul.bf16.gmra.mxu0 %v237
  %v409 = vpop.f32.mrf.mxu0
  %v410 = vadd.f32 0.0, %v409
  %v411 = vpop.f32.mrf.mxu0
  %v412 = vadd.f32 0.0, %v411
  %413 = vmatmul.bf16.gmra.mxu0 %v239
  %v414 = vpop.f32.mrf.mxu0
  %v415 = vadd.f32 0.0, %v414
  %v416 = vpop.f32.mrf.mxu0
  %v417 = vadd.f32 0.0, %v416
  %418 = vmatmul.bf16.gmra.mxu0 %v241
  %v419 = vpop.f32.mrf.mxu0
  %v420 = vadd.f32 0.0, %v419
  %v421 = vpop.f32.mrf.mxu0
  %v422 = vadd.f32 0.0, %v421
  %423 = vmatmul.bf16.gmra.mxu0 %v243
  %v424 = vpop.f32.mrf.mxu0
  %v425 = vadd.f32 0.0, %v424
  %v426 = vpop.f32.mrf.mxu0
  %v427 = vadd.f32 0.0, %v426
  %428 = vmatmul.bf16.gmra.mxu0 %v245
  %v429 = vpop.f32.mrf.mxu0
  %v430 = vadd.f32 0.0, %v429
  %v431 = vpop.f32.mrf.mxu0
  %v432 = vadd.f32 0.0, %v431
  %433 = vmatmul.bf16.gmra.mxu0 %v247
  %v434 = vpop.f32.mrf.mxu0
  %v435 = vadd.f32 0.0, %v434
  %v436 = vpop.f32.mrf.mxu0
  %v437 = vadd.f32 0.0, %v436
  %438 = vmatmul.bf16.gmra.mxu0 %v249
  %v439 = vpop.f32.mrf.mxu0
  %v440 = vadd.f32 0.0, %v439
  %v441 = vpop.f32.mrf.mxu0
  %v442 = vadd.f32 0.0, %v441
  %443 = vmatmul.bf16.gmra.mxu0 %v251
  %v444 = vpop.f32.mrf.mxu0
  %v445 = vadd.f32 0.0, %v444
  %v446 = vpop.f32.mrf.mxu0
  %v447 = vadd.f32 0.0, %v446
  %448 = vmatmul.bf16.gmra.mxu0 %v253
  %v449 = vpop.f32.mrf.mxu0
  %v450 = vadd.f32 0.0, %v449
  %v451 = vpop.f32.mrf.mxu0
  %v452 = vadd.f32 0.0, %v451
  %453 = vmatmul.bf16.gmra.mxu0 %v255
  %v454 = vpop.f32.mrf.mxu0
  %v455 = vadd.f32 0.0, %v454
  %v456 = vpop.f32.mrf.mxu0
  %v457 = vadd.f32 0.0, %v456
  %458 = vmatmul.bf16.gmra.mxu0 %v257
  %v459 = vpop.f32.mrf.mxu0
  %v460 = vadd.f32 0.0, %v459
  %v461 = vpop.f32.mrf.mxu0
  %v462 = vadd.f32 0.0, %v461
  %463 = vmatmul.bf16.gmra.mxu0 %v259
  %v464 = vpop.f32.mrf.mxu0
  %v465 = vadd.f32 0.0, %v464
  %v466 = vpop.f32.mrf.mxu0
  %v467 = vadd.f32 0.0, %v466
  %468 = vmatmul.bf16.gmra.mxu0 %v261
  %v469 = vpop.f32.mrf.mxu0
  %v470 = vadd.f32 0.0, %v469
  %v471 = vpop.f32.mrf.mxu0
  %v472 = vadd.f32 0.0, %v471
  %473 = vmatmul.bf16.gmra.mxu0 %v263
  %v474 = vpop.f32.mrf.mxu0
  %v475 = vadd.f32 0.0, %v474
  %v476 = vpop.f32.mrf.mxu0
  %v477 = vadd.f32 0.0, %v476
  %478 = vmatmul.bf16.gmra.mxu0 %v265
  %v479 = vpop.f32.mrf.mxu0
  %v480 = vadd.f32 0.0, %v479
  %v481 = vpop.f32.mrf.mxu0
  %v482 = vadd.f32 0.0, %v481
  %483 = vdwg.mxu0
  %484 = vmatpush.bf16.msra.mxu0 %v378
  %485 = vmatpush.bf16.msra.mxu0 %v377
  %486 = vmatpush.bf16.msra.mxu0 %v376
  %487 = vmatpush.bf16.msra.mxu0 %v375
  %488 = vmatpush.bf16.msra.mxu0 %v374
  %489 = vmatpush.bf16.msra.mxu0 %v373
  %490 = vmatpush.bf16.msra.mxu0 %v372
  %491 = vmatpush.bf16.msra.mxu0 %v371
  %492 = vmatmul.bf16.gmra.mxu0 %v236
  %v493 = vpop.f32.mrf.mxu0
  %v494 = vadd.f32 %v405, %v493
  %v495 = vpop.f32.mrf.mxu0
  %v496 = vadd.f32 %v407, %v495
  %497 = vmatmul.bf16.gmra.mxu0 %v238
  %v498 = vpop.f32.mrf.mxu0
  %v499 = vadd.f32 %v410, %v498
  %v500 = vpop.f32.mrf.mxu0
  %v501 = vadd.f32 %v412, %v500
  %502 = vmatmul.bf16.gmra.mxu0 %v240
  %v503 = vpop.f32.mrf.mxu0
  %v504 = vadd.f32 %v415, %v503
  %v505 = vpop.f32.mrf.mxu0
  %v506 = vadd.f32 %v417, %v505
  %507 = vmatmul.bf16.gmra.mxu0 %v242
  %v508 = vpop.f32.mrf.mxu0
  %v509 = vadd.f32 %v420, %v508
  %v510 = vpop.f32.mrf.mxu0
  %v511 = vadd.f32 %v422, %v510
  %512 = vmatmul.bf16.gmra.mxu0 %v244
  %v513 = vpop.f32.mrf.mxu0
  %v514 = vadd.f32 %v425, %v513
  %v515 = vpop.f32.mrf.mxu0
  %v516 = vadd.f32 %v427, %v515
  %517 = vmatmul.bf16.gmra.mxu0 %v246
  %v518 = vpop.f32.mrf.mxu0
  %v519 = vadd.f32 %v430, %v518
  %v520 = vpop.f32.mrf.mxu0
  %v521 = vadd.f32 %v432, %v520
  %522 = vmatmul.bf16.gmra.mxu0 %v248
  %v523 = vpop.f32.mrf.mxu0
  %v524 = vadd.f32 %v435, %v523
  %v525 = vpop.f32.mrf.mxu0
  %v526 = vadd.f32 %v437, %v525
  %527 = vmatmul.bf16.gmra.mxu0 %v250
  %v528 = vpop.f32.mrf.mxu0
  %v529 = vadd.f32 %v440, %v528
  %v530 = vpop.f32.mrf.mxu0
  %v531 = vadd.f32 %v442, %v530
  %532 = vmatmul.bf16.gmra.mxu0 %v252
  %v533 = vpop.f32.mrf.mxu0
  %v534 = vadd.f32 %v445, %v533
  %v535 = vpop.f32.mrf.mxu0
  %v536 = vadd.f32 %v447, %v535
  %537 = vmatmul.bf16.gmra.mxu0 %v254
  %v538 = vpop.f32.mrf.mxu0
  %v539 = vadd.f32 %v450, %v538
  %v540 = vpop.f32.mrf.mxu0
  %v541 = vadd.f32 %v452, %v540
  %542 = vmatmul.bf16.gmra.mxu0 %v256
  %v543 = vpop.f32.mrf.mxu0
  %v544 = vadd.f32 %v455, %v543
  %v545 = vpop.f32.mrf.mxu0
  %v546 = vadd.f32 %v457, %v545
  %547 = vmatmul.bf16.gmra.mxu0 %v258
  %v548 = vpop.f32.mrf.mxu0
  %v549 = vadd.f32 %v460, %v548
  %v550 = vpop.f32.mrf.mxu0
  %v551 = vadd.f32 %v462, %v550
  %552 = vmatmul.bf16.gmra.mxu0 %v260
  %v553 = vpop.f32.mrf.mxu0
  %v554 = vadd.f32 %v465, %v553
  %v555 = vpop.f32.mrf.mxu0
  %v556 = vadd.f32 %v467, %v555
  %557 = vmatmul.bf16.gmra.mxu0 %v262
  %v558 = vpop.f32.mrf.mxu0
  %v559 = vadd.f32 %v470, %v558
  %v560 = vpop.f32.mrf.mxu0
  %v561 = vadd.f32 %v472, %v560
  %562 = vmatmul.bf16.gmra.mxu0 %v264
  %v563 = vpop.f32.mrf.mxu0
  %v564 = vadd.f32 %v475, %v563
  %v565 = vpop.f32.mrf.mxu0
  %v566 = vadd.f32 %v477, %v565
  %567 = vmatmul.bf16.gmra.mxu0 %v266
  %v568 = vpop.f32.mrf.mxu0
  %v569 = vadd.f32 %v480, %v568
  %v570 = vpop.f32.mrf.mxu0
  %v571 = vadd.f32 %v482, %v570
  %572 = vdwg.mxu0
  %v573 = vadd.f32 %v59, %v494
  %v574 = vadd.f32 %v60, %v496
  %v575 = vadd.f32 %v61, %v499
  %v576 = vadd.f32 %v62, %v501
  %v577 = vadd.f32 %v63, %v504
  %v578 = vadd.f32 %v64, %v506
  %v579 = vadd.f32 %v65, %v509
  %v580 = vadd.f32 %v66, %v511
  %v581 = vadd.f32 %v67, %v514
  %v582 = vadd.f32 %v68, %v516
  %v583 = vadd.f32 %v69, %v519
  %v584 = vadd.f32 %v70, %v521
  %v585 = vadd.f32 %v71, %v524
  %v586 = vadd.f32 %v72, %v526
  %v587 = vadd.f32 %v73, %v529
  %v588 = vadd.f32 %v74, %v531
  %v589 = vadd.f32 %v75, %v534
  %v590 = vadd.f32 %v76, %v536
  %v591 = vadd.f32 %v77, %v539
  %v592 = vadd.f32 %v78, %v541
  %v593 = vadd.f32 %v79, %v544
  %v594 = vadd.f32 %v80, %v546
  %v595 = vadd.f32 %v81, %v549
  %v596 = vadd.f32 %v82, %v551
  %v597 = vadd.f32 %v83, %v554
  %v598 = vadd.f32 %v84, %v556
  %v599 = vadd.f32 %v85, %v559
  %v600 = vadd.f32 %v86, %v561
  %v601 = vadd.f32 %v87, %v564
  %v602 = vadd.f32 %v88, %v566
  %v603 = vadd.f32 %v89, %v569
  %v604 = vadd.f32 %v90, %v571
  %605 = vst [vmem:[#allocation2] sm:$0xff] %v573
  %606 = vst [vmem:[#allocation2 + $0x8] sm:$0xff] %v574
  %607 = vst [vmem:[#allocation2 + $0x10] sm:$0xff] %v575
  %608 = vst [vmem:[#allocation2 + $0x18] sm:$0xff] %v576
  %609 = vst [vmem:[#allocation2 + $0x20] sm:$0xff] %v577
  %610 = vst [vmem:[#allocation2 + $0x28] sm:$0xff] %v578
  %611 = vst [vmem:[#allocation2 + $0x30] sm:$0xff] %v579
  %612 = vst [vmem:[#allocation2 + $0x38] sm:$0xff] %v580
  %613 = vst [vmem:[#allocation2 + $0x40] sm:$0xff] %v581
  %614 = vst [vmem:[#allocation2 + $0x48] sm:$0xff] %v582
  %615 = vst [vmem:[#allocation2 + $0x50] sm:$0xff] %v583
  %616 = vst [vmem:[#allocation2 + $0x58] sm:$0xff] %v584
  %617 = vst [vmem:[#allocation2 + $0x60] sm:$0xff] %v585
  %618 = vst [vmem:[#allocation2 + $0x68] sm:$0xff] %v586
  %619 = vst [vmem:[#allocation2 + $0x70] sm:$0xff] %v587
  %620 = vst [vmem:[#allocation2 + $0x78] sm:$0xff] %v588
  %621 = vst [vmem:[#allocation2 + $0x80] sm:$0xff] %v589
  %622 = vst [vmem:[#allocation2 + $0x88] sm:$0xff] %v590
  %623 = vst [vmem:[#allocation2 + $0x90] sm:$0xff] %v591
  %624 = vst [vmem:[#allocation2 + $0x98] sm:$0xff] %v592
  %625 = vst [vmem:[#allocation2 + $0xa0] sm:$0xff] %v593
  %626 = vst [vmem:[#allocation2 + $0xa8] sm:$0xff] %v594
  %627 = vst [vmem:[#allocation2 + $0xb0] sm:$0xff] %v595
  %628 = vst [vmem:[#allocation2 + $0xb8] sm:$0xff] %v596
  %629 = vst [vmem:[#allocation2 + $0xc0] sm:$0xff] %v597
  %630 = vst [vmem:[#allocation2 + $0xc8] sm:$0xff] %v598
  %631 = vst [vmem:[#allocation2 + $0xd0] sm:$0xff] %v599
  %632 = vst [vmem:[#allocation2 + $0xd8] sm:$0xff] %v600
  %633 = vst [vmem:[#allocation2 + $0xe0] sm:$0xff] %v601
  %634 = vst [vmem:[#allocation2 + $0xe8] sm:$0xff] %v602
  %635 = vst [vmem:[#allocation2 + $0xf0] sm:$0xff] %v603
  %636 = vst [vmem:[#allocation2 + $0xf8] sm:$0xff] %v604
  // Predicated region
  $region30: #{link_prediction_model.6} parent=0 // pred_check
    %p637 = pneg %p23
  $region31: #{link_prediction_model.6} parent=0 // pred_check_branch
    %639 = sbr.rel (%p637) target = $region33
  $region32: #{link_prediction_model.6} parent=0 // pred_region
    %v640 = vld [vmem:[%s2] sm:$0xff]
    %v641 = vld [vmem:[%s2 + $0x8] sm:$0xff]
    %v642 = vld [vmem:[%s2 + $0x10] sm:$0xff]
    %v643 = vld [vmem:[%s2 + $0x18] sm:$0xff]
    %v644 = vld [vmem:[%s2 + $0x20] sm:$0xff]
    %v645 = vld [vmem:[%s2 + $0x28] sm:$0xff]
    %v646 = vld [vmem:[%s2 + $0x30] sm:$0xff]
    %v647 = vld [vmem:[%s2 + $0x38] sm:$0xff]
    %v648 = vld [vmem:[%s2 + $0x40] sm:$0xff]
    %v649 = vld [vmem:[%s2 + $0x48] sm:$0xff]
    %v650 = vld [vmem:[%s2 + $0x50] sm:$0xff]
    %v651 = vld [vmem:[%s2 + $0x58] sm:$0xff]
    %v652 = vld [vmem:[%s2 + $0x60] sm:$0xff]
    %v653 = vld [vmem:[%s2 + $0x68] sm:$0xff]
    %v654 = vld [vmem:[%s2 + $0x70] sm:$0xff]
    %v655 = vld [vmem:[%s2 + $0x78] sm:$0xff]
    %v656 = vld [vmem:[%s2 + $0x80] sm:$0xff]
    %v657 = vld [vmem:[%s2 + $0x88] sm:$0xff]
    %v658 = vld [vmem:[%s2 + $0x90] sm:$0xff]
    %v659 = vld [vmem:[%s2 + $0x98] sm:$0xff]
    %v660 = vld [vmem:[%s2 + $0xa0] sm:$0xff]
    %v661 = vld [vmem:[%s2 + $0xa8] sm:$0xff]
    %v662 = vld [vmem:[%s2 + $0xb0] sm:$0xff]
    %v663 = vld [vmem:[%s2 + $0xb8] sm:$0xff]
    %v664 = vld [vmem:[%s2 + $0xc0] sm:$0xff]
    %v665 = vld [vmem:[%s2 + $0xc8] sm:$0xff]
    %v666 = vld [vmem:[%s2 + $0xd0] sm:$0xff]
    %v667 = vld [vmem:[%s2 + $0xd8] sm:$0xff]
    %v668 = vld [vmem:[%s2 + $0xe0] sm:$0xff]
    %v669 = vld [vmem:[%s2 + $0xe8] sm:$0xff]
    %v670 = vld [vmem:[%s2 + $0xf0] sm:$0xff]
    %v671 = vld [vmem:[%s2 + $0xf8] sm:$0xff]
    %v672 = vld [vmem:[%s3] sm:$0xff]
    %v673 = vld [vmem:[%s3 + $0x8] sm:$0xff]
    %v674 = vld [vmem:[%s3 + $0x10] sm:$0xff]
    %v675 = vld [vmem:[%s3 + $0x18] sm:$0xff]
    %v676 = vld [vmem:[%s3 + $0x20] sm:$0xff]
    %v677 = vld [vmem:[%s3 + $0x28] sm:$0xff]
    %v678 = vld [vmem:[%s3 + $0x30] sm:$0xff]
    %v679 = vld [vmem:[%s3 + $0x38] sm:$0xff]
    %v680 = vld [vmem:[%s3 + $0x40] sm:$0xff]
    %v681 = vld [vmem:[%s3 + $0x48] sm:$0xff]
    %v682 = vld [vmem:[%s3 + $0x50] sm:$0xff]
    %v683 = vld [vmem:[%s3 + $0x58] sm:$0xff]
    %v684 = vld [vmem:[%s3 + $0x60] sm:$0xff]
    %v685 = vld [vmem:[%s3 + $0x68] sm:$0xff]
    %v686 = vld [vmem:[%s3 + $0x70] sm:$0xff]
    %v687 = vld [vmem:[%s3 + $0x78] sm:$0xff]
    %v688 = vld [vmem:[%s4] sm:$0x1]
    %v690 = vperm.slane %v688, 0
    %692 = vmatpush.msra.mxu0 %v687
    %693 = vmatpush.msra.mxu0 %v686
    %694 = vmatpush.msra.mxu0 %v685
    %695 = vmatpush.msra.mxu0 %v684
    %696 = vmatpush.msra.mxu0 %v683
    %697 = vmatpush.msra.mxu0 %v682
    %698 = vmatpush.msra.mxu0 %v681
    %699 = vmatpush.msra.mxu0 %v680
    %700 = vmatpush.msra.mxu0 %v679
    %701 = vmatpush.msra.mxu0 %v678
    %702 = vmatpush.msra.mxu0 %v677
    %703 = vmatpush.msra.mxu0 %v676
    %704 = vmatpush.msra.mxu0 %v675
    %705 = vmatpush.msra.mxu0 %v674
    %706 = vmatpush.msra.mxu0 %v673
    %707 = vmatpush.msra.mxu0 %v672
    %708 = vmatmul.f32.gmra.mxu0 %v640
    %v709 = vpop.f32.mrf.mxu0
    %v710 = vadd.f32 %v690, %v709
    %711 = vmatmul.f32.gmra.mxu0 %v641
    %v712 = vpop.f32.mrf.mxu0
    %v713 = vadd.f32 %v690, %v712
    %714 = vmatmul.f32.gmra.mxu0 %v642
    %v715 = vpop.f32.mrf.mxu0
    %v716 = vadd.f32 %v690, %v715
    %717 = vmatmul.f32.gmra.mxu0 %v643
    %v718 = vpop.f32.mrf.mxu0
    %v719 = vadd.f32 %v690, %v718
    %720 = vmatmul.f32.gmra.mxu0 %v644
    %v721 = vpop.f32.mrf.mxu0
    %v722 = vadd.f32 %v690, %v721
    %723 = vmatmul.f32.gmra.mxu0 %v645
    %v724 = vpop.f32.mrf.mxu0
    %v725 = vadd.f32 %v690, %v724
    %726 = vmatmul.f32.gmra.mxu0 %v646
    %v727 = vpop.f32.mrf.mxu0
    %v728 = vadd.f32 %v690, %v727
    %729 = vmatmul.f32.gmra.mxu0 %v647
    %v730 = vpop.f32.mrf.mxu0
    %v731 = vadd.f32 %v690, %v730
    %732 = vmatmul.f32.gmra.mxu0 %v648
    %v733 = vpop.f32.mrf.mxu0
    %v734 = vadd.f32 %v690, %v733
    %735 = vmatmul.f32.gmra.mxu0 %v649
    %v736 = vpop.f32.mrf.mxu0
    %v737 = vadd.f32 %v690, %v736
    %738 = vmatmul.f32.gmra.mxu0 %v650
    %v739 = vpop.f32.mrf.mxu0
    %v740 = vadd.f32 %v690, %v739
    %741 = vmatmul.f32.gmra.mxu0 %v651
    %v742 = vpop.f32.mrf.mxu0
    %v743 = vadd.f32 %v690, %v742
    %744 = vmatmul.f32.gmra.mxu0 %v652
    %v745 = vpop.f32.mrf.mxu0
    %v746 = vadd.f32 %v690, %v745
    %747 = vmatmul.f32.gmra.mxu0 %v653
    %v748 = vpop.f32.mrf.mxu0
    %v749 = vadd.f32 %v690, %v748
    %750 = vmatmul.f32.gmra.mxu0 %v654
    %v751 = vpop.f32.mrf.mxu0
    %v752 = vadd.f32 %v690, %v751
    %753 = vmatmul.f32.gmra.mxu0 %v655
    %v754 = vpop.f32.mrf.mxu0
    %v755 = vadd.f32 %v690, %v754
    %756 = vmatmul.f32.gmra.mxu0 %v656
    %v757 = vpop.f32.mrf.mxu0
    %v758 = vadd.f32 %v690, %v757
    %759 = vmatmul.f32.gmra.mxu0 %v657
    %v760 = vpop.f32.mrf.mxu0
    %v761 = vadd.f32 %v690, %v760
    %762 = vmatmul.f32.gmra.mxu0 %v658
    %v763 = vpop.f32.mrf.mxu0
    %v764 = vadd.f32 %v690, %v763
    %765 = vmatmul.f32.gmra.mxu0 %v659
    %v766 = vpop.f32.mrf.mxu0
    %v767 = vadd.f32 %v690, %v766
    %768 = vmatmul.f32.gmra.mxu0 %v660
    %v769 = vpop.f32.mrf.mxu0
    %v770 = vadd.f32 %v690, %v769
    %771 = vmatmul.f32.gmra.mxu0 %v661
    %v772 = vpop.f32.mrf.mxu0
    %v773 = vadd.f32 %v690, %v772
    %774 = vmatmul.f32.gmra.mxu0 %v662
    %v775 = vpop.f32.mrf.mxu0
    %v776 = vadd.f32 %v690, %v775
    %777 = vmatmul.f32.gmra.mxu0 %v663
    %v778 = vpop.f32.mrf.mxu0
    %v779 = vadd.f32 %v690, %v778
    %780 = vmatmul.f32.gmra.mxu0 %v664
    %v781 = vpop.f32.mrf.mxu0
    %v782 = vadd.f32 %v690, %v781
    %783 = vmatmul.f32.gmra.mxu0 %v665
    %v784 = vpop.f32.mrf.mxu0
    %v785 = vadd.f32 %v690, %v784
    %786 = vmatmul.f32.gmra.mxu0 %v666
    %v787 = vpop.f32.mrf.mxu0
    %v788 = vadd.f32 %v690, %v787
    %789 = vmatmul.f32.gmra.mxu0 %v667
    %v790 = vpop.f32.mrf.mxu0
    %v791 = vadd.f32 %v690, %v790
    %792 = vmatmul.f32.gmra.mxu0 %v668
    %v793 = vpop.f32.mrf.mxu0
    %v794 = vadd.f32 %v690, %v793
    %795 = vmatmul.f32.gmra.mxu0 %v669
    %v796 = vpop.f32.mrf.mxu0
    %v797 = vadd.f32 %v690, %v796
    %798 = vmatmul.f32.gmra.mxu0 %v670
    %v799 = vpop.f32.mrf.mxu0
    %v800 = vadd.f32 %v690, %v799
    %801 = vmatmul.f32.gmra.mxu0 %v671
    %v802 = vpop.f32.mrf.mxu0
    %v803 = vadd.f32 %v690, %v802
    %804 = vdwg.mxu0
    %v805 = vld [vmem:[%s5] sm:$0xff]
    %v806 = vld [vmem:[%s5 + $0x8] sm:$0xff]
    %v807 = vld [vmem:[%s5 + $0x10] sm:$0xff]
    %v808 = vld [vmem:[%s5 + $0x18] sm:$0xff]
    %v809 = vld [vmem:[%s5 + $0x20] sm:$0xff]
    %v810 = vld [vmem:[%s5 + $0x28] sm:$0xff]
    %v811 = vld [vmem:[%s5 + $0x30] sm:$0xff]
    %v812 = vld [vmem:[%s5 + $0x38] sm:$0xff]
    %v813 = vld [vmem:[%s5 + $0x40] sm:$0xff]
    %v814 = vld [vmem:[%s5 + $0x48] sm:$0xff]
    %v815 = vld [vmem:[%s5 + $0x50] sm:$0xff]
    %v816 = vld [vmem:[%s5 + $0x58] sm:$0xff]
    %v817 = vld [vmem:[%s5 + $0x60] sm:$0xff]
    %v818 = vld [vmem:[%s5 + $0x68] sm:$0xff]
    %v819 = vld [vmem:[%s5 + $0x70] sm:$0xff]
    %v820 = vld [vmem:[%s5 + $0x78] sm:$0xff]
    %v821 = vld [vmem:[%s5 + $0x80] sm:$0xff]
    %v822 = vld [vmem:[%s5 + $0x88] sm:$0xff]
    %v823 = vld [vmem:[%s5 + $0x90] sm:$0xff]
    %v824 = vld [vmem:[%s5 + $0x98] sm:$0xff]
    %v825 = vld [vmem:[%s5 + $0xa0] sm:$0xff]
    %v826 = vld [vmem:[%s5 + $0xa8] sm:$0xff]
    %v827 = vld [vmem:[%s5 + $0xb0] sm:$0xff]
    %v828 = vld [vmem:[%s5 + $0xb8] sm:$0xff]
    %v829 = vld [vmem:[%s5 + $0xc0] sm:$0xff]
    %v830 = vld [vmem:[%s5 + $0xc8] sm:$0xff]
    %v831 = vld [vmem:[%s5 + $0xd0] sm:$0xff]
    %v832 = vld [vmem:[%s5 + $0xd8] sm:$0xff]
    %v833 = vld [vmem:[%s5 + $0xe0] sm:$0xff]
    %v834 = vld [vmem:[%s5 + $0xe8] sm:$0xff]
    %v835 = vld [vmem:[%s5 + $0xf0] sm:$0xff]
    %v836 = vld [vmem:[%s5 + $0xf8] sm:$0xff]
    %v837 = vld [vmem:[#allocation2] sm:$0xff]
    %v838 = vld [vmem:[#allocation2 + $0x8] sm:$0xff]
    %v839 = vld [vmem:[#allocation2 + $0x10] sm:$0xff]
    %v840 = vld [vmem:[#allocation2 + $0x18] sm:$0xff]
    %v841 = vld [vmem:[#allocation2 + $0x20] sm:$0xff]
    %v842 = vld [vmem:[#allocation2 + $0x28] sm:$0xff]
    %v843 = vld [vmem:[#allocation2 + $0x30] sm:$0xff]
    %v844 = vld [vmem:[#allocation2 + $0x38] sm:$0xff]
    %v845 = vld [vmem:[#allocation2 + $0x40] sm:$0xff]
    %v846 = vld [vmem:[#allocation2 + $0x48] sm:$0xff]
    %v847 = vld [vmem:[#allocation2 + $0x50] sm:$0xff]
    %v848 = vld [vmem:[#allocation2 + $0x58] sm:$0xff]
    %v849 = vld [vmem:[#allocation2 + $0x60] sm:$0xff]
    %v850 = vld [vmem:[#allocation2 + $0x68] sm:$0xff]
    %v851 = vld [vmem:[#allocation2 + $0x70] sm:$0xff]
    %v852 = vld [vmem:[#allocation2 + $0x78] sm:$0xff]
    %v853 = vld [vmem:[#allocation2 + $0x80] sm:$0xff]
    %v854 = vld [vmem:[#allocation2 + $0x88] sm:$0xff]
    %v855 = vld [vmem:[#allocation2 + $0x90] sm:$0xff]
    %v856 = vld [vmem:[#allocation2 + $0x98] sm:$0xff]
    %v857 = vld [vmem:[#allocation2 + $0xa0] sm:$0xff]
    %v858 = vld [vmem:[#allocation2 + $0xa8] sm:$0xff]
    %v859 = vld [vmem:[#allocation2 + $0xb0] sm:$0xff]
    %v860 = vld [vmem:[#allocation2 + $0xb8] sm:$0xff]
    %v861 = vld [vmem:[#allocation2 + $0xc0] sm:$0xff]
    %v862 = vld [vmem:[#allocation2 + $0xc8] sm:$0xff]
    %v863 = vld [vmem:[#allocation2 + $0xd0] sm:$0xff]
    %v864 = vld [vmem:[#allocation2 + $0xd8] sm:$0xff]
    %v865 = vld [vmem:[#allocation2 + $0xe0] sm:$0xff]
    %v866 = vld [vmem:[#allocation2 + $0xe8] sm:$0xff]
    %v867 = vld [vmem:[#allocation2 + $0xf0] sm:$0xff]
    %v868 = vld [vmem:[#allocation2 + $0xf8] sm:$0xff]
    %870 = vset.pattern.permute.xlu0 0
    %871 = vperm.xlu0 %870, %v805
    %v872 = vpop.permute.xlu0 %871
    %875 = vset.pattern.permute.xlu0 0
    %876 = vperm.xlu0 %875, %v806
    %v877 = vpop.permute.xlu0 %876
    %880 = vset.pattern.permute.xlu0 0
    %881 = vperm.xlu0 %880, %v807
    %v882 = vpop.permute.xlu0 %881
    %885 = vset.pattern.permute.xlu0 0
    %886 = vperm.xlu0 %885, %v808
    %v887 = vpop.permute.xlu0 %886
    %890 = vset.pattern.permute.xlu0 0
    %891 = vperm.xlu0 %890, %v809
    %v892 = vpop.permute.xlu0 %891
    %895 = vset.pattern.permute.xlu0 0
    %896 = vperm.xlu0 %895, %v810
    %v897 = vpop.permute.xlu0 %896
    %900 = vset.pattern.permute.xlu0 0
    %901 = vperm.xlu0 %900, %v811
    %v902 = vpop.permute.xlu0 %901
    %905 = vset.pattern.permute.xlu0 0
    %906 = vperm.xlu0 %905, %v812
    %v907 = vpop.permute.xlu0 %906
    %910 = vset.pattern.permute.xlu0 0
    %911 = vperm.xlu0 %910, %v813
    %v912 = vpop.permute.xlu0 %911
    %915 = vset.pattern.permute.xlu0 0
    %916 = vperm.xlu0 %915, %v814
    %v917 = vpop.permute.xlu0 %916
    %920 = vset.pattern.permute.xlu0 0
    %921 = vperm.xlu0 %920, %v815
    %v922 = vpop.permute.xlu0 %921
    %925 = vset.pattern.permute.xlu0 0
    %926 = vperm.xlu0 %925, %v816
    %v927 = vpop.permute.xlu0 %926
    %930 = vset.pattern.permute.xlu0 0
    %931 = vperm.xlu0 %930, %v817
    %v932 = vpop.permute.xlu0 %931
    %935 = vset.pattern.permute.xlu0 0
    %936 = vperm.xlu0 %935, %v818
    %v937 = vpop.permute.xlu0 %936
    %940 = vset.pattern.permute.xlu0 0
    %941 = vperm.xlu0 %940, %v819
    %v942 = vpop.permute.xlu0 %941
    %945 = vset.pattern.permute.xlu0 0
    %946 = vperm.xlu0 %945, %v820
    %v947 = vpop.permute.xlu0 %946
    %950 = vset.pattern.permute.xlu0 0
    %951 = vperm.xlu0 %950, %v821
    %v952 = vpop.permute.xlu0 %951
    %955 = vset.pattern.permute.xlu0 0
    %956 = vperm.xlu0 %955, %v822
    %v957 = vpop.permute.xlu0 %956
    %960 = vset.pattern.permute.xlu0 0
    %961 = vperm.xlu0 %960, %v823
    %v962 = vpop.permute.xlu0 %961
    %965 = vset.pattern.permute.xlu0 0
    %966 = vperm.xlu0 %965, %v824
    %v967 = vpop.permute.xlu0 %966
    %970 = vset.pattern.permute.xlu0 0
    %971 = vperm.xlu0 %970, %v825
    %v972 = vpop.permute.xlu0 %971
    %975 = vset.pattern.permute.xlu0 0
    %976 = vperm.xlu0 %975, %v826
    %v977 = vpop.permute.xlu0 %976
    %980 = vset.pattern.permute.xlu0 0
    %981 = vperm.xlu0 %980, %v827
    %v982 = vpop.permute.xlu0 %981
    %985 = vset.pattern.permute.xlu0 0
    %986 = vperm.xlu0 %985, %v828
    %v987 = vpop.permute.xlu0 %986
    %990 = vset.pattern.permute.xlu0 0
    %991 = vperm.xlu0 %990, %v829
    %v992 = vpop.permute.xlu0 %991
    %995 = vset.pattern.permute.xlu0 0
    %996 = vperm.xlu0 %995, %v830
    %v997 = vpop.permute.xlu0 %996
    %1000 = vset.pattern.permute.xlu0 0
    %1001 = vperm.xlu0 %1000, %v831
    %v1002 = vpop.permute.xlu0 %1001
    %1005 = vset.pattern.permute.xlu0 0
    %1006 = vperm.xlu0 %1005, %v832
    %v1007 = vpop.permute.xlu0 %1006
    %1010 = vset.pattern.permute.xlu0 0
    %1011 = vperm.xlu0 %1010, %v833
    %v1012 = vpop.permute.xlu0 %1011
    %1015 = vset.pattern.permute.xlu0 0
    %1016 = vperm.xlu0 %1015, %v834
    %v1017 = vpop.permute.xlu0 %1016
    %1020 = vset.pattern.permute.xlu0 0
    %1021 = vperm.xlu0 %1020, %v835
    %v1022 = vpop.permute.xlu0 %1021
    %1025 = vset.pattern.permute.xlu0 0
    %1026 = vperm.xlu0 %1025, %v836
    %v1027 = vpop.permute.xlu0 %1026
    %v1029 = vmul.f32 %v872, %v837
    %v1030 = vmul.f32 %v877, %v838
    %v1031 = vmul.f32 %v882, %v839
    %v1032 = vmul.f32 %v887, %v840
    %v1033 = vmul.f32 %v892, %v841
    %v1034 = vmul.f32 %v897, %v842
    %v1035 = vmul.f32 %v902, %v843
    %v1036 = vmul.f32 %v907, %v844
    %v1037 = vmul.f32 %v912, %v845
    %v1038 = vmul.f32 %v917, %v846
    %v1039 = vmul.f32 %v922, %v847
    %v1040 = vmul.f32 %v927, %v848
    %v1041 = vmul.f32 %v932, %v849
    %v1042 = vmul.f32 %v937, %v850
    %v1043 = vmul.f32 %v942, %v851
    %v1044 = vmul.f32 %v947, %v852
    %v1045 = vmul.f32 %v952, %v853
    %v1046 = vmul.f32 %v957, %v854
    %v1047 = vmul.f32 %v962, %v855
    %v1048 = vmul.f32 %v967, %v856
    %v1049 = vmul.f32 %v972, %v857
    %v1050 = vmul.f32 %v977, %v858
    %v1051 = vmul.f32 %v982, %v859
    %v1052 = vmul.f32 %v987, %v860
    %v1053 = vmul.f32 %v992, %v861
    %v1054 = vmul.f32 %v997, %v862
    %v1055 = vmul.f32 %v1002, %v863
    %v1056 = vmul.f32 %v1007, %v864
    %v1057 = vmul.f32 %v1012, %v865
    %v1058 = vmul.f32 %v1017, %v866
    %v1059 = vmul.f32 %v1022, %v867
    %v1060 = vmul.f32 %v1027, %v868
    %v1061 = vadd.f32 %v710, %v1029
    %v1062 = vadd.f32 %v713, %v1030
    %v1063 = vadd.f32 %v716, %v1031
    %v1064 = vadd.f32 %v719, %v1032
    %v1065 = vadd.f32 %v722, %v1033
    %v1066 = vadd.f32 %v725, %v1034
    %v1067 = vadd.f32 %v728, %v1035
    %v1068 = vadd.f32 %v731, %v1036
    %v1069 = vadd.f32 %v734, %v1037
    %v1070 = vadd.f32 %v737, %v1038
    %v1071 = vadd.f32 %v740, %v1039
    %v1072 = vadd.f32 %v743, %v1040
    %v1073 = vadd.f32 %v746, %v1041
    %v1074 = vadd.f32 %v749, %v1042
    %v1075 = vadd.f32 %v752, %v1043
    %v1076 = vadd.f32 %v755, %v1044
    %v1077 = vadd.f32 %v758, %v1045
    %v1078 = vadd.f32 %v761, %v1046
    %v1079 = vadd.f32 %v764, %v1047
    %v1080 = vadd.f32 %v767, %v1048
    %v1081 = vadd.f32 %v770, %v1049
    %v1082 = vadd.f32 %v773, %v1050
    %v1083 = vadd.f32 %v776, %v1051
    %v1084 = vadd.f32 %v779, %v1052
    %v1085 = vadd.f32 %v782, %v1053
    %v1086 = vadd.f32 %v785, %v1054
    %v1087 = vadd.f32 %v788, %v1055
    %v1088 = vadd.f32 %v791, %v1056
    %v1089 = vadd.f32 %v794, %v1057
    %v1090 = vadd.f32 %v797, %v1058
    %v1091 = vadd.f32 %v800, %v1059
    %v1092 = vadd.f32 %v803, %v1060
    %v1093 = vmax.f32 %v1061, 0.0
    %v1094 = vmax.f32 %v1062, 0.0
    %v1095 = vmax.f32 %v1063, 0.0
    %v1096 = vmax.f32 %v1064, 0.0
    %v1097 = vmax.f32 %v1065, 0.0
    %v1098 = vmax.f32 %v1066, 0.0
    %v1099 = vmax.f32 %v1067, 0.0
    %v1100 = vmax.f32 %v1068, 0.0
    %v1101 = vmax.f32 %v1069, 0.0
    %v1102 = vmax.f32 %v1070, 0.0
    %v1103 = vmax.f32 %v1071, 0.0
    %v1104 = vmax.f32 %v1072, 0.0
    %v1105 = vmax.f32 %v1073, 0.0
    %v1106 = vmax.f32 %v1074, 0.0
    %v1107 = vmax.f32 %v1075, 0.0
    %v1108 = vmax.f32 %v1076, 0.0
    %v1109 = vmax.f32 %v1077, 0.0
    %v1110 = vmax.f32 %v1078, 0.0
    %v1111 = vmax.f32 %v1079, 0.0
    %v1112 = vmax.f32 %v1080, 0.0
    %v1113 = vmax.f32 %v1081, 0.0
    %v1114 = vmax.f32 %v1082, 0.0
    %v1115 = vmax.f32 %v1083, 0.0
    %v1116 = vmax.f32 %v1084, 0.0
    %v1117 = vmax.f32 %v1085, 0.0
    %v1118 = vmax.f32 %v1086, 0.0
    %v1119 = vmax.f32 %v1087, 0.0
    %v1120 = vmax.f32 %v1088, 0.0
    %v1121 = vmax.f32 %v1089, 0.0
    %v1122 = vmax.f32 %v1090, 0.0
    %v1123 = vmax.f32 %v1091, 0.0
    %v1124 = vmax.f32 %v1092, 0.0
    %v1125 = vpack.c.bf16 %v1093, %v1093
    %v1126 = vpack.c.bf16 %v1094, %v1094
    %v1127 = vpack.c.bf16 %v1095, %v1095
    %v1128 = vpack.c.bf16 %v1096, %v1096
    %v1129 = vpack.c.bf16 %v1097, %v1097
    %v1130 = vpack.c.bf16 %v1098, %v1098
    %v1131 = vpack.c.bf16 %v1099, %v1099
    %v1132 = vpack.c.bf16 %v1100, %v1100
    %v1133 = vpack.c.bf16 %v1101, %v1101
    %v1134 = vpack.c.bf16 %v1102, %v1102
    %v1135 = vpack.c.bf16 %v1103, %v1103
    %v1136 = vpack.c.bf16 %v1104, %v1104
    %v1137 = vpack.c.bf16 %v1105, %v1105
    %v1138 = vpack.c.bf16 %v1106, %v1106
    %v1139 = vpack.c.bf16 %v1107, %v1107
    %v1140 = vpack.c.bf16 %v1108, %v1108
    %v1141 = vpack.c.bf16 %v1109, %v1109
    %v1142 = vpack.c.bf16 %v1110, %v1110
    %v1143 = vpack.c.bf16 %v1111, %v1111
    %v1144 = vpack.c.bf16 %v1112, %v1112
    %v1145 = vpack.c.bf16 %v1113, %v1113
    %v1146 = vpack.c.bf16 %v1114, %v1114
    %v1147 = vpack.c.bf16 %v1115, %v1115
    %v1148 = vpack.c.bf16 %v1116, %v1116
    %v1149 = vpack.c.bf16 %v1117, %v1117
    %v1150 = vpack.c.bf16 %v1118, %v1118
    %v1151 = vpack.c.bf16 %v1119, %v1119
    %v1152 = vpack.c.bf16 %v1120, %v1120
    %v1153 = vpack.c.bf16 %v1121, %v1121
    %v1154 = vpack.c.bf16 %v1122, %v1122
    %v1155 = vpack.c.bf16 %v1123, %v1123
    %v1156 = vpack.c.bf16 %v1124, %v1124
    %1157 = vst [vmem:[%s6] sm:$0xf] %v1125
    %1158 = vst [vmem:[%s6 + $0x4] sm:$0xf] %v1126
    %1159 = vst [vmem:[%s6 + $0x8] sm:$0xf] %v1127
    %1160 = vst [vmem:[%s6 + $0xc] sm:$0xf] %v1128
    %1161 = vst [vmem:[%s6 + $0x10] sm:$0xf] %v1129
    %1162 = vst [vmem:[%s6 + $0x14] sm:$0xf] %v1130
    %1163 = vst [vmem:[%s6 + $0x18] sm:$0xf] %v1131
    %1164 = vst [vmem:[%s6 + $0x1c] sm:$0xf] %v1132
    %1165 = vst [vmem:[%s6 + $0x20] sm:$0xf] %v1133
    %1166 = vst [vmem:[%s6 + $0x24] sm:$0xf] %v1134
    %1167 = vst [vmem:[%s6 + $0x28] sm:$0xf] %v1135
    %1168 = vst [vmem:[%s6 + $0x2c] sm:$0xf] %v1136
    %1169 = vst [vmem:[%s6 + $0x30] sm:$0xf] %v1137
    %1170 = vst [vmem:[%s6 + $0x34] sm:$0xf] %v1138
    %1171 = vst [vmem:[%s6 + $0x38] sm:$0xf] %v1139
    %1172 = vst [vmem:[%s6 + $0x3c] sm:$0xf] %v1140
    %1173 = vst [vmem:[%s6 + $0x40] sm:$0xf] %v1141
    %1174 = vst [vmem:[%s6 + $0x44] sm:$0xf] %v1142
    %1175 = vst [vmem:[%s6 + $0x48] sm:$0xf] %v1143
    %1176 = vst [vmem:[%s6 + $0x4c] sm:$0xf] %v1144
    %1177 = vst [vmem:[%s6 + $0x50] sm:$0xf] %v1145
    %1178 = vst [vmem:[%s6 + $0x54] sm:$0xf] %v1146
    %1179 = vst [vmem:[%s6 + $0x58] sm:$0xf] %v1147
    %1180 = vst [vmem:[%s6 + $0x5c] sm:$0xf] %v1148
    %1181 = vst [vmem:[%s6 + $0x60] sm:$0xf] %v1149
    %1182 = vst [vmem:[%s6 + $0x64] sm:$0xf] %v1150
    %1183 = vst [vmem:[%s6 + $0x68] sm:$0xf] %v1151
    %1184 = vst [vmem:[%s6 + $0x6c] sm:$0xf] %v1152
    %1185 = vst [vmem:[%s6 + $0x70] sm:$0xf] %v1153
    %1186 = vst [vmem:[%s6 + $0x74] sm:$0xf] %v1154
    %1187 = vst [vmem:[%s6 + $0x78] sm:$0xf] %v1155
    %1188 = vst [vmem:[%s6 + $0x7c] sm:$0xf] %v1156
  $region33: #{link_prediction_model.6} parent=0 // pred_fallthru
    _
  // Predicated region
  $region34: #{link_prediction_model.6} parent=0 // pred_check
    _
  $region35: #{link_prediction_model.6} parent=0 // pred_check_branch
    %1190 = sbr.rel (0) target = $region37
  $region36: #{link_prediction_model.6} parent=0 // pred_region
    _
  $region37: #{link_prediction_model.6} parent=0 // pred_fallthru
    _
  // Predicated region
  $region38: #{link_prediction_model.6} parent=0 // pred_check
    _
  $region39: #{link_prediction_model.6} parent=0 // pred_check_branch
    %1192 = sbr.rel (0) target = $region41
  $region40: #{link_prediction_model.6} parent=0 // pred_region
    _
  $region41: #{link_prediction_model.6} parent=0 // pred_fallthru
    _

// kernel: link_prediction_model.8
$region0: #{link_prediction_model.8}
  #allocation0 [shape = 'u32[]', space=smem, size = 0x4, offset = 0x4, fixed_abs, tag = 'smem constant byte address 0x4 - core index']
  #allocation1 [shape = 'u32[72,128]{1,0:T(1,128)}', space=vmem, size = 0x9000, scoped, tag = 'internal scratch']
  #allocation2 [shape = 'f32[256,128]{1,0:T(8,128)}', space=vmem, size = 0x20000, scoped, tag = 'scratch operand']
  %s0 = inlined_call_operand.vmem [shape: s8[256,256], index: 0, kind: input, shape index: {}]
  %s1 = inlined_call_operand.vmem [shape: bf16[256,128], index: 1, kind: input, shape index: {}]
  %s2 = inlined_call_operand.vmem [shape: bf16[256,128], index: 2, kind: input, shape index: {}]
  %s3 = inlined_call_operand.vmem [shape: f32[128,128], index: 3, kind: input, shape index: {}]
  %s4 = inlined_call_operand.vmem [shape: f32[1,128], index: 4, kind: input, shape index: {}]
  %s5 = inlined_call_operand.vmem [shape: f32[256,1], index: 5, kind: input, shape index: {}]
  %s6 = inlined_call_operand.vmem [shape: f32[256,128], index: 6, kind: output, shape index: {}]
  %s7 = sld [smem:[#allocation0]]
  $region42: #{link_prediction_model.8} parent=0
    _
  %s9 = ssub.s32 1, %s7
  %s10 = scalar_select 0, %s9, %s7
  // Predicated region
  $region2: #{link_prediction_model.8} parent=0 // pred_check
    _
  $region3: #{link_prediction_model.8} parent=0 // pred_check_branch
    %12 = sbr.rel (0) target = $region5
  $region4: #{link_prediction_model.8} parent=0 // pred_region
    _
  $region5: #{link_prediction_model.8} parent=0 // pred_fallthru
    _
  // Predicated region
  $region6: #{link_prediction_model.8} parent=0 // pred_check
    _
  $region7: #{link_prediction_model.8} parent=0 // pred_check_branch
    %14 = sbr.rel (0) target = $region9
  $region8: #{link_prediction_model.8} parent=0 // pred_region
    _
  $region9: #{link_prediction_model.8} parent=0 // pred_fallthru
    _
  // Predicated region
  $region10: #{link_prediction_model.8} parent=0 // pred_check
    _
  $region11: #{link_prediction_model.8} parent=0 // pred_check_branch
    %16 = sbr.rel (0) target = $region13
  $region12: #{link_prediction_model.8} parent=0 // pred_region
    _
  $region13: #{link_prediction_model.8} parent=0 // pred_fallthru
    _
  // Predicated region
  $region14: #{link_prediction_model.8} parent=0 // pred_check
    _
  $region15: #{link_prediction_model.8} parent=0 // pred_check_branch
    %18 = sbr.rel (0) target = $region17
  $region16: #{link_prediction_model.8} parent=0 // pred_region
    _
  $region17: #{link_prediction_model.8} parent=0 // pred_fallthru
    _
  // Predicated region
  $region18: #{link_prediction_model.8} parent=0 // pred_check
    _
  $region19: #{link_prediction_model.8} parent=0 // pred_check_branch
    %20 = sbr.rel (0) target = $region21
  $region20: #{link_prediction_model.8} parent=0 // pred_region
    _
  $region21: #{link_prediction_model.8} parent=0 // pred_fallthru
    _
  // Predicated region
  $region22: #{link_prediction_model.8} parent=0 // pred_check
    _
  $region23: #{link_prediction_model.8} parent=0 // pred_check_branch
    %22 = sbr.rel (0) target = $region25
  $region24: #{link_prediction_model.8} parent=0 // pred_region
    _
  $region25: #{link_prediction_model.8} parent=0 // pred_fallthru
    _
  %p23 = scmp.eq.s32.totalorder 0, 0
  // Predicated region
  $region26: #{link_prediction_model.8} parent=0 // pred_check
    %p24 = pneg %p23
  $region27: #{link_prediction_model.8} parent=0 // pred_check_branch
    %26 = sbr.rel (%p24) target = $region29
  $region28: #{link_prediction_model.8} parent=0 // pred_region
    %27 = vst [vmem:[#allocation2] sm:$0xff] 0.0
    %28 = vst [vmem:[#allocation2 + $0x8] sm:$0xff] 0.0
    %29 = vst [vmem:[#allocation2 + $0x10] sm:$0xff] 0.0
    %30 = vst [vmem:[#allocation2 + $0x18] sm:$0xff] 0.0
    %31 = vst [vmem:[#allocation2 + $0x20] sm:$0xff] 0.0
    %32 = vst [vmem:[#allocation2 + $0x28] sm:$0xff] 0.0
    %33 = vst [vmem:[#allocation2 + $0x30] sm:$0xff] 0.0
    %34 = vst [vmem:[#allocation2 + $0x38] sm:$0xff] 0.0
    %35 = vst [vmem:[#allocation2 + $0x40] sm:$0xff] 0.0
    %36 = vst [vmem:[#allocation2 + $0x48] sm:$0xff] 0.0
    %37 = vst [vmem:[#allocation2 + $0x50] sm:$0xff] 0.0
    %38 = vst [vmem:[#allocation2 + $0x58] sm:$0xff] 0.0
    %39 = vst [vmem:[#allocation2 + $0x60] sm:$0xff] 0.0
    %40 = vst [vmem:[#allocation2 + $0x68] sm:$0xff] 0.0
    %41 = vst [vmem:[#allocation2 + $0x70] sm:$0xff] 0.0
    %42 = vst [vmem:[#allocation2 + $0x78] sm:$0xff] 0.0
    %43 = vst [vmem:[#allocation2 + $0x80] sm:$0xff] 0.0
    %44 = vst [vmem:[#allocation2 + $0x88] sm:$0xff] 0.0
    %45 = vst [vmem:[#allocation2 + $0x90] sm:$0xff] 0.0
    %46 = vst [vmem:[#allocation2 + $0x98] sm:$0xff] 0.0
    %47 = vst [vmem:[#allocation2 + $0xa0] sm:$0xff] 0.0
    %48 = vst [vmem:[#allocation2 + $0xa8] sm:$0xff] 0.0
    %49 = vst [vmem:[#allocation2 + $0xb0] sm:$0xff] 0.0
    %50 = vst [vmem:[#allocation2 + $0xb8] sm:$0xff] 0.0
    %51 = vst [vmem:[#allocation2 + $0xc0] sm:$0xff] 0.0
    %52 = vst [vmem:[#allocation2 + $0xc8] sm:$0xff] 0.0
    %53 = vst [vmem:[#allocation2 + $0xd0] sm:$0xff] 0.0
    %54 = vst [vmem:[#allocation2 + $0xd8] sm:$0xff] 0.0
    %55 = vst [vmem:[#allocation2 + $0xe0] sm:$0xff] 0.0
    %56 = vst [vmem:[#allocation2 + $0xe8] sm:$0xff] 0.0
    %57 = vst [vmem:[#allocation2 + $0xf0] sm:$0xff] 0.0
    %58 = vst [vmem:[#allocation2 + $0xf8] sm:$0xff] 0.0
  $region29: #{link_prediction_model.8} parent=0 // pred_fallthru
    _
  %v59 = vld [vmem:[#allocation2] sm:$0xff]
  %v60 = vld [vmem:[#allocation2 + $0x8] sm:$0xff]
  %v61 = vld [vmem:[#allocation2 + $0x10] sm:$0xff]
  %v62 = vld [vmem:[#allocation2 + $0x18] sm:$0xff]
  %v63 = vld [vmem:[#allocation2 + $0x20] sm:$0xff]
  %v64 = vld [vmem:[#allocation2 + $0x28] sm:$0xff]
  %v65 = vld [vmem:[#allocation2 + $0x30] sm:$0xff]
  %v66 = vld [vmem:[#allocation2 + $0x38] sm:$0xff]
  %v67 = vld [vmem:[#allocation2 + $0x40] sm:$0xff]
  %v68 = vld [vmem:[#allocation2 + $0x48] sm:$0xff]
  %v69 = vld [vmem:[#allocation2 + $0x50] sm:$0xff]
  %v70 = vld [vmem:[#allocation2 + $0x58] sm:$0xff]
  %v71 = vld [vmem:[#allocation2 + $0x60] sm:$0xff]
  %v72 = vld [vmem:[#allocation2 + $0x68] sm:$0xff]
  %v73 = vld [vmem:[#allocation2 + $0x70] sm:$0xff]
  %v74 = vld [vmem:[#allocation2 + $0x78] sm:$0xff]
  %v75 = vld [vmem:[#allocation2 + $0x80] sm:$0xff]
  %v76 = vld [vmem:[#allocation2 + $0x88] sm:$0xff]
  %v77 = vld [vmem:[#allocation2 + $0x90] sm:$0xff]
  %v78 = vld [vmem:[#allocation2 + $0x98] sm:$0xff]
  %v79 = vld [vmem:[#allocation2 + $0xa0] sm:$0xff]
  %v80 = vld [vmem:[#allocation2 + $0xa8] sm:$0xff]
  %v81 = vld [vmem:[#allocation2 + $0xb0] sm:$0xff]
  %v82 = vld [vmem:[#allocation2 + $0xb8] sm:$0xff]
  %v83 = vld [vmem:[#allocation2 + $0xc0] sm:$0xff]
  %v84 = vld [vmem:[#allocation2 + $0xc8] sm:$0xff]
  %v85 = vld [vmem:[#allocation2 + $0xd0] sm:$0xff]
  %v86 = vld [vmem:[#allocation2 + $0xd8] sm:$0xff]
  %v87 = vld [vmem:[#allocation2 + $0xe0] sm:$0xff]
  %v88 = vld [vmem:[#allocation2 + $0xe8] sm:$0xff]
  %v89 = vld [vmem:[#allocation2 + $0xf0] sm:$0xff]
  %v90 = vld [vmem:[#allocation2 + $0xf8] sm:$0xff]
  %v91 = vld [vmem:[%s0] sm:$0xff]
  %v92 = vld [vmem:[%s0 + $0x8] sm:$0xff]
  %v93 = vld [vmem:[%s0 + $0x10] sm:$0xff]
  %v94 = vld [vmem:[%s0 + $0x18] sm:$0xff]
  %v95 = vld [vmem:[%s0 + $0x20] sm:$0xff]
  %v96 = vld [vmem:[%s0 + $0x28] sm:$0xff]
  %v97 = vld [vmem:[%s0 + $0x30] sm:$0xff]
  %v98 = vld [vmem:[%s0 + $0x38] sm:$0xff]
  %v99 = vld [vmem:[%s0 + $0x40] sm:$0xff]
  %v100 = vld [vmem:[%s0 + $0x48] sm:$0xff]
  %v101 = vld [vmem:[%s0 + $0x50] sm:$0xff]
  %v102 = vld [vmem:[%s0 + $0x58] sm:$0xff]
  %v103 = vld [vmem:[%s0 + $0x60] sm:$0xff]
  %v104 = vld [vmem:[%s0 + $0x68] sm:$0xff]
  %v105 = vld [vmem:[%s0 + $0x70] sm:$0xff]
  %v106 = vld [vmem:[%s0 + $0x78] sm:$0xff]
  %v107 = vunpack.c.0.s8 %v91
  %v108 = vunpack.c.0.s8 %v92
  %v109 = vunpack.c.1.s8 %v91
  %v110 = vunpack.c.1.s8 %v92
  %v111 = vunpack.c.2.s8 %v91
  %v112 = vunpack.c.2.s8 %v92
  %v113 = vunpack.c.3.s8 %v91
  %v114 = vunpack.c.3.s8 %v92
  %v115 = vunpack.c.0.s8 %v93
  %v116 = vunpack.c.0.s8 %v94
  %v117 = vunpack.c.1.s8 %v93
  %v118 = vunpack.c.1.s8 %v94
  %v119 = vunpack.c.2.s8 %v93
  %v120 = vunpack.c.2.s8 %v94
  %v121 = vunpack.c.3.s8 %v93
  %v122 = vunpack.c.3.s8 %v94
  %v123 = vunpack.c.0.s8 %v95
  %v124 = vunpack.c.0.s8 %v96
  %v125 = vunpack.c.1.s8 %v95
  %v126 = vunpack.c.1.s8 %v96
  %v127 = vunpack.c.2.s8 %v95
  %v128 = vunpack.c.2.s8 %v96
  %v129 = vunpack.c.3.s8 %v95
  %v130 = vunpack.c.3.s8 %v96
  %v131 = vunpack.c.0.s8 %v97
  %v132 = vunpack.c.0.s8 %v98
  %v133 = vunpack.c.1.s8 %v97
  %v134 = vunpack.c.1.s8 %v98
  %v135 = vunpack.c.2.s8 %v97
  %v136 = vunpack.c.2.s8 %v98
  %v137 = vunpack.c.3.s8 %v97
  %v138 = vunpack.c.3.s8 %v98
  %v139 = vunpack.c.0.s8 %v99
  %v140 = vunpack.c.0.s8 %v100
  %v141 = vunpack.c.1.s8 %v99
  %v142 = vunpack.c.1.s8 %v100
  %v143 = vunpack.c.2.s8 %v99
  %v144 = vunpack.c.2.s8 %v100
  %v145 = vunpack.c.3.s8 %v99
  %v146 = vunpack.c.3.s8 %v100
  %v147 = vunpack.c.0.s8 %v101
  %v148 = vunpack.c.0.s8 %v102
  %v149 = vunpack.c.1.s8 %v101
  %v150 = vunpack.c.1.s8 %v102
  %v151 = vunpack.c.2.s8 %v101
  %v152 = vunpack.c.2.s8 %v102
  %v153 = vunpack.c.3.s8 %v101
  %v154 = vunpack.c.3.s8 %v102
  %v155 = vunpack.c.0.s8 %v103
  %v156 = vunpack.c.0.s8 %v104
  %v157 = vunpack.c.1.s8 %v103
  %v158 = vunpack.c.1.s8 %v104
  %v159 = vunpack.c.2.s8 %v103
  %v160 = vunpack.c.2.s8 %v104
  %v161 = vunpack.c.3.s8 %v103
  %v162 = vunpack.c.3.s8 %v104
  %v163 = vunpack.c.0.s8 %v105
  %v164 = vunpack.c.0.s8 %v106
  %v165 = vunpack.c.1.s8 %v105
  %v166 = vunpack.c.1.s8 %v106
  %v167 = vunpack.c.2.s8 %v105
  %v168 = vunpack.c.2.s8 %v106
  %v169 = vunpack.c.3.s8 %v105
  %v170 = vunpack.c.3.s8 %v106
  %v171 = vcvt.s32.f32 %v107
  %v172 = vcvt.s32.f32 %v108
  %v173 = vcvt.s32.f32 %v109
  %v174 = vcvt.s32.f32 %v110
  %v175 = vcvt.s32.f32 %v111
  %v176 = vcvt.s32.f32 %v112
  %v177 = vcvt.s32.f32 %v113
  %v178 = vcvt.s32.f32 %v114
  %v179 = vcvt.s32.f32 %v115
  %v180 = vcvt.s32.f32 %v116
  %v181 = vcvt.s32.f32 %v117
  %v182 = vcvt.s32.f32 %v118
  %v183 = vcvt.s32.f32 %v119
  %v184 = vcvt.s32.f32 %v120
  %v185 = vcvt.s32.f32 %v121
  %v186 = vcvt.s32.f32 %v122
  %v187 = vcvt.s32.f32 %v123
  %v188 = vcvt.s32.f32 %v124
  %v189 = vcvt.s32.f32 %v125
  %v190 = vcvt.s32.f32 %v126
  %v191 = vcvt.s32.f32 %v127
  %v192 = vcvt.s32.f32 %v128
  %v193 = vcvt.s32.f32 %v129
  %v194 = vcvt.s32.f32 %v130
  %v195 = vcvt.s32.f32 %v131
  %v196 = vcvt.s32.f32 %v132
  %v197 = vcvt.s32.f32 %v133
  %v198 = vcvt.s32.f32 %v134
  %v199 = vcvt.s32.f32 %v135
  %v200 = vcvt.s32.f32 %v136
  %v201 = vcvt.s32.f32 %v137
  %v202 = vcvt.s32.f32 %v138
  %v203 = vcvt.s32.f32 %v139
  %v204 = vcvt.s32.f32 %v140
  %v205 = vcvt.s32.f32 %v141
  %v206 = vcvt.s32.f32 %v142
  %v207 = vcvt.s32.f32 %v143
  %v208 = vcvt.s32.f32 %v144
  %v209 = vcvt.s32.f32 %v145
  %v210 = vcvt.s32.f32 %v146
  %v211 = vcvt.s32.f32 %v147
  %v212 = vcvt.s32.f32 %v148
  %v213 = vcvt.s32.f32 %v149
  %v214 = vcvt.s32.f32 %v150
  %v215 = vcvt.s32.f32 %v151
  %v216 = vcvt.s32.f32 %v152
  %v217 = vcvt.s32.f32 %v153
  %v218 = vcvt.s32.f32 %v154
  %v219 = vcvt.s32.f32 %v155
  %v220 = vcvt.s32.f32 %v156
  %v221 = vcvt.s32.f32 %v157
  %v222 = vcvt.s32.f32 %v158
  %v223 = vcvt.s32.f32 %v159
  %v224 = vcvt.s32.f32 %v160
  %v225 = vcvt.s32.f32 %v161
  %v226 = vcvt.s32.f32 %v162
  %v227 = vcvt.s32.f32 %v163
  %v228 = vcvt.s32.f32 %v164
  %v229 = vcvt.s32.f32 %v165
  %v230 = vcvt.s32.f32 %v166
  %v231 = vcvt.s32.f32 %v167
  %v232 = vcvt.s32.f32 %v168
  %v233 = vcvt.s32.f32 %v169
  %v234 = vcvt.s32.f32 %v170
  %v235 = vpack.c.bf16 %v173, %v171
  %v236 = vpack.c.bf16 %v174, %v172
  %v237 = vpack.c.bf16 %v177, %v175
  %v238 = vpack.c.bf16 %v178, %v176
  %v239 = vpack.c.bf16 %v181, %v179
  %v240 = vpack.c.bf16 %v182, %v180
  %v241 = vpack.c.bf16 %v185, %v183
  %v242 = vpack.c.bf16 %v186, %v184
  %v243 = vpack.c.bf16 %v189, %v187
  %v244 = vpack.c.bf16 %v190, %v188
  %v245 = vpack.c.bf16 %v193, %v191
  %v246 = vpack.c.bf16 %v194, %v192
  %v247 = vpack.c.bf16 %v197, %v195
  %v248 = vpack.c.bf16 %v198, %v196
  %v249 = vpack.c.bf16 %v201, %v199
  %v250 = vpack.c.bf16 %v202, %v200
  %v251 = vpack.c.bf16 %v205, %v203
  %v252 = vpack.c.bf16 %v206, %v204
  %v253 = vpack.c.bf16 %v209, %v207
  %v254 = vpack.c.bf16 %v210, %v208
  %v255 = vpack.c.bf16 %v213, %v211
  %v256 = vpack.c.bf16 %v214, %v212
  %v257 = vpack.c.bf16 %v217, %v215
  %v258 = vpack.c.bf16 %v218, %v216
  %v259 = vpack.c.bf16 %v221, %v219
  %v260 = vpack.c.bf16 %v222, %v220
  %v261 = vpack.c.bf16 %v225, %v223
  %v262 = vpack.c.bf16 %v226, %v224
  %v263 = vpack.c.bf16 %v229, %v227
  %v264 = vpack.c.bf16 %v230, %v228
  %v265 = vpack.c.bf16 %v233, %v231
  %v266 = vpack.c.bf16 %v234, %v232
  %v267 = vld [vmem:[%s1] sm:$0xf]
  %v268 = vld [vmem:[%s1 + $0x4] sm:$0xf]
  %v269 = vld [vmem:[%s1 + $0x8] sm:$0xf]
  %v270 = vld [vmem:[%s1 + $0xc] sm:$0xf]
  %v271 = vld [vmem:[%s1 + $0x10] sm:$0xf]
  %v272 = vld [vmem:[%s1 + $0x14] sm:$0xf]
  %v273 = vld [vmem:[%s1 + $0x18] sm:$0xf]
  %v274 = vld [vmem:[%s1 + $0x1c] sm:$0xf]
  %v275 = vld [vmem:[%s1 + $0x20] sm:$0xf]
  %v276 = vld [vmem:[%s1 + $0x24] sm:$0xf]
  %v277 = vld [vmem:[%s1 + $0x28] sm:$0xf]
  %v278 = vld [vmem:[%s1 + $0x2c] sm:$0xf]
  %v279 = vld [vmem:[%s1 + $0x30] sm:$0xf]
  %v280 = vld [vmem:[%s1 + $0x34] sm:$0xf]
  %v281 = vld [vmem:[%s1 + $0x38] sm:$0xf]
  %v282 = vld [vmem:[%s1 + $0x3c] sm:$0xf]
  %v283 = vld [vmem:[%s1 + $0x40] sm:$0xf]
  %v284 = vld [vmem:[%s1 + $0x44] sm:$0xf]
  %v285 = vld [vmem:[%s1 + $0x48] sm:$0xf]
  %v286 = vld [vmem:[%s1 + $0x4c] sm:$0xf]
  %v287 = vld [vmem:[%s1 + $0x50] sm:$0xf]
  %v288 = vld [vmem:[%s1 + $0x54] sm:$0xf]
  %v289 = vld [vmem:[%s1 + $0x58] sm:$0xf]
  %v290 = vld [vmem:[%s1 + $0x5c] sm:$0xf]
  %v291 = vld [vmem:[%s1 + $0x60] sm:$0xf]
  %v292 = vld [vmem:[%s1 + $0x64] sm:$0xf]
  %v293 = vld [vmem:[%s1 + $0x68] sm:$0xf]
  %v294 = vld [vmem:[%s1 + $0x6c] sm:$0xf]
  %v295 = vld [vmem:[%s1 + $0x70] sm:$0xf]
  %v296 = vld [vmem:[%s1 + $0x74] sm:$0xf]
  %v297 = vld [vmem:[%s1 + $0x78] sm:$0xf]
  %v298 = vld [vmem:[%s1 + $0x7c] sm:$0xf]
  %v331 = vunpack.c.l.b16 %v267
  %v332 = vunpack.c.l.b16 %v268
  %v333 = vunpack.c.l.b16 %v269
  %v334 = vunpack.c.l.b16 %v270
  %v335 = vunpack.c.l.b16 %v271
  %v336 = vunpack.c.l.b16 %v272
  %v337 = vunpack.c.l.b16 %v273
  %v338 = vunpack.c.l.b16 %v274
  %v339 = vunpack.c.l.b16 %v275
  %v340 = vunpack.c.l.b16 %v276
  %v341 = vunpack.c.l.b16 %v277
  %v342 = vunpack.c.l.b16 %v278
  %v343 = vunpack.c.l.b16 %v279
  %v344 = vunpack.c.l.b16 %v280
  %v345 = vunpack.c.l.b16 %v281
  %v346 = vunpack.c.l.b16 %v282
  %v347 = vunpack.c.l.b16 %v283
  %v348 = vunpack.c.l.b16 %v284
  %v349 = vunpack.c.l.b16 %v285
  %v350 = vunpack.c.l.b16 %v286
  %v351 = vunpack.c.l.b16 %v287
  %v352 = vunpack.c.l.b16 %v288
  %v353 = vunpack.c.l.b16 %v289
  %v354 = vunpack.c.l.b16 %v290
  %v355 = vunpack.c.l.b16 %v291
  %v356 = vunpack.c.l.b16 %v292
  %v357 = vunpack.c.l.b16 %v293
  %v358 = vunpack.c.l.b16 %v294
  %v359 = vunpack.c.l.b16 %v295
  %v360 = vunpack.c.l.b16 %v296
  %v361 = vunpack.c.l.b16 %v297
  %v362 = vunpack.c.l.b16 %v298
  %v363 = vpack.c.b16 %v332, %v331
  %v364 = vpack.c.b16 %v334, %v333
  %v365 = vpack.c.b16 %v336, %v335
  %v366 = vpack.c.b16 %v338, %v337
  %v367 = vpack.c.b16 %v340, %v339
  %v368 = vpack.c.b16 %v342, %v341
  %v369 = vpack.c.b16 %v344, %v343
  %v370 = vpack.c.b16 %v346, %v345
  %v371 = vpack.c.b16 %v348, %v347
  %v372 = vpack.c.b16 %v350, %v349
  %v373 = vpack.c.b16 %v352, %v351
  %v374 = vpack.c.b16 %v354, %v353
  %v375 = vpack.c.b16 %v356, %v355
  %v376 = vpack.c.b16 %v358, %v357
  %v377 = vpack.c.b16 %v360, %v359
  %v378 = vpack.c.b16 %v362, %v361
  %395 = vmatpush.bf16.msra.mxu0 %v370
  %396 = vmatpush.bf16.msra.mxu0 %v369
  %397 = vmatpush.bf16.msra.mxu0 %v368
  %398 = vmatpush.bf16.msra.mxu0 %v367
  %399 = vmatpush.bf16.msra.mxu0 %v366
  %400 = vmatpush.bf16.msra.mxu0 %v365
  %401 = vmatpush.bf16.msra.mxu0 %v364
  %402 = vmatpush.bf16.msra.mxu0 %v363
  %403 = vmatmul.bf16.gmra.mxu0 %v235
  %v404 = vpop.f32.mrf.mxu0
  %v405 = vadd.f32 0.0, %v404
  %v406 = vpop.f32.mrf.mxu0
  %v407 = vadd.f32 0.0, %v406
  %408 = vmatmul.bf16.gmra.mxu0 %v237
  %v409 = vpop.f32.mrf.mxu0
  %v410 = vadd.f32 0.0, %v409
  %v411 = vpop.f32.mrf.mxu0
  %v412 = vadd.f32 0.0, %v411
  %413 = vmatmul.bf16.gmra.mxu0 %v239
  %v414 = vpop.f32.mrf.mxu0
  %v415 = vadd.f32 0.0, %v414
  %v416 = vpop.f32.mrf.mxu0
  %v417 = vadd.f32 0.0, %v416
  %418 = vmatmul.bf16.gmra.mxu0 %v241
  %v419 = vpop.f32.mrf.mxu0
  %v420 = vadd.f32 0.0, %v419
  %v421 = vpop.f32.mrf.mxu0
  %v422 = vadd.f32 0.0, %v421
  %423 = vmatmul.bf16.gmra.mxu0 %v243
  %v424 = vpop.f32.mrf.mxu0
  %v425 = vadd.f32 0.0, %v424
  %v426 = vpop.f32.mrf.mxu0
  %v427 = vadd.f32 0.0, %v426
  %428 = vmatmul.bf16.gmra.mxu0 %v245
  %v429 = vpop.f32.mrf.mxu0
  %v430 = vadd.f32 0.0, %v429
  %v431 = vpop.f32.mrf.mxu0
  %v432 = vadd.f32 0.0, %v431
  %433 = vmatmul.bf16.gmra.mxu0 %v247
  %v434 = vpop.f32.mrf.mxu0
  %v435 = vadd.f32 0.0, %v434
  %v436 = vpop.f32.mrf.mxu0
  %v437 = vadd.f32 0.0, %v436
  %438 = vmatmul.bf16.gmra.mxu0 %v249
  %v439 = vpop.f32.mrf.mxu0
  %v440 = vadd.f32 0.0, %v439
  %v441 = vpop.f32.mrf.mxu0
  %v442 = vadd.f32 0.0, %v441
  %443 = vmatmul.bf16.gmra.mxu0 %v251
  %v444 = vpop.f32.mrf.mxu0
  %v445 = vadd.f32 0.0, %v444
  %v446 = vpop.f32.mrf.mxu0
  %v447 = vadd.f32 0.0, %v446
  %448 = vmatmul.bf16.gmra.mxu0 %v253
  %v449 = vpop.f32.mrf.mxu0
  %v450 = vadd.f32 0.0, %v449
  %v451 = vpop.f32.mrf.mxu0
  %v452 = vadd.f32 0.0, %v451
  %453 = vmatmul.bf16.gmra.mxu0 %v255
  %v454 = vpop.f32.mrf.mxu0
  %v455 = vadd.f32 0.0, %v454
  %v456 = vpop.f32.mrf.mxu0
  %v457 = vadd.f32 0.0, %v456
  %458 = vmatmul.bf16.gmra.mxu0 %v257
  %v459 = vpop.f32.mrf.mxu0
  %v460 = vadd.f32 0.0, %v459
  %v461 = vpop.f32.mrf.mxu0
  %v462 = vadd.f32 0.0, %v461
  %463 = vmatmul.bf16.gmra.mxu0 %v259
  %v464 = vpop.f32.mrf.mxu0
  %v465 = vadd.f32 0.0, %v464
  %v466 = vpop.f32.mrf.mxu0
  %v467 = vadd.f32 0.0, %v466
  %468 = vmatmul.bf16.gmra.mxu0 %v261
  %v469 = vpop.f32.mrf.mxu0
  %v470 = vadd.f32 0.0, %v469
  %v471 = vpop.f32.mrf.mxu0
  %v472 = vadd.f32 0.0, %v471
  %473 = vmatmul.bf16.gmra.mxu0 %v263
  %v474 = vpop.f32.mrf.mxu0
  %v475 = vadd.f32 0.0, %v474
  %v476 = vpop.f32.mrf.mxu0
  %v477 = vadd.f32 0.0, %v476
  %478 = vmatmul.bf16.gmra.mxu0 %v265
  %v479 = vpop.f32.mrf.mxu0
  %v480 = vadd.f32 0.0, %v479
  %v481 = vpop.f32.mrf.mxu0
  %v482 = vadd.f32 0.0, %v481
  %483 = vdwg.mxu0
  %484 = vmatpush.bf16.msra.mxu0 %v378
  %485 = vmatpush.bf16.msra.mxu0 %v377
  %486 = vmatpush.bf16.msra.mxu0 %v376
  %487 = vmatpush.bf16.msra.mxu0 %v375
  %488 = vmatpush.bf16.msra.mxu0 %v374
  %489 = vmatpush.bf16.msra.mxu0 %v373
  %490 = vmatpush.bf16.msra.mxu0 %v372
  %491 = vmatpush.bf16.msra.mxu0 %v371
  %492 = vmatmul.bf16.gmra.mxu0 %v236
  %v493 = vpop.f32.mrf.mxu0
  %v494 = vadd.f32 %v405, %v493
  %v495 = vpop.f32.mrf.mxu0
  %v496 = vadd.f32 %v407, %v495
  %497 = vmatmul.bf16.gmra.mxu0 %v238
  %v498 = vpop.f32.mrf.mxu0
  %v499 = vadd.f32 %v410, %v498
  %v500 = vpop.f32.mrf.mxu0
  %v501 = vadd.f32 %v412, %v500
  %502 = vmatmul.bf16.gmra.mxu0 %v240
  %v503 = vpop.f32.mrf.mxu0
  %v504 = vadd.f32 %v415, %v503
  %v505 = vpop.f32.mrf.mxu0
  %v506 = vadd.f32 %v417, %v505
  %507 = vmatmul.bf16.gmra.mxu0 %v242
  %v508 = vpop.f32.mrf.mxu0
  %v509 = vadd.f32 %v420, %v508
  %v510 = vpop.f32.mrf.mxu0
  %v511 = vadd.f32 %v422, %v510
  %512 = vmatmul.bf16.gmra.mxu0 %v244
  %v513 = vpop.f32.mrf.mxu0
  %v514 = vadd.f32 %v425, %v513
  %v515 = vpop.f32.mrf.mxu0
  %v516 = vadd.f32 %v427, %v515
  %517 = vmatmul.bf16.gmra.mxu0 %v246
  %v518 = vpop.f32.mrf.mxu0
  %v519 = vadd.f32 %v430, %v518
  %v520 = vpop.f32.mrf.mxu0
  %v521 = vadd.f32 %v432, %v520
  %522 = vmatmul.bf16.gmra.mxu0 %v248
  %v523 = vpop.f32.mrf.mxu0
  %v524 = vadd.f32 %v435, %v523
  %v525 = vpop.f32.mrf.mxu0
  %v526 = vadd.f32 %v437, %v525
  %527 = vmatmul.bf16.gmra.mxu0 %v250
  %v528 = vpop.f32.mrf.mxu0
  %v529 = vadd.f32 %v440, %v528
  %v530 = vpop.f32.mrf.mxu0
  %v531 = vadd.f32 %v442, %v530
  %532 = vmatmul.bf16.gmra.mxu0 %v252
  %v533 = vpop.f32.mrf.mxu0
  %v534 = vadd.f32 %v445, %v533
  %v535 = vpop.f32.mrf.mxu0
  %v536 = vadd.f32 %v447, %v535
  %537 = vmatmul.bf16.gmra.mxu0 %v254
  %v538 = vpop.f32.mrf.mxu0
  %v539 = vadd.f32 %v450, %v538
  %v540 = vpop.f32.mrf.mxu0
  %v541 = vadd.f32 %v452, %v540
  %542 = vmatmul.bf16.gmra.mxu0 %v256
  %v543 = vpop.f32.mrf.mxu0
  %v544 = vadd.f32 %v455, %v543
  %v545 = vpop.f32.mrf.mxu0
  %v546 = vadd.f32 %v457, %v545
  %547 = vmatmul.bf16.gmra.mxu0 %v258
  %v548 = vpop.f32.mrf.mxu0
  %v549 = vadd.f32 %v460, %v548
  %v550 = vpop.f32.mrf.mxu0
  %v551 = vadd.f32 %v462, %v550
  %552 = vmatmul.bf16.gmra.mxu0 %v260
  %v553 = vpop.f32.mrf.mxu0
  %v554 = vadd.f32 %v465, %v553
  %v555 = vpop.f32.mrf.mxu0
  %v556 = vadd.f32 %v467, %v555
  %557 = vmatmul.bf16.gmra.mxu0 %v262
  %v558 = vpop.f32.mrf.mxu0
  %v559 = vadd.f32 %v470, %v558
  %v560 = vpop.f32.mrf.mxu0
  %v561 = vadd.f32 %v472, %v560
  %562 = vmatmul.bf16.gmra.mxu0 %v264
  %v563 = vpop.f32.mrf.mxu0
  %v564 = vadd.f32 %v475, %v563
  %v565 = vpop.f32.mrf.mxu0
  %v566 = vadd.f32 %v477, %v565
  %567 = vmatmul.bf16.gmra.mxu0 %v266
  %v568 = vpop.f32.mrf.mxu0
  %v569 = vadd.f32 %v480, %v568
  %v570 = vpop.f32.mrf.mxu0
  %v571 = vadd.f32 %v482, %v570
  %572 = vdwg.mxu0
  %v573 = vadd.f32 %v59, %v494
  %v574 = vadd.f32 %v60, %v496
  %v575 = vadd.f32 %v61, %v499
  %v576 = vadd.f32 %v62, %v501
  %v577 = vadd.f32 %v63, %v504
  %v578 = vadd.f32 %v64, %v506
  %v579 = vadd.f32 %v65, %v509
  %v580 = vadd.f32 %v66, %v511
  %v581 = vadd.f32 %v67, %v514
  %v582 = vadd.f32 %v68, %v516
  %v583 = vadd.f32 %v69, %v519
  %v584 = vadd.f32 %v70, %v521
  %v585 = vadd.f32 %v71, %v524
  %v586 = vadd.f32 %v72, %v526
  %v587 = vadd.f32 %v73, %v529
  %v588 = vadd.f32 %v74, %v531
  %v589 = vadd.f32 %v75, %v534
  %v590 = vadd.f32 %v76, %v536
  %v591 = vadd.f32 %v77, %v539
  %v592 = vadd.f32 %v78, %v541
  %v593 = vadd.f32 %v79, %v544
  %v594 = vadd.f32 %v80, %v546
  %v595 = vadd.f32 %v81, %v549
  %v596 = vadd.f32 %v82, %v551
  %v597 = vadd.f32 %v83, %v554
  %v598 = vadd.f32 %v84, %v556
  %v599 = vadd.f32 %v85, %v559
  %v600 = vadd.f32 %v86, %v561
  %v601 = vadd.f32 %v87, %v564
  %v602 = vadd.f32 %v88, %v566
  %v603 = vadd.f32 %v89, %v569
  %v604 = vadd.f32 %v90, %v571
  %605 = vst [vmem:[#allocation2] sm:$0xff] %v573
  %606 = vst [vmem:[#allocation2 + $0x8] sm:$0xff] %v574
  %607 = vst [vmem:[#allocation2 + $0x10] sm:$0xff] %v575
  %608 = vst [vmem:[#allocation2 + $0x18] sm:$0xff] %v576
  %609 = vst [vmem:[#allocation2 + $0x20] sm:$0xff] %v577
  %610 = vst [vmem:[#allocation2 + $0x28] sm:$0xff] %v578
  %611 = vst [vmem:[#allocation2 + $0x30] sm:$0xff] %v579
  %612 = vst [vmem:[#allocation2 + $0x38] sm:$0xff] %v580
  %613 = vst [vmem:[#allocation2 + $0x40] sm:$0xff] %v581
  %614 = vst [vmem:[#allocation2 + $0x48] sm:$0xff] %v582
  %615 = vst [vmem:[#allocation2 + $0x50] sm:$0xff] %v583
  %616 = vst [vmem:[#allocation2 + $0x58] sm:$0xff] %v584
  %617 = vst [vmem:[#allocation2 + $0x60] sm:$0xff] %v585
  %618 = vst [vmem:[#allocation2 + $0x68] sm:$0xff] %v586
  %619 = vst [vmem:[#allocation2 + $0x70] sm:$0xff] %v587
  %620 = vst [vmem:[#allocation2 + $0x78] sm:$0xff] %v588
  %621 = vst [vmem:[#allocation2 + $0x80] sm:$0xff] %v589
  %622 = vst [vmem:[#allocation2 + $0x88] sm:$0xff] %v590
  %623 = vst [vmem:[#allocation2 + $0x90] sm:$0xff] %v591
  %624 = vst [vmem:[#allocation2 + $0x98] sm:$0xff] %v592
  %625 = vst [vmem:[#allocation2 + $0xa0] sm:$0xff] %v593
  %626 = vst [vmem:[#allocation2 + $0xa8] sm:$0xff] %v594
  %627 = vst [vmem:[#allocation2 + $0xb0] sm:$0xff] %v595
  %628 = vst [vmem:[#allocation2 + $0xb8] sm:$0xff] %v596
  %629 = vst [vmem:[#allocation2 + $0xc0] sm:$0xff] %v597
  %630 = vst [vmem:[#allocation2 + $0xc8] sm:$0xff] %v598
  %631 = vst [vmem:[#allocation2 + $0xd0] sm:$0xff] %v599
  %632 = vst [vmem:[#allocation2 + $0xd8] sm:$0xff] %v600
  %633 = vst [vmem:[#allocation2 + $0xe0] sm:$0xff] %v601
  %634 = vst [vmem:[#allocation2 + $0xe8] sm:$0xff] %v602
  %635 = vst [vmem:[#allocation2 + $0xf0] sm:$0xff] %v603
  %636 = vst [vmem:[#allocation2 + $0xf8] sm:$0xff] %v604
  // Predicated region
  $region30: #{link_prediction_model.8} parent=0 // pred_check
    %p637 = pneg %p23
  $region31: #{link_prediction_model.8} parent=0 // pred_check_branch
    %639 = sbr.rel (%p637) target = $region33
  $region32: #{link_prediction_model.8} parent=0 // pred_region
    %v640 = vld [vmem:[%s2] sm:$0xf]
    %v641 = vld [vmem:[%s2 + $0x4] sm:$0xf]
    %v642 = vld [vmem:[%s2 + $0x8] sm:$0xf]
    %v643 = vld [vmem:[%s2 + $0xc] sm:$0xf]
    %v644 = vld [vmem:[%s2 + $0x10] sm:$0xf]
    %v645 = vld [vmem:[%s2 + $0x14] sm:$0xf]
    %v646 = vld [vmem:[%s2 + $0x18] sm:$0xf]
    %v647 = vld [vmem:[%s2 + $0x1c] sm:$0xf]
    %v648 = vld [vmem:[%s2 + $0x20] sm:$0xf]
    %v649 = vld [vmem:[%s2 + $0x24] sm:$0xf]
    %v650 = vld [vmem:[%s2 + $0x28] sm:$0xf]
    %v651 = vld [vmem:[%s2 + $0x2c] sm:$0xf]
    %v652 = vld [vmem:[%s2 + $0x30] sm:$0xf]
    %v653 = vld [vmem:[%s2 + $0x34] sm:$0xf]
    %v654 = vld [vmem:[%s2 + $0x38] sm:$0xf]
    %v655 = vld [vmem:[%s2 + $0x3c] sm:$0xf]
    %v656 = vld [vmem:[%s2 + $0x40] sm:$0xf]
    %v657 = vld [vmem:[%s2 + $0x44] sm:$0xf]
    %v658 = vld [vmem:[%s2 + $0x48] sm:$0xf]
    %v659 = vld [vmem:[%s2 + $0x4c] sm:$0xf]
    %v660 = vld [vmem:[%s2 + $0x50] sm:$0xf]
    %v661 = vld [vmem:[%s2 + $0x54] sm:$0xf]
    %v662 = vld [vmem:[%s2 + $0x58] sm:$0xf]
    %v663 = vld [vmem:[%s2 + $0x5c] sm:$0xf]
    %v664 = vld [vmem:[%s2 + $0x60] sm:$0xf]
    %v665 = vld [vmem:[%s2 + $0x64] sm:$0xf]
    %v666 = vld [vmem:[%s2 + $0x68] sm:$0xf]
    %v667 = vld [vmem:[%s2 + $0x6c] sm:$0xf]
    %v668 = vld [vmem:[%s2 + $0x70] sm:$0xf]
    %v669 = vld [vmem:[%s2 + $0x74] sm:$0xf]
    %v670 = vld [vmem:[%s2 + $0x78] sm:$0xf]
    %v671 = vld [vmem:[%s2 + $0x7c] sm:$0xf]
    %v672 = vunpack.c.l.bf16 %v640
    %v673 = vunpack.c.l.bf16 %v641
    %v674 = vunpack.c.l.bf16 %v642
    %v675 = vunpack.c.l.bf16 %v643
    %v676 = vunpack.c.l.bf16 %v644
    %v677 = vunpack.c.l.bf16 %v645
    %v678 = vunpack.c.l.bf16 %v646
    %v679 = vunpack.c.l.bf16 %v647
    %v680 = vunpack.c.l.bf16 %v648
    %v681 = vunpack.c.l.bf16 %v649
    %v682 = vunpack.c.l.bf16 %v650
    %v683 = vunpack.c.l.bf16 %v651
    %v684 = vunpack.c.l.bf16 %v652
    %v685 = vunpack.c.l.bf16 %v653
    %v686 = vunpack.c.l.bf16 %v654
    %v687 = vunpack.c.l.bf16 %v655
    %v688 = vunpack.c.l.bf16 %v656
    %v689 = vunpack.c.l.bf16 %v657
    %v690 = vunpack.c.l.bf16 %v658
    %v691 = vunpack.c.l.bf16 %v659
    %v692 = vunpack.c.l.bf16 %v660
    %v693 = vunpack.c.l.bf16 %v661
    %v694 = vunpack.c.l.bf16 %v662
    %v695 = vunpack.c.l.bf16 %v663
    %v696 = vunpack.c.l.bf16 %v664
    %v697 = vunpack.c.l.bf16 %v665
    %v698 = vunpack.c.l.bf16 %v666
    %v699 = vunpack.c.l.bf16 %v667
    %v700 = vunpack.c.l.bf16 %v668
    %v701 = vunpack.c.l.bf16 %v669
    %v702 = vunpack.c.l.bf16 %v670
    %v703 = vunpack.c.l.bf16 %v671
    %v704 = vld [vmem:[%s3] sm:$0xff]
    %v705 = vld [vmem:[%s3 + $0x8] sm:$0xff]
    %v706 = vld [vmem:[%s3 + $0x10] sm:$0xff]
    %v707 = vld [vmem:[%s3 + $0x18] sm:$0xff]
    %v708 = vld [vmem:[%s3 + $0x20] sm:$0xff]
    %v709 = vld [vmem:[%s3 + $0x28] sm:$0xff]
    %v710 = vld [vmem:[%s3 + $0x30] sm:$0xff]
    %v711 = vld [vmem:[%s3 + $0x38] sm:$0xff]
    %v712 = vld [vmem:[%s3 + $0x40] sm:$0xff]
    %v713 = vld [vmem:[%s3 + $0x48] sm:$0xff]
    %v714 = vld [vmem:[%s3 + $0x50] sm:$0xff]
    %v715 = vld [vmem:[%s3 + $0x58] sm:$0xff]
    %v716 = vld [vmem:[%s3 + $0x60] sm:$0xff]
    %v717 = vld [vmem:[%s3 + $0x68] sm:$0xff]
    %v718 = vld [vmem:[%s3 + $0x70] sm:$0xff]
    %v719 = vld [vmem:[%s3 + $0x78] sm:$0xff]
    %v720 = vld [vmem:[%s4] sm:$0x1]
    %v722 = vperm.slane %v720, 0
    %724 = vmatpush.msra.mxu0 %v719
    %725 = vmatpush.msra.mxu0 %v718
    %726 = vmatpush.msra.mxu0 %v717
    %727 = vmatpush.msra.mxu0 %v716
    %728 = vmatpush.msra.mxu0 %v715
    %729 = vmatpush.msra.mxu0 %v714
    %730 = vmatpush.msra.mxu0 %v713
    %731 = vmatpush.msra.mxu0 %v712
    %732 = vmatpush.msra.mxu0 %v711
    %733 = vmatpush.msra.mxu0 %v710
    %734 = vmatpush.msra.mxu0 %v709
    %735 = vmatpush.msra.mxu0 %v708
    %736 = vmatpush.msra.mxu0 %v707
    %737 = vmatpush.msra.mxu0 %v706
    %738 = vmatpush.msra.mxu0 %v705
    %739 = vmatpush.msra.mxu0 %v704
    %740 = vmatmul.f32.gmra.mxu0 %v672
    %v741 = vpop.f32.mrf.mxu0
    %v742 = vadd.f32 %v722, %v741
    %743 = vmatmul.f32.gmra.mxu0 %v673
    %v744 = vpop.f32.mrf.mxu0
    %v745 = vadd.f32 %v722, %v744
    %746 = vmatmul.f32.gmra.mxu0 %v674
    %v747 = vpop.f32.mrf.mxu0
    %v748 = vadd.f32 %v722, %v747
    %749 = vmatmul.f32.gmra.mxu0 %v675
    %v750 = vpop.f32.mrf.mxu0
    %v751 = vadd.f32 %v722, %v750
    %752 = vmatmul.f32.gmra.mxu0 %v676
    %v753 = vpop.f32.mrf.mxu0
    %v754 = vadd.f32 %v722, %v753
    %755 = vmatmul.f32.gmra.mxu0 %v677
    %v756 = vpop.f32.mrf.mxu0
    %v757 = vadd.f32 %v722, %v756
    %758 = vmatmul.f32.gmra.mxu0 %v678
    %v759 = vpop.f32.mrf.mxu0
    %v760 = vadd.f32 %v722, %v759
    %761 = vmatmul.f32.gmra.mxu0 %v679
    %v762 = vpop.f32.mrf.mxu0
    %v763 = vadd.f32 %v722, %v762
    %764 = vmatmul.f32.gmra.mxu0 %v680
    %v765 = vpop.f32.mrf.mxu0
    %v766 = vadd.f32 %v722, %v765
    %767 = vmatmul.f32.gmra.mxu0 %v681
    %v768 = vpop.f32.mrf.mxu0
    %v769 = vadd.f32 %v722, %v768
    %770 = vmatmul.f32.gmra.mxu0 %v682
    %v771 = vpop.f32.mrf.mxu0
    %v772 = vadd.f32 %v722, %v771
    %773 = vmatmul.f32.gmra.mxu0 %v683
    %v774 = vpop.f32.mrf.mxu0
    %v775 = vadd.f32 %v722, %v774
    %776 = vmatmul.f32.gmra.mxu0 %v684
    %v777 = vpop.f32.mrf.mxu0
    %v778 = vadd.f32 %v722, %v777
    %779 = vmatmul.f32.gmra.mxu0 %v685
    %v780 = vpop.f32.mrf.mxu0
    %v781 = vadd.f32 %v722, %v780
    %782 = vmatmul.f32.gmra.mxu0 %v686
    %v783 = vpop.f32.mrf.mxu0
    %v784 = vadd.f32 %v722, %v783
    %785 = vmatmul.f32.gmra.mxu0 %v687
    %v786 = vpop.f32.mrf.mxu0
    %v787 = vadd.f32 %v722, %v786
    %788 = vmatmul.f32.gmra.mxu0 %v688
    %v789 = vpop.f32.mrf.mxu0
    %v790 = vadd.f32 %v722, %v789
    %791 = vmatmul.f32.gmra.mxu0 %v689
    %v792 = vpop.f32.mrf.mxu0
    %v793 = vadd.f32 %v722, %v792
    %794 = vmatmul.f32.gmra.mxu0 %v690
    %v795 = vpop.f32.mrf.mxu0
    %v796 = vadd.f32 %v722, %v795
    %797 = vmatmul.f32.gmra.mxu0 %v691
    %v798 = vpop.f32.mrf.mxu0
    %v799 = vadd.f32 %v722, %v798
    %800 = vmatmul.f32.gmra.mxu0 %v692
    %v801 = vpop.f32.mrf.mxu0
    %v802 = vadd.f32 %v722, %v801
    %803 = vmatmul.f32.gmra.mxu0 %v693
    %v804 = vpop.f32.mrf.mxu0
    %v805 = vadd.f32 %v722, %v804
    %806 = vmatmul.f32.gmra.mxu0 %v694
    %v807 = vpop.f32.mrf.mxu0
    %v808 = vadd.f32 %v722, %v807
    %809 = vmatmul.f32.gmra.mxu0 %v695
    %v810 = vpop.f32.mrf.mxu0
    %v811 = vadd.f32 %v722, %v810
    %812 = vmatmul.f32.gmra.mxu0 %v696
    %v813 = vpop.f32.mrf.mxu0
    %v814 = vadd.f32 %v722, %v813
    %815 = vmatmul.f32.gmra.mxu0 %v697
    %v816 = vpop.f32.mrf.mxu0
    %v817 = vadd.f32 %v722, %v816
    %818 = vmatmul.f32.gmra.mxu0 %v698
    %v819 = vpop.f32.mrf.mxu0
    %v820 = vadd.f32 %v722, %v819
    %821 = vmatmul.f32.gmra.mxu0 %v699
    %v822 = vpop.f32.mrf.mxu0
    %v823 = vadd.f32 %v722, %v822
    %824 = vmatmul.f32.gmra.mxu0 %v700
    %v825 = vpop.f32.mrf.mxu0
    %v826 = vadd.f32 %v722, %v825
    %827 = vmatmul.f32.gmra.mxu0 %v701
    %v828 = vpop.f32.mrf.mxu0
    %v829 = vadd.f32 %v722, %v828
    %830 = vmatmul.f32.gmra.mxu0 %v702
    %v831 = vpop.f32.mrf.mxu0
    %v832 = vadd.f32 %v722, %v831
    %833 = vmatmul.f32.gmra.mxu0 %v703
    %v834 = vpop.f32.mrf.mxu0
    %v835 = vadd.f32 %v722, %v834
    %836 = vdwg.mxu0
    %v837 = vld [vmem:[%s5] sm:$0xff]
    %v838 = vld [vmem:[%s5 + $0x8] sm:$0xff]
    %v839 = vld [vmem:[%s5 + $0x10] sm:$0xff]
    %v840 = vld [vmem:[%s5 + $0x18] sm:$0xff]
    %v841 = vld [vmem:[%s5 + $0x20] sm:$0xff]
    %v842 = vld [vmem:[%s5 + $0x28] sm:$0xff]
    %v843 = vld [vmem:[%s5 + $0x30] sm:$0xff]
    %v844 = vld [vmem:[%s5 + $0x38] sm:$0xff]
    %v845 = vld [vmem:[%s5 + $0x40] sm:$0xff]
    %v846 = vld [vmem:[%s5 + $0x48] sm:$0xff]
    %v847 = vld [vmem:[%s5 + $0x50] sm:$0xff]
    %v848 = vld [vmem:[%s5 + $0x58] sm:$0xff]
    %v849 = vld [vmem:[%s5 + $0x60] sm:$0xff]
    %v850 = vld [vmem:[%s5 + $0x68] sm:$0xff]
    %v851 = vld [vmem:[%s5 + $0x70] sm:$0xff]
    %v852 = vld [vmem:[%s5 + $0x78] sm:$0xff]
    %v853 = vld [vmem:[%s5 + $0x80] sm:$0xff]
    %v854 = vld [vmem:[%s5 + $0x88] sm:$0xff]
    %v855 = vld [vmem:[%s5 + $0x90] sm:$0xff]
    %v856 = vld [vmem:[%s5 + $0x98] sm:$0xff]
    %v857 = vld [vmem:[%s5 + $0xa0] sm:$0xff]
    %v858 = vld [vmem:[%s5 + $0xa8] sm:$0xff]
    %v859 = vld [vmem:[%s5 + $0xb0] sm:$0xff]
    %v860 = vld [vmem:[%s5 + $0xb8] sm:$0xff]
    %v861 = vld [vmem:[%s5 + $0xc0] sm:$0xff]
    %v862 = vld [vmem:[%s5 + $0xc8] sm:$0xff]
    %v863 = vld [vmem:[%s5 + $0xd0] sm:$0xff]
    %v864 = vld [vmem:[%s5 + $0xd8] sm:$0xff]
    %v865 = vld [vmem:[%s5 + $0xe0] sm:$0xff]
    %v866 = vld [vmem:[%s5 + $0xe8] sm:$0xff]
    %v867 = vld [vmem:[%s5 + $0xf0] sm:$0xff]
    %v868 = vld [vmem:[%s5 + $0xf8] sm:$0xff]
    %v869 = vld [vmem:[#allocation2] sm:$0xff]
    %v870 = vld [vmem:[#allocation2 + $0x8] sm:$0xff]
    %v871 = vld [vmem:[#allocation2 + $0x10] sm:$0xff]
    %v872 = vld [vmem:[#allocation2 + $0x18] sm:$0xff]
    %v873 = vld [vmem:[#allocation2 + $0x20] sm:$0xff]
    %v874 = vld [vmem:[#allocation2 + $0x28] sm:$0xff]
    %v875 = vld [vmem:[#allocation2 + $0x30] sm:$0xff]
    %v876 = vld [vmem:[#allocation2 + $0x38] sm:$0xff]
    %v877 = vld [vmem:[#allocation2 + $0x40] sm:$0xff]
    %v878 = vld [vmem:[#allocation2 + $0x48] sm:$0xff]
    %v879 = vld [vmem:[#allocation2 + $0x50] sm:$0xff]
    %v880 = vld [vmem:[#allocation2 + $0x58] sm:$0xff]
    %v881 = vld [vmem:[#allocation2 + $0x60] sm:$0xff]
    %v882 = vld [vmem:[#allocation2 + $0x68] sm:$0xff]
    %v883 = vld [vmem:[#allocation2 + $0x70] sm:$0xff]
    %v884 = vld [vmem:[#allocation2 + $0x78] sm:$0xff]
    %v885 = vld [vmem:[#allocation2 + $0x80] sm:$0xff]
    %v886 = vld [vmem:[#allocation2 + $0x88] sm:$0xff]
    %v887 = vld [vmem:[#allocation2 + $0x90] sm:$0xff]
    %v888 = vld [vmem:[#allocation2 + $0x98] sm:$0xff]
    %v889 = vld [vmem:[#allocation2 + $0xa0] sm:$0xff]
    %v890 = vld [vmem:[#allocation2 + $0xa8] sm:$0xff]
    %v891 = vld [vmem:[#allocation2 + $0xb0] sm:$0xff]
    %v892 = vld [vmem:[#allocation2 + $0xb8] sm:$0xff]
    %v893 = vld [vmem:[#allocation2 + $0xc0] sm:$0xff]
    %v894 = vld [vmem:[#allocation2 + $0xc8] sm:$0xff]
    %v895 = vld [vmem:[#allocation2 + $0xd0] sm:$0xff]
    %v896 = vld [vmem:[#allocation2 + $0xd8] sm:$0xff]
    %v897 = vld [vmem:[#allocation2 + $0xe0] sm:$0xff]
    %v898 = vld [vmem:[#allocation2 + $0xe8] sm:$0xff]
    %v899 = vld [vmem:[#allocation2 + $0xf0] sm:$0xff]
    %v900 = vld [vmem:[#allocation2 + $0xf8] sm:$0xff]
    %902 = vset.pattern.permute.xlu0 0
    %903 = vperm.xlu0 %902, %v837
    %v904 = vpop.permute.xlu0 %903
    %907 = vset.pattern.permute.xlu0 0
    %908 = vperm.xlu0 %907, %v838
    %v909 = vpop.permute.xlu0 %908
    %912 = vset.pattern.permute.xlu0 0
    %913 = vperm.xlu0 %912, %v839
    %v914 = vpop.permute.xlu0 %913
    %917 = vset.pattern.permute.xlu0 0
    %918 = vperm.xlu0 %917, %v840
    %v919 = vpop.permute.xlu0 %918
    %922 = vset.pattern.permute.xlu0 0
    %923 = vperm.xlu0 %922, %v841
    %v924 = vpop.permute.xlu0 %923
    %927 = vset.pattern.permute.xlu0 0
    %928 = vperm.xlu0 %927, %v842
    %v929 = vpop.permute.xlu0 %928
    %932 = vset.pattern.permute.xlu0 0
    %933 = vperm.xlu0 %932, %v843
    %v934 = vpop.permute.xlu0 %933
    %937 = vset.pattern.permute.xlu0 0
    %938 = vperm.xlu0 %937, %v844
    %v939 = vpop.permute.xlu0 %938
    %942 = vset.pattern.permute.xlu0 0
    %943 = vperm.xlu0 %942, %v845
    %v944 = vpop.permute.xlu0 %943
    %947 = vset.pattern.permute.xlu0 0
    %948 = vperm.xlu0 %947, %v846
    %v949 = vpop.permute.xlu0 %948
    %952 = vset.pattern.permute.xlu0 0
    %953 = vperm.xlu0 %952, %v847
    %v954 = vpop.permute.xlu0 %953
    %957 = vset.pattern.permute.xlu0 0
    %958 = vperm.xlu0 %957, %v848
    %v959 = vpop.permute.xlu0 %958
    %962 = vset.pattern.permute.xlu0 0
    %963 = vperm.xlu0 %962, %v849
    %v964 = vpop.permute.xlu0 %963
    %967 = vset.pattern.permute.xlu0 0
    %968 = vperm.xlu0 %967, %v850
    %v969 = vpop.permute.xlu0 %968
    %972 = vset.pattern.permute.xlu0 0
    %973 = vperm.xlu0 %972, %v851
    %v974 = vpop.permute.xlu0 %973
    %977 = vset.pattern.permute.xlu0 0
    %978 = vperm.xlu0 %977, %v852
    %v979 = vpop.permute.xlu0 %978
    %982 = vset.pattern.permute.xlu0 0
    %983 = vperm.xlu0 %982, %v853
    %v984 = vpop.permute.xlu0 %983
    %987 = vset.pattern.permute.xlu0 0
    %988 = vperm.xlu0 %987, %v854
    %v989 = vpop.permute.xlu0 %988
    %992 = vset.pattern.permute.xlu0 0
    %993 = vperm.xlu0 %992, %v855
    %v994 = vpop.permute.xlu0 %993
    %997 = vset.pattern.permute.xlu0 0
    %998 = vperm.xlu0 %997, %v856
    %v999 = vpop.permute.xlu0 %998
    %1002 = vset.pattern.permute.xlu0 0
    %1003 = vperm.xlu0 %1002, %v857
    %v1004 = vpop.permute.xlu0 %1003
    %1007 = vset.pattern.permute.xlu0 0
    %1008 = vperm.xlu0 %1007, %v858
    %v1009 = vpop.permute.xlu0 %1008
    %1012 = vset.pattern.permute.xlu0 0
    %1013 = vperm.xlu0 %1012, %v859
    %v1014 = vpop.permute.xlu0 %1013
    %1017 = vset.pattern.permute.xlu0 0
    %1018 = vperm.xlu0 %1017, %v860
    %v1019 = vpop.permute.xlu0 %1018
    %1022 = vset.pattern.permute.xlu0 0
    %1023 = vperm.xlu0 %1022, %v861
    %v1024 = vpop.permute.xlu0 %1023
    %1027 = vset.pattern.permute.xlu0 0
    %1028 = vperm.xlu0 %1027, %v862
    %v1029 = vpop.permute.xlu0 %1028
    %1032 = vset.pattern.permute.xlu0 0
    %1033 = vperm.xlu0 %1032, %v863
    %v1034 = vpop.permute.xlu0 %1033
    %1037 = vset.pattern.permute.xlu0 0
    %1038 = vperm.xlu0 %1037, %v864
    %v1039 = vpop.permute.xlu0 %1038
    %1042 = vset.pattern.permute.xlu0 0
    %1043 = vperm.xlu0 %1042, %v865
    %v1044 = vpop.permute.xlu0 %1043
    %1047 = vset.pattern.permute.xlu0 0
    %1048 = vperm.xlu0 %1047, %v866
    %v1049 = vpop.permute.xlu0 %1048
    %1052 = vset.pattern.permute.xlu0 0
    %1053 = vperm.xlu0 %1052, %v867
    %v1054 = vpop.permute.xlu0 %1053
    %1057 = vset.pattern.permute.xlu0 0
    %1058 = vperm.xlu0 %1057, %v868
    %v1059 = vpop.permute.xlu0 %1058
    %v1061 = vmul.f32 %v904, %v869
    %v1062 = vmul.f32 %v909, %v870
    %v1063 = vmul.f32 %v914, %v871
    %v1064 = vmul.f32 %v919, %v872
    %v1065 = vmul.f32 %v924, %v873
    %v1066 = vmul.f32 %v929, %v874
    %v1067 = vmul.f32 %v934, %v875
    %v1068 = vmul.f32 %v939, %v876
    %v1069 = vmul.f32 %v944, %v877
    %v1070 = vmul.f32 %v949, %v878
    %v1071 = vmul.f32 %v954, %v879
    %v1072 = vmul.f32 %v959, %v880
    %v1073 = vmul.f32 %v964, %v881
    %v1074 = vmul.f32 %v969, %v882
    %v1075 = vmul.f32 %v974, %v883
    %v1076 = vmul.f32 %v979, %v884
    %v1077 = vmul.f32 %v984, %v885
    %v1078 = vmul.f32 %v989, %v886
    %v1079 = vmul.f32 %v994, %v887
    %v1080 = vmul.f32 %v999, %v888
    %v1081 = vmul.f32 %v1004, %v889
    %v1082 = vmul.f32 %v1009, %v890
    %v1083 = vmul.f32 %v1014, %v891
    %v1084 = vmul.f32 %v1019, %v892
    %v1085 = vmul.f32 %v1024, %v893
    %v1086 = vmul.f32 %v1029, %v894
    %v1087 = vmul.f32 %v1034, %v895
    %v1088 = vmul.f32 %v1039, %v896
    %v1089 = vmul.f32 %v1044, %v897
    %v1090 = vmul.f32 %v1049, %v898
    %v1091 = vmul.f32 %v1054, %v899
    %v1092 = vmul.f32 %v1059, %v900
    %v1093 = vadd.f32 %v742, %v1061
    %v1094 = vadd.f32 %v745, %v1062
    %v1095 = vadd.f32 %v748, %v1063
    %v1096 = vadd.f32 %v751, %v1064
    %v1097 = vadd.f32 %v754, %v1065
    %v1098 = vadd.f32 %v757, %v1066
    %v1099 = vadd.f32 %v760, %v1067
    %v1100 = vadd.f32 %v763, %v1068
    %v1101 = vadd.f32 %v766, %v1069
    %v1102 = vadd.f32 %v769, %v1070
    %v1103 = vadd.f32 %v772, %v1071
    %v1104 = vadd.f32 %v775, %v1072
    %v1105 = vadd.f32 %v778, %v1073
    %v1106 = vadd.f32 %v781, %v1074
    %v1107 = vadd.f32 %v784, %v1075
    %v1108 = vadd.f32 %v787, %v1076
    %v1109 = vadd.f32 %v790, %v1077
    %v1110 = vadd.f32 %v793, %v1078
    %v1111 = vadd.f32 %v796, %v1079
    %v1112 = vadd.f32 %v799, %v1080
    %v1113 = vadd.f32 %v802, %v1081
    %v1114 = vadd.f32 %v805, %v1082
    %v1115 = vadd.f32 %v808, %v1083
    %v1116 = vadd.f32 %v811, %v1084
    %v1117 = vadd.f32 %v814, %v1085
    %v1118 = vadd.f32 %v817, %v1086
    %v1119 = vadd.f32 %v820, %v1087
    %v1120 = vadd.f32 %v823, %v1088
    %v1121 = vadd.f32 %v826, %v1089
    %v1122 = vadd.f32 %v829, %v1090
    %v1123 = vadd.f32 %v832, %v1091
    %v1124 = vadd.f32 %v835, %v1092
    %1125 = vst [vmem:[%s6] sm:$0xff] %v1093
    %1126 = vst [vmem:[%s6 + $0x8] sm:$0xff] %v1094
    %1127 = vst [vmem:[%s6 + $0x10] sm:$0xff] %v1095
    %1128 = vst [vmem:[%s6 + $0x18] sm:$0xff] %v1096
    %1129 = vst [vmem:[%s6 + $0x20] sm:$0xff] %v1097
    %1130 = vst [vmem:[%s6 + $0x28] sm:$0xff] %v1098
    %1131 = vst [vmem:[%s6 + $0x30] sm:$0xff] %v1099
    %1132 = vst [vmem:[%s6 + $0x38] sm:$0xff] %v1100
    %1133 = vst [vmem:[%s6 + $0x40] sm:$0xff] %v1101
    %1134 = vst [vmem:[%s6 + $0x48] sm:$0xff] %v1102
    %1135 = vst [vmem:[%s6 + $0x50] sm:$0xff] %v1103
    %1136 = vst [vmem:[%s6 + $0x58] sm:$0xff] %v1104
    %1137 = vst [vmem:[%s6 + $0x60] sm:$0xff] %v1105
    %1138 = vst [vmem:[%s6 + $0x68] sm:$0xff] %v1106
    %1139 = vst [vmem:[%s6 + $0x70] sm:$0xff] %v1107
    %1140 = vst [vmem:[%s6 + $0x78] sm:$0xff] %v1108
    %1141 = vst [vmem:[%s6 + $0x80] sm:$0xff] %v1109
    %1142 = vst [vmem:[%s6 + $0x88] sm:$0xff] %v1110
    %1143 = vst [vmem:[%s6 + $0x90] sm:$0xff] %v1111
    %1144 = vst [vmem:[%s6 + $0x98] sm:$0xff] %v1112
    %1145 = vst [vmem:[%s6 + $0xa0] sm:$0xff] %v1113
    %1146 = vst [vmem:[%s6 + $0xa8] sm:$0xff] %v1114
    %1147 = vst [vmem:[%s6 + $0xb0] sm:$0xff] %v1115
    %1148 = vst [vmem:[%s6 + $0xb8] sm:$0xff] %v1116
    %1149 = vst [vmem:[%s6 + $0xc0] sm:$0xff] %v1117
    %1150 = vst [vmem:[%s6 + $0xc8] sm:$0xff] %v1118
    %1151 = vst [vmem:[%s6 + $0xd0] sm:$0xff] %v1119
    %1152 = vst [vmem:[%s6 + $0xd8] sm:$0xff] %v1120
    %1153 = vst [vmem:[%s6 + $0xe0] sm:$0xff] %v1121
    %1154 = vst [vmem:[%s6 + $0xe8] sm:$0xff] %v1122
    %1155 = vst [vmem:[%s6 + $0xf0] sm:$0xff] %v1123
    %1156 = vst [vmem:[%s6 + $0xf8] sm:$0xff] %v1124
  $region33: #{link_prediction_model.8} parent=0 // pred_fallthru
    _
  // Predicated region
  $region34: #{link_prediction_model.8} parent=0 // pred_check
    _
  $region35: #{link_prediction_model.8} parent=0 // pred_check_branch
    %1158 = sbr.rel (0) target = $region37
  $region36: #{link_prediction_model.8} parent=0 // pred_region
    _
  $region37: #{link_prediction_model.8} parent=0 // pred_fallthru
    _
  // Predicated region
  $region38: #{link_prediction_model.8} parent=0 // pred_check
    _
  $region39: #{link_prediction_model.8} parent=0 // pred_check_branch
    %1160 = sbr.rel (0) target = $region41
  $region40: #{link_prediction_model.8} parent=0 // pred_region
    _
  $region41: #{link_prediction_model.8} parent=0 // pred_fallthru
    _

// kernel: link_prediction_model.9
$region0: #{link_prediction_model.9}
  #allocation0 [shape = 'u32[]', space=smem, size = 0x4, offset = 0x4, fixed_abs, tag = 'smem constant byte address 0x4 - core index']
  #allocation1 [shape = 'u32[72,128]{1,0:T(1,128)}', space=vmem, size = 0x9000, scoped, tag = 'internal scratch']
  %s0 = inlined_call_operand.vmem [shape: f32[128,128], index: 0, kind: input, shape index: {}]
  %s1 = inlined_call_operand.vmem [shape: f32[128,128], index: 1, kind: input, shape index: {}]
  %s2 = inlined_call_operand.vmem [shape: f32[1,128], index: 2, kind: output, shape index: {}]
  %s3 = sld [smem:[#allocation0]]
  $region18: #{link_prediction_model.9} parent=0
    _
  %s5 = ssub.s32 1, %s3
  %s6 = scalar_select 0, %s5, %s3
  // Predicated region
  $region2: #{link_prediction_model.9} parent=0 // pred_check
    _
  $region3: #{link_prediction_model.9} parent=0 // pred_check_branch
    %8 = sbr.rel (0) target = $region5
  $region4: #{link_prediction_model.9} parent=0 // pred_region
    _
  $region5: #{link_prediction_model.9} parent=0 // pred_fallthru
    _
  // Predicated region
  $region6: #{link_prediction_model.9} parent=0 // pred_check
    _
  $region7: #{link_prediction_model.9} parent=0 // pred_check_branch
    %10 = sbr.rel (0) target = $region9
  $region8: #{link_prediction_model.9} parent=0 // pred_region
    _
  $region9: #{link_prediction_model.9} parent=0 // pred_fallthru
    _
  %v11 = vld [vmem:[%s0] sm:$0xff]
  %v12 = vld [vmem:[%s0 + $0x8] sm:$0xff]
  %v13 = vld [vmem:[%s0 + $0x10] sm:$0xff]
  %v14 = vld [vmem:[%s0 + $0x18] sm:$0xff]
  %v15 = vld [vmem:[%s0 + $0x20] sm:$0xff]
  %v16 = vld [vmem:[%s0 + $0x28] sm:$0xff]
  %v17 = vld [vmem:[%s0 + $0x30] sm:$0xff]
  %v18 = vld [vmem:[%s0 + $0x38] sm:$0xff]
  %v19 = vld [vmem:[%s0 + $0x40] sm:$0xff]
  %v20 = vld [vmem:[%s0 + $0x48] sm:$0xff]
  %v21 = vld [vmem:[%s0 + $0x50] sm:$0xff]
  %v22 = vld [vmem:[%s0 + $0x58] sm:$0xff]
  %v23 = vld [vmem:[%s0 + $0x60] sm:$0xff]
  %v24 = vld [vmem:[%s0 + $0x68] sm:$0xff]
  %v25 = vld [vmem:[%s0 + $0x70] sm:$0xff]
  %v26 = vld [vmem:[%s0 + $0x78] sm:$0xff]
  %v27 = vld [vmem:[%s1] sm:$0xff]
  %v28 = vld [vmem:[%s1 + $0x8] sm:$0xff]
  %v29 = vld [vmem:[%s1 + $0x10] sm:$0xff]
  %v30 = vld [vmem:[%s1 + $0x18] sm:$0xff]
  %v31 = vld [vmem:[%s1 + $0x20] sm:$0xff]
  %v32 = vld [vmem:[%s1 + $0x28] sm:$0xff]
  %v33 = vld [vmem:[%s1 + $0x30] sm:$0xff]
  %v34 = vld [vmem:[%s1 + $0x38] sm:$0xff]
  %v35 = vld [vmem:[%s1 + $0x40] sm:$0xff]
  %v36 = vld [vmem:[%s1 + $0x48] sm:$0xff]
  %v37 = vld [vmem:[%s1 + $0x50] sm:$0xff]
  %v38 = vld [vmem:[%s1 + $0x58] sm:$0xff]
  %v39 = vld [vmem:[%s1 + $0x60] sm:$0xff]
  %v40 = vld [vmem:[%s1 + $0x68] sm:$0xff]
  %v41 = vld [vmem:[%s1 + $0x70] sm:$0xff]
  %v42 = vld [vmem:[%s1 + $0x78] sm:$0xff]
  %v43 = vmul.f32 %v11, %v27
  %v44 = vmul.f32 %v12, %v28
  %v45 = vmul.f32 %v13, %v29
  %v46 = vmul.f32 %v14, %v30
  %v47 = vmul.f32 %v15, %v31
  %v48 = vmul.f32 %v16, %v32
  %v49 = vmul.f32 %v17, %v33
  %v50 = vmul.f32 %v18, %v34
  %v51 = vmul.f32 %v19, %v35
  %v52 = vmul.f32 %v20, %v36
  %v53 = vmul.f32 %v21, %v37
  %v54 = vmul.f32 %v22, %v38
  %v55 = vmul.f32 %v23, %v39
  %v56 = vmul.f32 %v24, %v40
  %v57 = vmul.f32 %v25, %v41
  %v58 = vmul.f32 %v26, %v42
  %v59 = vadd.f32 %v43, %v44
  %v60 = vadd.f32 %v59, %v45
  %v61 = vadd.f32 %v60, %v46
  %v62 = vadd.f32 %v61, %v47
  %v63 = vadd.f32 %v62, %v48
  %v64 = vadd.f32 %v63, %v49
  %v65 = vadd.f32 %v64, %v50
  %v66 = vadd.f32 %v65, %v51
  %v67 = vadd.f32 %v66, %v52
  %v68 = vadd.f32 %v67, %v53
  %v69 = vadd.f32 %v68, %v54
  %v70 = vadd.f32 %v69, %v55
  %v71 = vadd.f32 %v70, %v56
  %v72 = vadd.f32 %v71, %v57
  %v73 = vadd.f32 %v72, %v58
  %v74 = vrot.slane %v73, 4
  %v75 = vadd.f32 %v73, %v74
  %v76 = vrot.slane %v75, 2
  %v77 = vadd.f32 %v75, %v76
  %v78 = vrot.slane %v77, 1
  %v79 = vadd.f32 %v77, %v78
  %80 = vst [vmem:[%s2] sm:$0x1] %v79
  // Predicated region
  $region10: #{link_prediction_model.9} parent=0 // pred_check
    _
  $region11: #{link_prediction_model.9} parent=0 // pred_check_branch
    %82 = sbr.rel (0) target = $region13
  $region12: #{link_prediction_model.9} parent=0 // pred_region
    _
  $region13: #{link_prediction_model.9} parent=0 // pred_fallthru
    _
  // Predicated region
  $region14: #{link_prediction_model.9} parent=0 // pred_check
    _
  $region15: #{link_prediction_model.9} parent=0 // pred_check_branch
    %84 = sbr.rel (0) target = $region17
  $region16: #{link_prediction_model.9} parent=0 // pred_region
    _
  $region17: #{link_prediction_model.9} parent=0 // pred_fallthru
    _

</llo_original>
